<compile_context>
chip_gen: v6e
topology: v6e:2x2x1
jax: 0.10.0
libtpu: 0.0.40
codegen_flags: <defaults>
</compile_context>

<pallas_src>
import jax
import jax.numpy as jnp
from jax.experimental import pallas as pl
from jax.experimental.pallas import tpu as pltpu

NTH = 1
D_LSTM_IN = 32 * 7                      # 224
H_LSTM = 128
D_X = 32 * (6 + NTH + 1) + 16 + 4       # 276
D_X_PAD = 384                           # lane-aligned K for fc1 x-matmul
D_FC1_OUT = 512
D_FC2_OUT = 512
D_FC3_OUT = 256
LN_EPS = 1e-5

# Row layout of the packed parameter-vector array (12, 512), all f32:
#   0: bl (= b_ih + b_hh, 512, gate order i,f,o,g)
#   1: b1   2: g1   3: be1
#   4: b2   5: g2   6: be2
#   7: b3 (256, zero padded)   8: g3   9: be3
#  10: wv row (256, zero padded)    11: bv broadcast across all lanes
_PV_ROWS = 12


def _layernorm(y, gamma, beta):
    mu = jnp.mean(y, axis=-1, keepdims=True)
    var = jnp.mean((y - mu) ** 2, axis=-1, keepdims=True)
    return (y - mu) * jax.lax.rsqrt(var + LN_EPS) * gamma + beta


def model_kernel(z_ref, x_ref, wih_ref, whh_ref, pv_ref,
                 w1h_hbm, w1x_hbm, w2_hbm, w3_hbm,
                 out_ref,
                 w1h_v, w1x_v, w2_v, w3_v, dma_sem):
    # ---- kick off MLP-weight DMAs so they overlap the LSTM recurrence ----
    # fc1 weights first (needed earliest), w2/w3 after them.
    cp_w1h = pltpu.make_async_copy(w1h_hbm, w1h_v, dma_sem.at[0])
    cp_w1x = pltpu.make_async_copy(w1x_hbm, w1x_v, dma_sem.at[1])
    cp_w1h.start()
    cp_w1x.start()
    cp_w2 = pltpu.make_async_copy(w2_hbm, w2_v, dma_sem.at[2])
    cp_w3 = pltpu.make_async_copy(w3_hbm, w3_v, dma_sem.at[3])
    cp_w2.start()
    cp_w3.start()

    B = out_ref.shape[0]                 # padded batch (multiple of 8)
    T = z_ref.shape[0] // B
    H = H_LSTM

    wih = wih_ref[...]                   # bf16 (224, 512), gates i,f,o,g
    whh = whh_ref[...]                   # bf16 (128, 512)
    bl = pv_ref[0:1, :]                  # f32  (1, 512)

    # Hoisted input projection over all timesteps: one big bf16 MXU call.
    zw = jnp.dot(z_ref[...].astype(jnp.bfloat16), wih,
                 preferred_element_type=jnp.float32) + bl        # (T*B, 512) f32

    # Fully unrolled recurrence (T static) — only h @ Whh on the serial path.
    h = jnp.zeros((B, H), jnp.float32)
    c = jnp.zeros((B, H), jnp.float32)
    for t in range(T):
        gates = zw[t * B:(t + 1) * B, :] + jnp.dot(
            h.astype(jnp.bfloat16), whh, preferred_element_type=jnp.float32)
        ifo = jax.nn.sigmoid(gates[:, :3 * H])    # i, f, o in one EUP launch
        g = jnp.tanh(gates[:, 3 * H:])            # g in one EUP launch
        c = ifo[:, H:2 * H] * c + ifo[:, :H] * g
        h = ifo[:, 2 * H:3 * H] * jnp.tanh(c)

    x = x_ref[...].astype(jnp.bfloat16)           # (B, 384)
    h16 = h.astype(jnp.bfloat16)

    b1 = pv_ref[1:2, :]
    g1 = pv_ref[2:3, :]
    be1 = pv_ref[3:4, :]
    b2 = pv_ref[4:5, :]
    g2 = pv_ref[5:6, :]
    be2 = pv_ref[6:7, :]
    b3 = pv_ref[7:8, 0:D_FC3_OUT]
    g3 = pv_ref[8:9, 0:D_FC3_OUT]
    be3 = pv_ref[9:10, 0:D_FC3_OUT]
    wv_row = pv_ref[10:11, 0:D_FC3_OUT]
    bv_row = pv_ref[11:12, 0:128]

    # fc1 over the concat [h_n, x]  (split into two bf16 matmuls).
    cp_w1h.wait()
    cp_w1x.wait()
    y = (jnp.dot(h16, w1h_v[...], preferred_element_type=jnp.float32)
         + jnp.dot(x, w1x_v[...], preferred_element_type=jnp.float32)
         + b1)
    y = jnp.maximum(_layernorm(y, g1, be1), 0.0)

    cp_w2.wait()
    y = jnp.dot(y.astype(jnp.bfloat16), w2_v[...],
                preferred_element_type=jnp.float32) + b2
    y = jnp.maximum(_layernorm(y, g2, be2), 0.0)

    cp_w3.wait()
    y = jnp.dot(y.astype(jnp.bfloat16), w3_v[...],
                preferred_element_type=jnp.float32) + b3
    y = jnp.maximum(_layernorm(y, g3, be3), 0.0)

    # Final 256 -> 1 head: VPU multiply + lane reduction (no MXU pass),
    # stored lane-dense as (B, 128); column 0 is the real output.
    val = jnp.sum(y * wv_row, axis=-1, keepdims=True)            # (B, 1)
    out_ref[...] = jnp.broadcast_to(val, (B, 128)) + bv_row


@jax.jit
def model_forward(z_tm, x, prep):
    """z_tm: (T, B, 224) time-major, x: (B, 276). Returns (B, 1) float32."""
    wih, whh, w1h, w1x, w2, w3, pvec = prep
    T, B, _ = z_tm.shape
    B_pad = max(8, ((B + 7) // 8) * 8)               # full 8-sublane tile

    z_p = jnp.pad(z_tm, ((0, 0), (0, B_pad - B), (0, 0)))
    z2d = z_p.reshape(T * B_pad, D_LSTM_IN)          # row t*B_pad + b
    x_p = jnp.pad(x, ((0, B_pad - B), (0, D_X_PAD - x.shape[-1])))

    vmem = pl.BlockSpec(memory_space=pltpu.MemorySpace.VMEM)
    hbm = pl.BlockSpec(memory_space=pl.ANY)

    out = pl.pallas_call(
        model_kernel,
        out_shape=jax.ShapeDtypeStruct((B_pad, 128), jnp.float32),
        in_specs=[vmem, vmem, vmem, vmem, vmem,      # z, x, wih, whh, pvec
                  hbm, hbm, hbm, hbm],               # w1h, w1x, w2, w3 (manual DMA)
        out_specs=vmem,
        scratch_shapes=[
            pltpu.VMEM((H_LSTM, D_FC1_OUT), jnp.bfloat16),
            pltpu.VMEM((D_X_PAD, D_FC1_OUT), jnp.bfloat16),
            pltpu.VMEM((D_FC1_OUT, D_FC2_OUT), jnp.bfloat16),
            pltpu.VMEM((D_FC2_OUT, D_FC3_OUT), jnp.bfloat16),
            pltpu.SemaphoreType.DMA((4,)),
        ],
    )(z2d, x_p, wih, whh, pvec, w1h, w1x, w2, w3)
    return out[:B, :1]


def init_params(key):
    """Raw f32 parameters (PyTorch-equivalent layout, weights as (in, out),
    LSTM gate columns in PyTorch order i,f,g,o)."""
    ks = jax.random.split(key, 12)
    s = 0.05
    wih = jax.random.normal(ks[0], (D_LSTM_IN, 4 * H_LSTM), jnp.float32) * s
    whh = jax.random.normal(ks[1], (H_LSTM, 4 * H_LSTM), jnp.float32) * s
    bl = jax.random.normal(ks[2], (1, 4 * H_LSTM), jnp.float32) * s   # b_ih+b_hh
    w1h = jax.random.normal(ks[3], (H_LSTM, D_FC1_OUT), jnp.float32) * s
    w1x = jax.random.normal(ks[4], (D_X, D_FC1_OUT), jnp.float32) * s
    b1 = jax.random.normal(ks[5], (1, D_FC1_OUT), jnp.float32) * s
    g1 = jnp.ones((1, D_FC1_OUT), jnp.float32)
    be1 = jnp.zeros((1, D_FC1_OUT), jnp.float32)
    w2 = jax.random.normal(ks[6], (D_FC1_OUT, D_FC2_OUT), jnp.float32) * s
    b2 = jax.random.normal(ks[7], (1, D_FC2_OUT), jnp.float32) * s
    g2 = jnp.ones((1, D_FC2_OUT), jnp.float32)
    be2 = jnp.zeros((1, D_FC2_OUT), jnp.float32)
    w3 = jax.random.normal(ks[8], (D_FC2_OUT, D_FC3_OUT), jnp.float32) * s
    b3 = jax.random.normal(ks[9], (1, D_FC3_OUT), jnp.float32) * s
    g3 = jnp.ones((1, D_FC3_OUT), jnp.float32)
    be3 = jnp.zeros((1, D_FC3_OUT), jnp.float32)
    wv = jax.random.normal(ks[10], (D_FC3_OUT, 1), jnp.float32) * s
    bv = jax.random.normal(ks[11], (1, 1), jnp.float32) * s
    return (wih, whh, bl,
            w1h, w1x, b1, g1, be1,
            w2, b2, g2, be2,
            w3, b3, g3, be3,
            wv, bv)


def _permute_gates(w):
    """Reorder last-dim gate blocks from PyTorch (i,f,g,o) to (i,f,o,g)."""
    H = H_LSTM
    return jnp.concatenate(
        [w[..., 0:2 * H], w[..., 3 * H:4 * H], w[..., 2 * H:3 * H]], axis=-1)


def prepare_params(params):
    """bf16-cast big weights, permute LSTM gates to (i,f,o,g), pad w1x to 384
    input rows, pack small (1,N) params into one (12, 512) f32 array."""
    (wih, whh, bl, w1h, w1x, b1, g1, be1,
     w2, b2, g2, be2, w3, b3, g3, be3, wv, bv) = params

    wih = _permute_gates(wih)
    whh = _permute_gates(whh)
    bl = _permute_gates(bl)
    w1x = jnp.pad(w1x, ((0, D_X_PAD - D_X), (0, 0)))

    def pad512(v):
        return jnp.pad(v, ((0, 0), (0, D_FC1_OUT - v.shape[-1])))

    pvec = jnp.concatenate([
        bl, b1, g1, be1, b2, g2, be2,
        pad512(b3), pad512(g3), pad512(be3),
        pad512(wv.T),                                # v head as a row vector
        jnp.broadcast_to(bv, (1, D_FC1_OUT)),        # bias broadcast to all lanes
    ], axis=0).astype(jnp.float32)                   # (12, 512)

    bf = lambda w: w.astype(jnp.bfloat16)
    return (bf(wih), bf(whh), bf(w1h), bf(w1x), bf(w2), bf(w3), pvec)


def reference_forward(z_tm, x, prep):
    """Pure-JAX reference using the same bf16 weights / bf16 matmul operands
    (f32 accumulation) as the kernel."""
    wih, whh, w1h, w1x, w2, w3, pvec = prep          # gate order i,f,o,g
    bl = pvec[0:1]
    b1, g1, be1 = pvec[1:2], pvec[2:3], pvec[3:4]
    b2, g2, be2 = pvec[4:5], pvec[5:6], pvec[6:7]
    b3 = pvec[7:8, :D_FC3_OUT]
    g3 = pvec[8:9, :D_FC3_OUT]
    be3 = pvec[9:10, :D_FC3_OUT]
    wv_row = pvec[10:11, :D_FC3_OUT]
    bv = pvec[11, 0]

    def bdot(a, b):
        return jnp.dot(a.astype(jnp.bfloat16), b,
                       preferred_element_type=jnp.float32)

    B = z_tm.shape[1]
    H = H_LSTM

    def step(carry, zt):
        h, c = carry
        gates = bdot(zt, wih) + bdot(h, whh) + bl
        ifo = jax.nn.sigmoid(gates[:, :3 * H])
        g = jnp.tanh(gates[:, 3 * H:])
        c = ifo[:, H:2 * H] * c + ifo[:, :H] * g
        h = ifo[:, 2 * H:3 * H] * jnp.tanh(c)
        return (h, c), None

    (h_n, _), _ = jax.lax.scan(
        step, (jnp.zeros((B, H), jnp.float32), jnp.zeros((B, H), jnp.float32)),
        z_tm)

    def ln(y, g, b):
        mu = jnp.mean(y, axis=-1, keepdims=True)
        var = jnp.mean((y - mu) ** 2, axis=-1, keepdims=True)
        return (y - mu) * jax.lax.rsqrt(var + LN_EPS) * g + b

    x_pad = jnp.pad(x, ((0, 0), (0, D_X_PAD - x.shape[-1])))
    y = jnp.maximum(ln(bdot(h_n, w1h) + bdot(x_pad, w1x) + b1, g1, be1), 0.0)
    y = jnp.maximum(ln(bdot(y, w2) + b2, g2, be2), 0.0)
    y = jnp.maximum(ln(bdot(y, w3) + b3, g3, be3), 0.0)
    return y @ wv_row.T + bv


if __name__ == "__main__":
    key = jax.random.PRNGKey(0)
    k_p, k_z, k_x = jax.random.split(key, 3)

    B, T = 2, 8
    params = init_params(k_p)
    prep = prepare_params(params)

    # z in PyTorch would be (B, T, 224) batch_first; kernel takes time-major.
    z_bt = jax.random.normal(k_z, (B, T, D_LSTM_IN), jnp.float32)
    z_tm = jnp.transpose(z_bt, (1, 0, 2))            # (T, B, 224)
    x = jax.random.normal(k_x, (B, D_X), jnp.float32)

    out = jax.block_until_ready(model_forward(z_tm, x, prep))
    ref = reference_forward(z_tm, x, prep)

    assert out.shape == (B, 1)
    assert jnp.allclose(out, ref, rtol=2e-3, atol=2e-3), (out, ref)

    print("KERNEL_OK")
</pallas_src>

<mosaic_0001>
module attributes {stable_mosaic.version = 11 : i64} {
  func.func @model_kernel(%arg0: memref<64x224xf32, #tpu.memory_space<vmem>>, %arg1: memref<8x384xf32, #tpu.memory_space<vmem>>, %arg2: memref<224x512xbf16, #tpu.memory_space<vmem>>, %arg3: memref<128x512xbf16, #tpu.memory_space<vmem>>, %arg4: memref<12x512xf32, #tpu.memory_space<vmem>>, %arg5: memref<128x512xbf16, #tpu.memory_space<any>>, %arg6: memref<384x512xbf16, #tpu.memory_space<any>>, %arg7: memref<512x512xbf16, #tpu.memory_space<any>>, %arg8: memref<512x256xbf16, #tpu.memory_space<any>>, %arg9: memref<8x128xf32, #tpu.memory_space<vmem>>, %arg10: memref<128x512xbf16, #tpu.memory_space<vmem>>, %arg11: memref<384x512xbf16, #tpu.memory_space<vmem>>, %arg12: memref<512x512xbf16, #tpu.memory_space<vmem>>, %arg13: memref<512x256xbf16, #tpu.memory_space<vmem>>, %arg14: memref<4x!tpu.dma_semaphore, #tpu.memory_space<semaphore_mem>>) attributes {dimension_semantics = [], scalar_prefetch = 0 : i64, scratch_operands = 5 : i64, tpu.core_type = #tpu.core_type<tc>} {
    %c0_i32 = arith.constant 0 : i32
    %0 = tpu.memref_slice %arg14[%c0_i32] : memref<4x!tpu.dma_semaphore, #tpu.memory_space<semaphore_mem>> -> memref<1x!tpu.dma_semaphore, #tpu.memory_space<semaphore_mem>>
    %1 = tpu.memref_squeeze %0 : memref<1x!tpu.dma_semaphore, #tpu.memory_space<semaphore_mem>> -> memref<!tpu.dma_semaphore, #tpu.memory_space<semaphore_mem>>
    tpu.enqueue_dma source(%arg5 : memref<128x512xbf16, #tpu.memory_space<any>>) target(%arg10 : memref<128x512xbf16, #tpu.memory_space<vmem>>) target_semaphore(%1 : memref<!tpu.dma_semaphore, #tpu.memory_space<semaphore_mem>>)
    %c1_i32 = arith.constant 1 : i32
    %2 = tpu.memref_slice %arg14[%c1_i32] : memref<4x!tpu.dma_semaphore, #tpu.memory_space<semaphore_mem>> -> memref<1x!tpu.dma_semaphore, #tpu.memory_space<semaphore_mem>>
    %3 = tpu.memref_squeeze %2 : memref<1x!tpu.dma_semaphore, #tpu.memory_space<semaphore_mem>> -> memref<!tpu.dma_semaphore, #tpu.memory_space<semaphore_mem>>
    tpu.enqueue_dma source(%arg6 : memref<384x512xbf16, #tpu.memory_space<any>>) target(%arg11 : memref<384x512xbf16, #tpu.memory_space<vmem>>) target_semaphore(%3 : memref<!tpu.dma_semaphore, #tpu.memory_space<semaphore_mem>>)
    %c2_i32 = arith.constant 2 : i32
    %4 = tpu.memref_slice %arg14[%c2_i32] : memref<4x!tpu.dma_semaphore, #tpu.memory_space<semaphore_mem>> -> memref<1x!tpu.dma_semaphore, #tpu.memory_space<semaphore_mem>>
    %5 = tpu.memref_squeeze %4 : memref<1x!tpu.dma_semaphore, #tpu.memory_space<semaphore_mem>> -> memref<!tpu.dma_semaphore, #tpu.memory_space<semaphore_mem>>
    tpu.enqueue_dma source(%arg7 : memref<512x512xbf16, #tpu.memory_space<any>>) target(%arg12 : memref<512x512xbf16, #tpu.memory_space<vmem>>) target_semaphore(%5 : memref<!tpu.dma_semaphore, #tpu.memory_space<semaphore_mem>>)
    %c3_i32 = arith.constant 3 : i32
    %6 = tpu.memref_slice %arg14[%c3_i32] : memref<4x!tpu.dma_semaphore, #tpu.memory_space<semaphore_mem>> -> memref<1x!tpu.dma_semaphore, #tpu.memory_space<semaphore_mem>>
    %7 = tpu.memref_squeeze %6 : memref<1x!tpu.dma_semaphore, #tpu.memory_space<semaphore_mem>> -> memref<!tpu.dma_semaphore, #tpu.memory_space<semaphore_mem>>
    tpu.enqueue_dma source(%arg8 : memref<512x256xbf16, #tpu.memory_space<any>>) target(%arg13 : memref<512x256xbf16, #tpu.memory_space<vmem>>) target_semaphore(%7 : memref<!tpu.dma_semaphore, #tpu.memory_space<semaphore_mem>>)
    %c0 = arith.constant 0 : index
    %c0_0 = arith.constant 0 : index
    %8 = vector.load %arg2[%c0, %c0_0] : memref<224x512xbf16, #tpu.memory_space<vmem>>, vector<224x512xbf16>
    %c0_1 = arith.constant 0 : index
    %c0_2 = arith.constant 0 : index
    %9 = vector.load %arg3[%c0_1, %c0_2] : memref<128x512xbf16, #tpu.memory_space<vmem>>, vector<128x512xbf16>
    %c0_3 = arith.constant 0 : index
    %c0_4 = arith.constant 0 : index
    %10 = vector.load %arg4[%c0_3, %c0_4] : memref<12x512xf32, #tpu.memory_space<vmem>>, vector<1x512xf32>
    %c0_5 = arith.constant 0 : index
    %c0_6 = arith.constant 0 : index
    %11 = vector.load %arg0[%c0_5, %c0_6] : memref<64x224xf32, #tpu.memory_space<vmem>>, vector<64x224xf32>
    %12 = arith.truncf %11 : vector<64x224xf32> to vector<64x224xbf16>
    %cst = arith.constant dense<0.000000e+00> : vector<64x512xf32>
    %13 = tpu.matmul %12, %8, %cst {dimension_numbers = #tpu.dot_dimension_numbers<[1], [0], [0], [1], [0, 0, 1, 1], [], []>} : vector<64x224xbf16>, vector<224x512xbf16>, vector<64x512xf32> -> vector<64x512xf32>
    %14 = vector.broadcast %10 : vector<1x512xf32> to vector<64x512xf32>
    %15 = arith.addf %13, %14 : vector<64x512xf32>
    %cst_7 = arith.constant 0.000000e+00 : f32
    %16 = vector.broadcast %cst_7 : f32 to vector<8x128xf32>
    %cst_8 = arith.constant 0.000000e+00 : f32
    %17 = vector.broadcast %cst_8 : f32 to vector<8x128xf32>
    %18 = vector.extract_strided_slice %15 {offsets = [0, 0], sizes = [8, 512], strides = [1, 1]} : vector<64x512xf32> to vector<8x512xf32>
    %19 = arith.truncf %16 : vector<8x128xf32> to vector<8x128xbf16>
    %cst_9 = arith.constant dense<0.000000e+00> : vector<8x512xf32>
    %20 = tpu.matmul %19, %9, %cst_9 {dimension_numbers = #tpu.dot_dimension_numbers<[1], [0], [0], [1], [0, 0, 1, 1], [], []>} : vector<8x128xbf16>, vector<128x512xbf16>, vector<8x512xf32> -> vector<8x512xf32>
    %21 = arith.addf %18, %20 : vector<8x512xf32>
    %22 = vector.extract_strided_slice %21 {offsets = [0, 0], sizes = [8, 384], strides = [1, 1]} : vector<8x512xf32> to vector<8x384xf32>
    %23 = arith.negf %22 : vector<8x384xf32>
    %24 = math.exp %23 : vector<8x384xf32>
    %cst_10 = arith.constant 1.000000e+00 : f32
    %25 = vector.broadcast %cst_10 : f32 to vector<8x384xf32>
    %26 = arith.addf %25, %24 : vector<8x384xf32>
    %27 = arith.divf %25, %26 : vector<8x384xf32>
    %28 = vector.extract_strided_slice %21 {offsets = [0, 384], sizes = [8, 128], strides = [1, 1]} : vector<8x512xf32> to vector<8x128xf32>
    %29 = math.tanh %28 : vector<8x128xf32>
    %30 = vector.extract_strided_slice %27 {offsets = [0, 128], sizes = [8, 128], strides = [1, 1]} : vector<8x384xf32> to vector<8x128xf32>
    %31 = arith.mulf %30, %17 : vector<8x128xf32>
    %32 = vector.extract_strided_slice %27 {offsets = [0, 0], sizes = [8, 128], strides = [1, 1]} : vector<8x384xf32> to vector<8x128xf32>
    %33 = arith.mulf %32, %29 : vector<8x128xf32>
    %34 = arith.addf %31, %33 : vector<8x128xf32>
    %35 = vector.extract_strided_slice %27 {offsets = [0, 256], sizes = [8, 128], strides = [1, 1]} : vector<8x384xf32> to vector<8x128xf32>
    %36 = math.tanh %34 : vector<8x128xf32>
    %37 = arith.mulf %35, %36 : vector<8x128xf32>
    %38 = vector.extract_strided_slice %15 {offsets = [8, 0], sizes = [8, 512], strides = [1, 1]} : vector<64x512xf32> to vector<8x512xf32>
    %39 = arith.truncf %37 : vector<8x128xf32> to vector<8x128xbf16>
    %cst_11 = arith.constant dense<0.000000e+00> : vector<8x512xf32>
    %40 = tpu.matmul %39, %9, %cst_11 {dimension_numbers = #tpu.dot_dimension_numbers<[1], [0], [0], [1], [0, 0, 1, 1], [], []>} : vector<8x128xbf16>, vector<128x512xbf16>, vector<8x512xf32> -> vector<8x512xf32>
    %41 = arith.addf %38, %40 : vector<8x512xf32>
    %42 = vector.extract_strided_slice %41 {offsets = [0, 0], sizes = [8, 384], strides = [1, 1]} : vector<8x512xf32> to vector<8x384xf32>
    %43 = arith.negf %42 : vector<8x384xf32>
    %44 = math.exp %43 : vector<8x384xf32>
    %cst_12 = arith.constant 1.000000e+00 : f32
    %45 = vector.broadcast %cst_12 : f32 to vector<8x384xf32>
    %46 = arith.addf %45, %44 : vector<8x384xf32>
    %47 = arith.divf %45, %46 : vector<8x384xf32>
    %48 = vector.extract_strided_slice %41 {offsets = [0, 384], sizes = [8, 128], strides = [1, 1]} : vector<8x512xf32> to vector<8x128xf32>
    %49 = math.tanh %48 : vector<8x128xf32>
    %50 = vector.extract_strided_slice %47 {offsets = [0, 128], sizes = [8, 128], strides = [1, 1]} : vector<8x384xf32> to vector<8x128xf32>
    %51 = arith.mulf %50, %34 : vector<8x128xf32>
    %52 = vector.extract_strided_slice %47 {offsets = [0, 0], sizes = [8, 128], strides = [1, 1]} : vector<8x384xf32> to vector<8x128xf32>
    %53 = arith.mulf %52, %49 : vector<8x128xf32>
    %54 = arith.addf %51, %53 : vector<8x128xf32>
    %55 = vector.extract_strided_slice %47 {offsets = [0, 256], sizes = [8, 128], strides = [1, 1]} : vector<8x384xf32> to vector<8x128xf32>
    %56 = math.tanh %54 : vector<8x128xf32>
    %57 = arith.mulf %55, %56 : vector<8x128xf32>
    %58 = vector.extract_strided_slice %15 {offsets = [16, 0], sizes = [8, 512], strides = [1, 1]} : vector<64x512xf32> to vector<8x512xf32>
    %59 = arith.truncf %57 : vector<8x128xf32> to vector<8x128xbf16>
    %cst_13 = arith.constant dense<0.000000e+00> : vector<8x512xf32>
    %60 = tpu.matmul %59, %9, %cst_13 {dimension_numbers = #tpu.dot_dimension_numbers<[1], [0], [0], [1], [0, 0, 1, 1], [], []>} : vector<8x128xbf16>, vector<128x512xbf16>, vector<8x512xf32> -> vector<8x512xf32>
    %61 = arith.addf %58, %60 : vector<8x512xf32>
    %62 = vector.extract_strided_slice %61 {offsets = [0, 0], sizes = [8, 384], strides = [1, 1]} : vector<8x512xf32> to vector<8x384xf32>
    %63 = arith.negf %62 : vector<8x384xf32>
    %64 = math.exp %63 : vector<8x384xf32>
    %cst_14 = arith.constant 1.000000e+00 : f32
    %65 = vector.broadcast %cst_14 : f32 to vector<8x384xf32>
    %66 = arith.addf %65, %64 : vector<8x384xf32>
    %67 = arith.divf %65, %66 : vector<8x384xf32>
    %68 = vector.extract_strided_slice %61 {offsets = [0, 384], sizes = [8, 128], strides = [1, 1]} : vector<8x512xf32> to vector<8x128xf32>
    %69 = math.tanh %68 : vector<8x128xf32>
    %70 = vector.extract_strided_slice %67 {offsets = [0, 128], sizes = [8, 128], strides = [1, 1]} : vector<8x384xf32> to vector<8x128xf32>
    %71 = arith.mulf %70, %54 : vector<8x128xf32>
    %72 = vector.extract_strided_slice %67 {offsets = [0, 0], sizes = [8, 128], strides = [1, 1]} : vector<8x384xf32> to vector<8x128xf32>
    %73 = arith.mulf %72, %69 : vector<8x128xf32>
    %74 = arith.addf %71, %73 : vector<8x128xf32>
    %75 = vector.extract_strided_slice %67 {offsets = [0, 256], sizes = [8, 128], strides = [1, 1]} : vector<8x384xf32> to vector<8x128xf32>
    %76 = math.tanh %74 : vector<8x128xf32>
    %77 = arith.mulf %75, %76 : vector<8x128xf32>
    %78 = vector.extract_strided_slice %15 {offsets = [24, 0], sizes = [8, 512], strides = [1, 1]} : vector<64x512xf32> to vector<8x512xf32>
    %79 = arith.truncf %77 : vector<8x128xf32> to vector<8x128xbf16>
    %cst_15 = arith.constant dense<0.000000e+00> : vector<8x512xf32>
    %80 = tpu.matmul %79, %9, %cst_15 {dimension_numbers = #tpu.dot_dimension_numbers<[1], [0], [0], [1], [0, 0, 1, 1], [], []>} : vector<8x128xbf16>, vector<128x512xbf16>, vector<8x512xf32> -> vector<8x512xf32>
    %81 = arith.addf %78, %80 : vector<8x512xf32>
    %82 = vector.extract_strided_slice %81 {offsets = [0, 0], sizes = [8, 384], strides = [1, 1]} : vector<8x512xf32> to vector<8x384xf32>
    %83 = arith.negf %82 : vector<8x384xf32>
    %84 = math.exp %83 : vector<8x384xf32>
    %cst_16 = arith.constant 1.000000e+00 : f32
    %85 = vector.broadcast %cst_16 : f32 to vector<8x384xf32>
    %86 = arith.addf %85, %84 : vector<8x384xf32>
    %87 = arith.divf %85, %86 : vector<8x384xf32>
    %88 = vector.extract_strided_slice %81 {offsets = [0, 384], sizes = [8, 128], strides = [1, 1]} : vector<8x512xf32> to vector<8x128xf32>
    %89 = math.tanh %88 : vector<8x128xf32>
    %90 = vector.extract_strided_slice %87 {offsets = [0, 128], sizes = [8, 128], strides = [1, 1]} : vector<8x384xf32> to vector<8x128xf32>
    %91 = arith.mulf %90, %74 : vector<8x128xf32>
    %92 = vector.extract_strided_slice %87 {offsets = [0, 0], sizes = [8, 128], strides = [1, 1]} : vector<8x384xf32> to vector<8x128xf32>
    %93 = arith.mulf %92, %89 : vector<8x128xf32>
    %94 = arith.addf %91, %93 : vector<8x128xf32>
    %95 = vector.extract_strided_slice %87 {offsets = [0, 256], sizes = [8, 128], strides = [1, 1]} : vector<8x384xf32> to vector<8x128xf32>
    %96 = math.tanh %94 : vector<8x128xf32>
    %97 = arith.mulf %95, %96 : vector<8x128xf32>
    %98 = vector.extract_strided_slice %15 {offsets = [32, 0], sizes = [8, 512], strides = [1, 1]} : vector<64x512xf32> to vector<8x512xf32>
    %99 = arith.truncf %97 : vector<8x128xf32> to vector<8x128xbf16>
    %cst_17 = arith.constant dense<0.000000e+00> : vector<8x512xf32>
    %100 = tpu.matmul %99, %9, %cst_17 {dimension_numbers = #tpu.dot_dimension_numbers<[1], [0], [0], [1], [0, 0, 1, 1], [], []>} : vector<8x128xbf16>, vector<128x512xbf16>, vector<8x512xf32> -> vector<8x512xf32>
    %101 = arith.addf %98, %100 : vector<8x512xf32>
    %102 = vector.extract_strided_slice %101 {offsets = [0, 0], sizes = [8, 384], strides = [1, 1]} : vector<8x512xf32> to vector<8x384xf32>
    %103 = arith.negf %102 : vector<8x384xf32>
    %104 = math.exp %103 : vector<8x384xf32>
    %cst_18 = arith.constant 1.000000e+00 : f32
    %105 = vector.broadcast %cst_18 : f32 to vector<8x384xf32>
    %106 = arith.addf %105, %104 : vector<8x384xf32>
    %107 = arith.divf %105, %106 : vector<8x384xf32>
    %108 = vector.extract_strided_slice %101 {offsets = [0, 384], sizes = [8, 128], strides = [1, 1]} : vector<8x512xf32> to vector<8x128xf32>
    %109 = math.tanh %108 : vector<8x128xf32>
    %110 = vector.extract_strided_slice %107 {offsets = [0, 128], sizes = [8, 128], strides = [1, 1]} : vector<8x384xf32> to vector<8x128xf32>
    %111 = arith.mulf %110, %94 : vector<8x128xf32>
    %112 = vector.extract_strided_slice %107 {offsets = [0, 0], sizes = [8, 128], strides = [1, 1]} : vector<8x384xf32> to vector<8x128xf32>
    %113 = arith.mulf %112, %109 : vector<8x128xf32>
    %114 = arith.addf %111, %113 : vector<8x128xf32>
    %115 = vector.extract_strided_slice %107 {offsets = [0, 256], sizes = [8, 128], strides = [1, 1]} : vector<8x384xf32> to vector<8x128xf32>
    %116 = math.tanh %114 : vector<8x128xf32>
    %117 = arith.mulf %115, %116 : vector<8x128xf32>
    %118 = vector.extract_strided_slice %15 {offsets = [40, 0], sizes = [8, 512], strides = [1, 1]} : vector<64x512xf32> to vector<8x512xf32>
    %119 = arith.truncf %117 : vector<8x128xf32> to vector<8x128xbf16>
    %cst_19 = arith.constant dense<0.000000e+00> : vector<8x512xf32>
    %120 = tpu.matmul %119, %9, %cst_19 {dimension_numbers = #tpu.dot_dimension_numbers<[1], [0], [0], [1], [0, 0, 1, 1], [], []>} : vector<8x128xbf16>, vector<128x512xbf16>, vector<8x512xf32> -> vector<8x512xf32>
    %121 = arith.addf %118, %120 : vector<8x512xf32>
    %122 = vector.extract_strided_slice %121 {offsets = [0, 0], sizes = [8, 384], strides = [1, 1]} : vector<8x512xf32> to vector<8x384xf32>
    %123 = arith.negf %122 : vector<8x384xf32>
    %124 = math.exp %123 : vector<8x384xf32>
    %cst_20 = arith.constant 1.000000e+00 : f32
    %125 = vector.broadcast %cst_20 : f32 to vector<8x384xf32>
    %126 = arith.addf %125, %124 : vector<8x384xf32>
    %127 = arith.divf %125, %126 : vector<8x384xf32>
    %128 = vector.extract_strided_slice %121 {offsets = [0, 384], sizes = [8, 128], strides = [1, 1]} : vector<8x512xf32> to vector<8x128xf32>
    %129 = math.tanh %128 : vector<8x128xf32>
    %130 = vector.extract_strided_slice %127 {offsets = [0, 128], sizes = [8, 128], strides = [1, 1]} : vector<8x384xf32> to vector<8x128xf32>
    %131 = arith.mulf %130, %114 : vector<8x128xf32>
    %132 = vector.extract_strided_slice %127 {offsets = [0, 0], sizes = [8, 128], strides = [1, 1]} : vector<8x384xf32> to vector<8x128xf32>
    %133 = arith.mulf %132, %129 : vector<8x128xf32>
    %134 = arith.addf %131, %133 : vector<8x128xf32>
    %135 = vector.extract_strided_slice %127 {offsets = [0, 256], sizes = [8, 128], strides = [1, 1]} : vector<8x384xf32> to vector<8x128xf32>
    %136 = math.tanh %134 : vector<8x128xf32>
    %137 = arith.mulf %135, %136 : vector<8x128xf32>
    %138 = vector.extract_strided_slice %15 {offsets = [48, 0], sizes = [8, 512], strides = [1, 1]} : vector<64x512xf32> to vector<8x512xf32>
    %139 = arith.truncf %137 : vector<8x128xf32> to vector<8x128xbf16>
    %cst_21 = arith.constant dense<0.000000e+00> : vector<8x512xf32>
    %140 = tpu.matmul %139, %9, %cst_21 {dimension_numbers = #tpu.dot_dimension_numbers<[1], [0], [0], [1], [0, 0, 1, 1], [], []>} : vector<8x128xbf16>, vector<128x512xbf16>, vector<8x512xf32> -> vector<8x512xf32>
    %141 = arith.addf %138, %140 : vector<8x512xf32>
    %142 = vector.extract_strided_slice %141 {offsets = [0, 0], sizes = [8, 384], strides = [1, 1]} : vector<8x512xf32> to vector<8x384xf32>
    %143 = arith.negf %142 : vector<8x384xf32>
    %144 = math.exp %143 : vector<8x384xf32>
    %cst_22 = arith.constant 1.000000e+00 : f32
    %145 = vector.broadcast %cst_22 : f32 to vector<8x384xf32>
    %146 = arith.addf %145, %144 : vector<8x384xf32>
    %147 = arith.divf %145, %146 : vector<8x384xf32>
    %148 = vector.extract_strided_slice %141 {offsets = [0, 384], sizes = [8, 128], strides = [1, 1]} : vector<8x512xf32> to vector<8x128xf32>
    %149 = math.tanh %148 : vector<8x128xf32>
    %150 = vector.extract_strided_slice %147 {offsets = [0, 128], sizes = [8, 128], strides = [1, 1]} : vector<8x384xf32> to vector<8x128xf32>
    %151 = arith.mulf %150, %134 : vector<8x128xf32>
    %152 = vector.extract_strided_slice %147 {offsets = [0, 0], sizes = [8, 128], strides = [1, 1]} : vector<8x384xf32> to vector<8x128xf32>
    %153 = arith.mulf %152, %149 : vector<8x128xf32>
    %154 = arith.addf %151, %153 : vector<8x128xf32>
    %155 = vector.extract_strided_slice %147 {offsets = [0, 256], sizes = [8, 128], strides = [1, 1]} : vector<8x384xf32> to vector<8x128xf32>
    %156 = math.tanh %154 : vector<8x128xf32>
    %157 = arith.mulf %155, %156 : vector<8x128xf32>
    %158 = vector.extract_strided_slice %15 {offsets = [56, 0], sizes = [8, 512], strides = [1, 1]} : vector<64x512xf32> to vector<8x512xf32>
    %159 = arith.truncf %157 : vector<8x128xf32> to vector<8x128xbf16>
    %cst_23 = arith.constant dense<0.000000e+00> : vector<8x512xf32>
    %160 = tpu.matmul %159, %9, %cst_23 {dimension_numbers = #tpu.dot_dimension_numbers<[1], [0], [0], [1], [0, 0, 1, 1], [], []>} : vector<8x128xbf16>, vector<128x512xbf16>, vector<8x512xf32> -> vector<8x512xf32>
    %161 = arith.addf %158, %160 : vector<8x512xf32>
    %162 = vector.extract_strided_slice %161 {offsets = [0, 0], sizes = [8, 384], strides = [1, 1]} : vector<8x512xf32> to vector<8x384xf32>
    %163 = arith.negf %162 : vector<8x384xf32>
    %164 = math.exp %163 : vector<8x384xf32>
    %cst_24 = arith.constant 1.000000e+00 : f32
    %165 = vector.broadcast %cst_24 : f32 to vector<8x384xf32>
    %166 = arith.addf %165, %164 : vector<8x384xf32>
    %167 = arith.divf %165, %166 : vector<8x384xf32>
    %168 = vector.extract_strided_slice %161 {offsets = [0, 384], sizes = [8, 128], strides = [1, 1]} : vector<8x512xf32> to vector<8x128xf32>
    %169 = math.tanh %168 : vector<8x128xf32>
    %170 = vector.extract_strided_slice %167 {offsets = [0, 128], sizes = [8, 128], strides = [1, 1]} : vector<8x384xf32> to vector<8x128xf32>
    %171 = arith.mulf %170, %154 : vector<8x128xf32>
    %172 = vector.extract_strided_slice %167 {offsets = [0, 0], sizes = [8, 128], strides = [1, 1]} : vector<8x384xf32> to vector<8x128xf32>
    %173 = arith.mulf %172, %169 : vector<8x128xf32>
    %174 = arith.addf %171, %173 : vector<8x128xf32>
    %175 = vector.extract_strided_slice %167 {offsets = [0, 256], sizes = [8, 128], strides = [1, 1]} : vector<8x384xf32> to vector<8x128xf32>
    %176 = math.tanh %174 : vector<8x128xf32>
    %177 = arith.mulf %175, %176 : vector<8x128xf32>
    %c0_25 = arith.constant 0 : index
    %c0_26 = arith.constant 0 : index
    %178 = vector.load %arg1[%c0_25, %c0_26] : memref<8x384xf32, #tpu.memory_space<vmem>>, vector<8x384xf32>
    %179 = arith.truncf %178 : vector<8x384xf32> to vector<8x384xbf16>
    %180 = arith.truncf %177 : vector<8x128xf32> to vector<8x128xbf16>
    %c1 = arith.constant 1 : index
    %c0_27 = arith.constant 0 : index
    %181 = vector.load %arg4[%c1, %c0_27] : memref<12x512xf32, #tpu.memory_space<vmem>>, vector<1x512xf32>
    %c2 = arith.constant 2 : index
    %c0_28 = arith.constant 0 : index
    %182 = vector.load %arg4[%c2, %c0_28] : memref<12x512xf32, #tpu.memory_space<vmem>>, vector<1x512xf32>
    %c3 = arith.constant 3 : index
    %c0_29 = arith.constant 0 : index
    %183 = vector.load %arg4[%c3, %c0_29] : memref<12x512xf32, #tpu.memory_space<vmem>>, vector<1x512xf32>
    %c4 = arith.constant 4 : index
    %c0_30 = arith.constant 0 : index
    %184 = vector.load %arg4[%c4, %c0_30] : memref<12x512xf32, #tpu.memory_space<vmem>>, vector<1x512xf32>
    %c5 = arith.constant 5 : index
    %c0_31 = arith.constant 0 : index
    %185 = vector.load %arg4[%c5, %c0_31] : memref<12x512xf32, #tpu.memory_space<vmem>>, vector<1x512xf32>
    %c6 = arith.constant 6 : index
    %c0_32 = arith.constant 0 : index
    %186 = vector.load %arg4[%c6, %c0_32] : memref<12x512xf32, #tpu.memory_space<vmem>>, vector<1x512xf32>
    %c7 = arith.constant 7 : index
    %c0_33 = arith.constant 0 : index
    %187 = vector.load %arg4[%c7, %c0_33] : memref<12x512xf32, #tpu.memory_space<vmem>>, vector<1x256xf32>
    %c8 = arith.constant 8 : index
    %c0_34 = arith.constant 0 : index
    %188 = vector.load %arg4[%c8, %c0_34] : memref<12x512xf32, #tpu.memory_space<vmem>>, vector<1x256xf32>
    %c9 = arith.constant 9 : index
    %c0_35 = arith.constant 0 : index
    %189 = vector.load %arg4[%c9, %c0_35] : memref<12x512xf32, #tpu.memory_space<vmem>>, vector<1x256xf32>
    %c10 = arith.constant 10 : index
    %c0_36 = arith.constant 0 : index
    %190 = vector.load %arg4[%c10, %c0_36] : memref<12x512xf32, #tpu.memory_space<vmem>>, vector<1x256xf32>
    %c11 = arith.constant 11 : index
    %c0_37 = arith.constant 0 : index
    %191 = vector.load %arg4[%c11, %c0_37] : memref<12x512xf32, #tpu.memory_space<vmem>>, vector<1x128xf32>
    %c0_i32_38 = arith.constant 0 : i32
    %192 = tpu.memref_slice %arg14[%c0_i32_38] : memref<4x!tpu.dma_semaphore, #tpu.memory_space<semaphore_mem>> -> memref<1x!tpu.dma_semaphore, #tpu.memory_space<semaphore_mem>>
    %193 = tpu.memref_squeeze %192 : memref<1x!tpu.dma_semaphore, #tpu.memory_space<semaphore_mem>> -> memref<!tpu.dma_semaphore, #tpu.memory_space<semaphore_mem>>
    tpu.wait_dma2 semaphore(%193 : memref<!tpu.dma_semaphore, #tpu.memory_space<semaphore_mem>>) src(%arg5 : memref<128x512xbf16, #tpu.memory_space<any>>) dst(%arg10 : memref<128x512xbf16, #tpu.memory_space<vmem>>)
    %c1_i32_39 = arith.constant 1 : i32
    %194 = tpu.memref_slice %arg14[%c1_i32_39] : memref<4x!tpu.dma_semaphore, #tpu.memory_space<semaphore_mem>> -> memref<1x!tpu.dma_semaphore, #tpu.memory_space<semaphore_mem>>
    %195 = tpu.memref_squeeze %194 : memref<1x!tpu.dma_semaphore, #tpu.memory_space<semaphore_mem>> -> memref<!tpu.dma_semaphore, #tpu.memory_space<semaphore_mem>>
    tpu.wait_dma2 semaphore(%195 : memref<!tpu.dma_semaphore, #tpu.memory_space<semaphore_mem>>) src(%arg6 : memref<384x512xbf16, #tpu.memory_space<any>>) dst(%arg11 : memref<384x512xbf16, #tpu.memory_space<vmem>>)
    %c0_40 = arith.constant 0 : index
    %c0_41 = arith.constant 0 : index
    %196 = vector.load %arg10[%c0_40, %c0_41] : memref<128x512xbf16, #tpu.memory_space<vmem>>, vector<128x512xbf16>
    %cst_42 = arith.constant dense<0.000000e+00> : vector<8x512xf32>
    %197 = tpu.matmul %180, %196, %cst_42 {dimension_numbers = #tpu.dot_dimension_numbers<[1], [0], [0], [1], [0, 0, 1, 1], [], []>} : vector<8x128xbf16>, vector<128x512xbf16>, vector<8x512xf32> -> vector<8x512xf32>
    %c0_43 = arith.constant 0 : index
    %c0_44 = arith.constant 0 : index
    %198 = vector.load %arg11[%c0_43, %c0_44] : memref<384x512xbf16, #tpu.memory_space<vmem>>, vector<384x512xbf16>
    %cst_45 = arith.constant dense<0.000000e+00> : vector<8x512xf32>
    %199 = tpu.matmul %179, %198, %cst_45 {dimension_numbers = #tpu.dot_dimension_numbers<[1], [0], [0], [1], [0, 0, 1, 1], [], []>} : vector<8x384xbf16>, vector<384x512xbf16>, vector<8x512xf32> -> vector<8x512xf32>
    %200 = arith.addf %197, %199 : vector<8x512xf32>
    %201 = vector.broadcast %181 : vector<1x512xf32> to vector<8x512xf32>
    %202 = arith.addf %200, %201 : vector<8x512xf32>
    %cst_46 = arith.constant dense<0.000000e+00> : vector<8xf32>
    %203 = vector.multi_reduction <add>, %202, %cst_46 [1] : vector<8x512xf32> to vector<8xf32>
    %204 = vector.shape_cast %203 : vector<8xf32> to vector<8x1xf32>
    %cst_47 = arith.constant 5.120000e+02 : f32
    %205 = vector.broadcast %cst_47 : f32 to vector<8x1xf32>
    %206 = arith.divf %204, %205 : vector<8x1xf32>
    %207 = vector.broadcast %206 : vector<8x1xf32> to vector<8x512xf32>
    %208 = arith.subf %202, %207 : vector<8x512xf32>
    %209 = arith.mulf %208, %208 : vector<8x512xf32>
    %cst_48 = arith.constant dense<0.000000e+00> : vector<8xf32>
    %210 = vector.multi_reduction <add>, %209, %cst_48 [1] : vector<8x512xf32> to vector<8xf32>
    %211 = vector.shape_cast %210 : vector<8xf32> to vector<8x1xf32>
    %cst_49 = arith.constant 5.120000e+02 : f32
    %212 = vector.broadcast %cst_49 : f32 to vector<8x1xf32>
    %213 = arith.divf %211, %212 : vector<8x1xf32>
    %214 = vector.broadcast %206 : vector<8x1xf32> to vector<8x512xf32>
    %215 = arith.subf %202, %214 : vector<8x512xf32>
    %cst_50 = arith.constant 9.99999974E-6 : f32
    %216 = vector.broadcast %cst_50 : f32 to vector<8x1xf32>
    %217 = arith.addf %213, %216 : vector<8x1xf32>
    %218 = math.rsqrt %217 : vector<8x1xf32>
    %219 = vector.broadcast %218 : vector<8x1xf32> to vector<8x512xf32>
    %220 = arith.mulf %215, %219 : vector<8x512xf32>
    %221 = vector.broadcast %182 : vector<1x512xf32> to vector<8x512xf32>
    %222 = arith.mulf %220, %221 : vector<8x512xf32>
    %223 = vector.broadcast %183 : vector<1x512xf32> to vector<8x512xf32>
    %224 = arith.addf %222, %223 : vector<8x512xf32>
    %cst_51 = arith.constant 0.000000e+00 : f32
    %225 = vector.broadcast %cst_51 : f32 to vector<8x512xf32>
    %226 = arith.maximumf %224, %225 : vector<8x512xf32>
    %c2_i32_52 = arith.constant 2 : i32
    %227 = tpu.memref_slice %arg14[%c2_i32_52] : memref<4x!tpu.dma_semaphore, #tpu.memory_space<semaphore_mem>> -> memref<1x!tpu.dma_semaphore, #tpu.memory_space<semaphore_mem>>
    %228 = tpu.memref_squeeze %227 : memref<1x!tpu.dma_semaphore, #tpu.memory_space<semaphore_mem>> -> memref<!tpu.dma_semaphore, #tpu.memory_space<semaphore_mem>>
    tpu.wait_dma2 semaphore(%228 : memref<!tpu.dma_semaphore, #tpu.memory_space<semaphore_mem>>) src(%arg7 : memref<512x512xbf16, #tpu.memory_space<any>>) dst(%arg12 : memref<512x512xbf16, #tpu.memory_space<vmem>>)
    %229 = arith.truncf %226 : vector<8x512xf32> to vector<8x512xbf16>
    %c0_53 = arith.constant 0 : index
    %c0_54 = arith.constant 0 : index
    %230 = vector.load %arg12[%c0_53, %c0_54] : memref<512x512xbf16, #tpu.memory_space<vmem>>, vector<512x512xbf16>
    %cst_55 = arith.constant dense<0.000000e+00> : vector<8x512xf32>
    %231 = tpu.matmul %229, %230, %cst_55 {dimension_numbers = #tpu.dot_dimension_numbers<[1], [0], [0], [1], [0, 0, 1, 1], [], []>} : vector<8x512xbf16>, vector<512x512xbf16>, vector<8x512xf32> -> vector<8x512xf32>
    %232 = vector.broadcast %184 : vector<1x512xf32> to vector<8x512xf32>
    %233 = arith.addf %231, %232 : vector<8x512xf32>
    %cst_56 = arith.constant dense<0.000000e+00> : vector<8xf32>
    %234 = vector.multi_reduction <add>, %233, %cst_56 [1] : vector<8x512xf32> to vector<8xf32>
    %235 = vector.shape_cast %234 : vector<8xf32> to vector<8x1xf32>
    %cst_57 = arith.constant 5.120000e+02 : f32
    %236 = vector.broadcast %cst_57 : f32 to vector<8x1xf32>
    %237 = arith.divf %235, %236 : vector<8x1xf32>
    %238 = vector.broadcast %237 : vector<8x1xf32> to vector<8x512xf32>
    %239 = arith.subf %233, %238 : vector<8x512xf32>
    %240 = arith.mulf %239, %239 : vector<8x512xf32>
    %cst_58 = arith.constant dense<0.000000e+00> : vector<8xf32>
    %241 = vector.multi_reduction <add>, %240, %cst_58 [1] : vector<8x512xf32> to vector<8xf32>
    %242 = vector.shape_cast %241 : vector<8xf32> to vector<8x1xf32>
    %cst_59 = arith.constant 5.120000e+02 : f32
    %243 = vector.broadcast %cst_59 : f32 to vector<8x1xf32>
    %244 = arith.divf %242, %243 : vector<8x1xf32>
    %245 = vector.broadcast %237 : vector<8x1xf32> to vector<8x512xf32>
    %246 = arith.subf %233, %245 : vector<8x512xf32>
    %cst_60 = arith.constant 9.99999974E-6 : f32
    %247 = vector.broadcast %cst_60 : f32 to vector<8x1xf32>
    %248 = arith.addf %244, %247 : vector<8x1xf32>
    %249 = math.rsqrt %248 : vector<8x1xf32>
    %250 = vector.broadcast %249 : vector<8x1xf32> to vector<8x512xf32>
    %251 = arith.mulf %246, %250 : vector<8x512xf32>
    %252 = vector.broadcast %185 : vector<1x512xf32> to vector<8x512xf32>
    %253 = arith.mulf %251, %252 : vector<8x512xf32>
    %254 = vector.broadcast %186 : vector<1x512xf32> to vector<8x512xf32>
    %255 = arith.addf %253, %254 : vector<8x512xf32>
    %cst_61 = arith.constant 0.000000e+00 : f32
    %256 = vector.broadcast %cst_61 : f32 to vector<8x512xf32>
    %257 = arith.maximumf %255, %256 : vector<8x512xf32>
    %c3_i32_62 = arith.constant 3 : i32
    %258 = tpu.memref_slice %arg14[%c3_i32_62] : memref<4x!tpu.dma_semaphore, #tpu.memory_space<semaphore_mem>> -> memref<1x!tpu.dma_semaphore, #tpu.memory_space<semaphore_mem>>
    %259 = tpu.memref_squeeze %258 : memref<1x!tpu.dma_semaphore, #tpu.memory_space<semaphore_mem>> -> memref<!tpu.dma_semaphore, #tpu.memory_space<semaphore_mem>>
    tpu.wait_dma2 semaphore(%259 : memref<!tpu.dma_semaphore, #tpu.memory_space<semaphore_mem>>) src(%arg8 : memref<512x256xbf16, #tpu.memory_space<any>>) dst(%arg13 : memref<512x256xbf16, #tpu.memory_space<vmem>>)
    %260 = arith.truncf %257 : vector<8x512xf32> to vector<8x512xbf16>
    %c0_63 = arith.constant 0 : index
    %c0_64 = arith.constant 0 : index
    %261 = vector.load %arg13[%c0_63, %c0_64] : memref<512x256xbf16, #tpu.memory_space<vmem>>, vector<512x256xbf16>
    %cst_65 = arith.constant dense<0.000000e+00> : vector<8x256xf32>
    %262 = tpu.matmul %260, %261, %cst_65 {dimension_numbers = #tpu.dot_dimension_numbers<[1], [0], [0], [1], [0, 0, 1, 1], [], []>} : vector<8x512xbf16>, vector<512x256xbf16>, vector<8x256xf32> -> vector<8x256xf32>
    %263 = vector.broadcast %187 : vector<1x256xf32> to vector<8x256xf32>
    %264 = arith.addf %262, %263 : vector<8x256xf32>
    %cst_66 = arith.constant dense<0.000000e+00> : vector<8xf32>
    %265 = vector.multi_reduction <add>, %264, %cst_66 [1] : vector<8x256xf32> to vector<8xf32>
    %266 = vector.shape_cast %265 : vector<8xf32> to vector<8x1xf32>
    %cst_67 = arith.constant 2.560000e+02 : f32
    %267 = vector.broadcast %cst_67 : f32 to vector<8x1xf32>
    %268 = arith.divf %266, %267 : vector<8x1xf32>
    %269 = vector.broadcast %268 : vector<8x1xf32> to vector<8x256xf32>
    %270 = arith.subf %264, %269 : vector<8x256xf32>
    %271 = arith.mulf %270, %270 : vector<8x256xf32>
    %cst_68 = arith.constant dense<0.000000e+00> : vector<8xf32>
    %272 = vector.multi_reduction <add>, %271, %cst_68 [1] : vector<8x256xf32> to vector<8xf32>
    %273 = vector.shape_cast %272 : vector<8xf32> to vector<8x1xf32>
    %cst_69 = arith.constant 2.560000e+02 : f32
    %274 = vector.broadcast %cst_69 : f32 to vector<8x1xf32>
    %275 = arith.divf %273, %274 : vector<8x1xf32>
    %276 = vector.broadcast %268 : vector<8x1xf32> to vector<8x256xf32>
    %277 = arith.subf %264, %276 : vector<8x256xf32>
    %cst_70 = arith.constant 9.99999974E-6 : f32
    %278 = vector.broadcast %cst_70 : f32 to vector<8x1xf32>
    %279 = arith.addf %275, %278 : vector<8x1xf32>
    %280 = math.rsqrt %279 : vector<8x1xf32>
    %281 = vector.broadcast %280 : vector<8x1xf32> to vector<8x256xf32>
    %282 = arith.mulf %277, %281 : vector<8x256xf32>
    %283 = vector.broadcast %188 : vector<1x256xf32> to vector<8x256xf32>
    %284 = arith.mulf %282, %283 : vector<8x256xf32>
    %285 = vector.broadcast %189 : vector<1x256xf32> to vector<8x256xf32>
    %286 = arith.addf %284, %285 : vector<8x256xf32>
    %cst_71 = arith.constant 0.000000e+00 : f32
    %287 = vector.broadcast %cst_71 : f32 to vector<8x256xf32>
    %288 = arith.maximumf %286, %287 : vector<8x256xf32>
    %289 = vector.broadcast %190 : vector<1x256xf32> to vector<8x256xf32>
    %290 = arith.mulf %288, %289 : vector<8x256xf32>
    %cst_72 = arith.constant dense<0.000000e+00> : vector<8xf32>
    %291 = vector.multi_reduction <add>, %290, %cst_72 [1] : vector<8x256xf32> to vector<8xf32>
    %292 = vector.shape_cast %291 : vector<8xf32> to vector<8x1xf32>
    %293 = vector.shape_cast %292 : vector<8x1xf32> to vector<8x1xf32>
    %294 = vector.broadcast %293 : vector<8x1xf32> to vector<8x128xf32>
    %295 = vector.broadcast %191 : vector<1x128xf32> to vector<8x128xf32>
    %296 = arith.addf %294, %295 : vector<8x128xf32>
    %c0_73 = arith.constant 0 : index
    %c0_74 = arith.constant 0 : index
    %297 = vector.load %arg9[%c0_73, %c0_74] : memref<8x128xf32, #tpu.memory_space<vmem>>, vector<8x128xf32>
    tpu.vector_store %arg9[%c0_73, %c0_74], %296 {strides = array<i32>} : memref<8x128xf32, #tpu.memory_space<vmem>>, vector<8x128xf32>,
    return
  }
}

</mosaic_0001>

<llo_original>
// kernel: model_forward.1
$region0: #{model_forward.1}
  #allocation0 [shape = 'u32[]', space=smem, size = 0x4, offset = 0x4, fixed_abs, tag = 'smem constant byte address 0x4 - core index']
  #allocation1 [shape = 'u32[144,128]{1,0:T(1,128)}', space=vmem, size = 0x12000, scoped, tag = 'internal scratch']
  #allocation2 [shape = 'bf16[128,512]{1,0:T(8,128)(2,1)}', space=vmem, size = 0x20000, scoped, tag = 'scratch operand']
  #allocation3 [shape = 'bf16[384,512]{1,0:T(8,128)(2,1)}', space=vmem, size = 0x60000, scoped, tag = 'scratch operand']
  #allocation4 [shape = 'bf16[512,512]{1,0:T(8,128)(2,1)}', space=vmem, size = 0x80000, scoped, tag = 'scratch operand']
  #allocation5 [shape = 'bf16[512,256]{1,0:T(8,128)(2,1)}', space=vmem, size = 0x40000, scoped, tag = 'scratch operand']
  #allocation6 [shape = 's32[4]{0}', space=sflag, size = 0x10, scoped, tag = 'scratch operand']
  #allocation11 [shape = 's32[]', space=sflag, size = 0x4, offset = 0, fixed_abs, tag = 'sflag constant byte address 0x0 - dummy sync flag']
  #allocation12 [shape = 's32[]', space=sflag, size = 0x4, offset = 0, fixed_abs, tag = 'sflag constant byte address 0x0 - dummy sync flag']
  #allocation13 [shape = 'u32[]', space=smem, size = 0x4, offset = 0x44, fixed_abs, tag = 'smem constant byte address 0x44 - assertion arg 0']
  #allocation14 [shape = 'u32[]', space=smem, size = 0x4, offset = 0x48, fixed_abs, tag = 'smem constant byte address 0x48 - assertion arg 1']
  #allocation15 [shape = 's32[]', space=sflag, size = 0x4, offset = 0, fixed_abs, tag = 'sflag constant byte address 0x0 - dummy sync flag']
  #allocation16 [shape = 's32[]', space=sflag, size = 0x4, offset = 0, fixed_abs, tag = 'sflag constant byte address 0x0 - dummy sync flag']
  #allocation17 [shape = 's32[]', space=sflag, size = 0x4, offset = 0, fixed_abs, tag = 'sflag constant byte address 0x0 - dummy sync flag']
  #allocation18 [shape = 's32[]', space=sflag, size = 0x4, offset = 0, fixed_abs, tag = 'sflag constant byte address 0x0 - dummy sync flag']
  #allocation19 [shape = 's32[]', space=sflag, size = 0x4, offset = 0, fixed_abs, tag = 'sflag constant byte address 0x0 - dummy sync flag']
  #allocation20 [shape = 's32[]', space=sflag, size = 0x4, offset = 0, fixed_abs, tag = 'sflag constant byte address 0x0 - dummy sync flag']
  %s0 = inlined_call_operand.vmem [shape: f32[64,224], index: 0, kind: input, shape index: {}]
  %s1 = inlined_call_operand.vmem [shape: f32[8,384], index: 1, kind: input, shape index: {}]
  %s2 = inlined_call_operand.hbm [shape: bf16[224,512], index: 2, kind: input, shape index: {}]
  %s3 = inlined_call_operand.hbm [shape: bf16[128,512], index: 3, kind: input, shape index: {}]
  %s4 = inlined_call_operand.vmem [shape: f32[12,512], index: 4, kind: input, shape index: {}]
  %s5 = inlined_call_operand.hbm [shape: bf16[128,512], index: 5, kind: input, shape index: {}]
  %s6 = inlined_call_operand.hbm [shape: bf16[384,512], index: 6, kind: input, shape index: {}]
  %s7 = inlined_call_operand.hbm [shape: bf16[512,512], index: 7, kind: input, shape index: {}]
  %s8 = inlined_call_operand.hbm [shape: bf16[512,256], index: 8, kind: input, shape index: {}]
  %s9 = inlined_call_operand.vmem [shape: f32[8,128], index: 9, kind: output, shape index: {}]
  %s10 = sld [smem:[#allocation0]]
  $region54: #{model_forward.1} parent=0
    _
  %s12 = ssub.s32 1, %s10
  %s13 = scalar_select 0, %s12, %s10
  $region1: #{model_forward.1} parent=0
    #allocation7 [shape = 'u8[229376]{0}', space=vmem, size = 0x38000, scoped, tag = 'input window, operand 2, single buffered']
    #allocation8 [shape = 's32[1]{0}', space=sflag, size = 0x4, scoped, tag = 'scoped memory for model_forward.1']
    #allocation9 [shape = 'u8[131072]{0}', space=vmem, size = 0x20000, scoped, tag = 'input window, operand 3, single buffered']
    #allocation10 [shape = 's32[1]{0}', space=sflag, size = 0x4, scoped, tag = 'scoped memory for model_forward.1']
    %14 = vsyncpa [#allocation8], 0
    %15 = vsyncpa [#allocation10], 0
    // Predicated region
    $region2: #{model_forward.1} parent=1 // pred_check
      _
    $region3: #{model_forward.1} parent=1 // pred_check_branch
      %17 = sbr.rel (0) target = $region5
    $region4: #{model_forward.1} parent=1 // pred_region
      _
    $region5: #{model_forward.1} parent=1 // pred_fallthru
      _
    // Predicated region
    $region6: #{model_forward.1} parent=1 // pred_check
      _
    $region7: #{model_forward.1} parent=1 // pred_check_branch
      %19 = sbr.rel (0) target = $region9
    $region8: #{model_forward.1} parent=1 // pred_region
      _
    $region9: #{model_forward.1} parent=1 // pred_fallthru
      _
    // Predicated region
    $region10: #{model_forward.1} parent=1 // pred_check
      _
    $region11: #{model_forward.1} parent=1 // pred_check_branch
      %21 = sbr.rel (0) target = $region13
    $region12: #{model_forward.1} parent=1 // pred_region
      %s23 = ssub.s32 7168, 7168
      %24 = vsyncadd [#allocation8], %s23
      %s25 = sshll.u32 [#allocation7], 4
      %s26 = int_to_ptr.vmem [resolvable:$true] %s25
      %31 = dma.hbm_to_vmem [thread:$0]  %s2, 7168, %s26, [#allocation8], 256, 256, 16
    $region13: #{model_forward.1} parent=1 // pred_fallthru
      _
    // Predicated region
    $region14: #{model_forward.1} parent=1 // pred_check
      _
    $region15: #{model_forward.1} parent=1 // pred_check_branch
      %33 = sbr.rel (0) target = $region17
    $region16: #{model_forward.1} parent=1 // pred_region
      %s35 = ssub.s32 4096, 4096
      %36 = vsyncadd [#allocation10], %s35
      %s37 = sshll.u32 [#allocation9], 4
      %s38 = int_to_ptr.vmem [resolvable:$true] %s37
      %43 = dma.hbm_to_vmem [thread:$0]  %s3, 4096, %s38, [#allocation10], 256, 256, 16
    $region17: #{model_forward.1} parent=1 // pred_fallthru
      _
    // Predicated region
    $region18: #{model_forward.1} parent=1 // pred_check
      _
    $region19: #{model_forward.1} parent=1 // pred_check_branch
      %45 = sbr.rel (0) target = $region21
    $region20: #{model_forward.1} parent=1 // pred_region
      _
    $region21: #{model_forward.1} parent=1 // pred_fallthru
      _
    // Predicated region
    $region22: #{model_forward.1} parent=1 // pred_check
      _
    $region23: #{model_forward.1} parent=1 // pred_check_branch
      %47 = sbr.rel (0) target = $region25
    $region24: #{model_forward.1} parent=1 // pred_region
      %48 = dma.done [#allocation8], 7168
    $region25: #{model_forward.1} parent=1 // pred_fallthru
      _
    // Predicated region
    $region26: #{model_forward.1} parent=1 // pred_check
      _
    $region27: #{model_forward.1} parent=1 // pred_check_branch
      %50 = sbr.rel (0) target = $region29
    $region28: #{model_forward.1} parent=1 // pred_region
      %51 = dma.done [#allocation10], 4096
    $region29: #{model_forward.1} parent=1 // pred_fallthru
      _
    // Predicated region
    $region30: #{model_forward.1} parent=1 // pred_check
      _
    $region31: #{model_forward.1} parent=1 // pred_check_branch
      %54 = sbr.rel target = $region33
    $region32: #{model_forward.1} parent=1 // pred_region
      %55 = sst [smem:[#allocation13]] [#allocation12]
      %56 = sst [smem:[#allocation14]] [#allocation11]
    $region33: #{model_forward.1} parent=1 // pred_fallthru
      _
    %58 = shalt.err (0)
    %s60 = sshll.u32 [#allocation2], 4
    %s61 = int_to_ptr.vmem [resolvable:$true] %s60
    %63 = dma.hbm_to_vmem [thread:$0]  %s5, 4096, %s61, [#allocation6]
    %s64 = scalar_lea.sflag [#allocation6], 1
    // Predicated region
    $region34: #{model_forward.1} parent=1 // pred_check
      _
    $region35: #{model_forward.1} parent=1 // pred_check_branch
      %66 = sbr.rel target = $region37
    $region36: #{model_forward.1} parent=1 // pred_region
      %67 = sst [smem:[#allocation13]] [#allocation16]
      %68 = sst [smem:[#allocation14]] [#allocation15]
    $region37: #{model_forward.1} parent=1 // pred_fallthru
      _
    %70 = shalt.err (0)
    %s72 = sshll.u32 [#allocation3], 4
    %s73 = int_to_ptr.vmem [resolvable:$true] %s72
    %75 = dma.hbm_to_vmem [thread:$0]  %s6, 12288, %s73, %s64
    %s76 = scalar_lea.sflag [#allocation6], 2
    // Predicated region
    $region38: #{model_forward.1} parent=1 // pred_check
      _
    $region39: #{model_forward.1} parent=1 // pred_check_branch
      %78 = sbr.rel target = $region41
    $region40: #{model_forward.1} parent=1 // pred_region
      %79 = sst [smem:[#allocation13]] [#allocation18]
      %80 = sst [smem:[#allocation14]] [#allocation17]
    $region41: #{model_forward.1} parent=1 // pred_fallthru
      _
    %82 = shalt.err (0)
    %s84 = sshll.u32 [#allocation4], 4
    %s85 = int_to_ptr.vmem [resolvable:$true] %s84
    %87 = dma.hbm_to_vmem [thread:$0]  %s7, 16384, %s85, %s76
    %s88 = scalar_lea.sflag [#allocation6], 3
    // Predicated region
    $region42: #{model_forward.1} parent=1 // pred_check
      _
    $region43: #{model_forward.1} parent=1 // pred_check_branch
      %90 = sbr.rel target = $region45
    $region44: #{model_forward.1} parent=1 // pred_region
      %91 = sst [smem:[#allocation13]] [#allocation20]
      %92 = sst [smem:[#allocation14]] [#allocation19]
    $region45: #{model_forward.1} parent=1 // pred_fallthru
      _
    %94 = shalt.err (0)
    %s96 = sshll.u32 [#allocation5], 4
    %s97 = int_to_ptr.vmem [resolvable:$true] %s96
    %99 = dma.hbm_to_vmem [thread:$0]  %s8, 8192, %s97, %s88
    %v100 = vld [vmem:[#allocation7] sm:$0xff]
    %v101 = vld [vmem:[#allocation7 + $0x8] sm:$0xff]
    %v102 = vld [vmem:[#allocation7 + $0x10] sm:$0xff]
    %v103 = vld [vmem:[#allocation7 + $0x18] sm:$0xff]
    %v104 = vld [vmem:[#allocation7 + $0x20] sm:$0xff]
    %v105 = vld [vmem:[#allocation7 + $0x28] sm:$0xff]
    %v106 = vld [vmem:[#allocation7 + $0x30] sm:$0xff]
    %v107 = vld [vmem:[#allocation7 + $0x38] sm:$0xff]
    %v108 = vld [vmem:[#allocation7 + $0x40] sm:$0xff]
    %v109 = vld [vmem:[#allocation7 + $0x48] sm:$0xff]
    %v110 = vld [vmem:[#allocation7 + $0x50] sm:$0xff]
    %v111 = vld [vmem:[#allocation7 + $0x58] sm:$0xff]
    %v112 = vld [vmem:[#allocation7 + $0x60] sm:$0xff]
    %v113 = vld [vmem:[#allocation7 + $0x68] sm:$0xff]
    %v114 = vld [vmem:[#allocation7 + $0x70] sm:$0xff]
    %v115 = vld [vmem:[#allocation7 + $0x78] sm:$0xff]
    %v116 = vld [vmem:[#allocation7 + $0x80] sm:$0xff]
    %v117 = vld [vmem:[#allocation7 + $0x88] sm:$0xff]
    %v118 = vld [vmem:[#allocation7 + $0x90] sm:$0xff]
    %v119 = vld [vmem:[#allocation7 + $0x98] sm:$0xff]
    %v120 = vld [vmem:[#allocation7 + $0xa0] sm:$0xff]
    %v121 = vld [vmem:[#allocation7 + $0xa8] sm:$0xff]
    %v122 = vld [vmem:[#allocation7 + $0xb0] sm:$0xff]
    %v123 = vld [vmem:[#allocation7 + $0xb8] sm:$0xff]
    %v124 = vld [vmem:[#allocation7 + $0xc0] sm:$0xff]
    %v125 = vld [vmem:[#allocation7 + $0xc8] sm:$0xff]
    %v126 = vld [vmem:[#allocation7 + $0xd0] sm:$0xff]
    %v127 = vld [vmem:[#allocation7 + $0xd8] sm:$0xff]
    %v128 = vld [vmem:[#allocation7 + $0xe0] sm:$0xff]
    %v129 = vld [vmem:[#allocation7 + $0xe8] sm:$0xff]
    %v130 = vld [vmem:[#allocation7 + $0xf0] sm:$0xff]
    %v131 = vld [vmem:[#allocation7 + $0xf8] sm:$0xff]
    %v132 = vld [vmem:[#allocation7 + $0x100] sm:$0xff]
    %v133 = vld [vmem:[#allocation7 + $0x108] sm:$0xff]
    %v134 = vld [vmem:[#allocation7 + $0x110] sm:$0xff]
    %v135 = vld [vmem:[#allocation7 + $0x118] sm:$0xff]
    %v136 = vld [vmem:[#allocation7 + $0x120] sm:$0xff]
    %v137 = vld [vmem:[#allocation7 + $0x128] sm:$0xff]
    %v138 = vld [vmem:[#allocation7 + $0x130] sm:$0xff]
    %v139 = vld [vmem:[#allocation7 + $0x138] sm:$0xff]
    %v140 = vld [vmem:[#allocation7 + $0x140] sm:$0xff]
    %v141 = vld [vmem:[#allocation7 + $0x148] sm:$0xff]
    %v142 = vld [vmem:[#allocation7 + $0x150] sm:$0xff]
    %v143 = vld [vmem:[#allocation7 + $0x158] sm:$0xff]
    %v144 = vld [vmem:[#allocation7 + $0x160] sm:$0xff]
    %v145 = vld [vmem:[#allocation7 + $0x168] sm:$0xff]
    %v146 = vld [vmem:[#allocation7 + $0x170] sm:$0xff]
    %v147 = vld [vmem:[#allocation7 + $0x178] sm:$0xff]
    %v148 = vld [vmem:[#allocation7 + $0x180] sm:$0xff]
    %v149 = vld [vmem:[#allocation7 + $0x188] sm:$0xff]
    %v150 = vld [vmem:[#allocation7 + $0x190] sm:$0xff]
    %v151 = vld [vmem:[#allocation7 + $0x198] sm:$0xff]
    %v152 = vld [vmem:[#allocation7 + $0x1a0] sm:$0xff]
    %v153 = vld [vmem:[#allocation7 + $0x1a8] sm:$0xff]
    %v154 = vld [vmem:[#allocation7 + $0x1b0] sm:$0xff]
    %v155 = vld [vmem:[#allocation7 + $0x1b8] sm:$0xff]
    %v156 = vld [vmem:[#allocation9] sm:$0xff]
    %v157 = vld [vmem:[#allocation9 + $0x8] sm:$0xff]
    %v158 = vld [vmem:[#allocation9 + $0x10] sm:$0xff]
    %v159 = vld [vmem:[#allocation9 + $0x18] sm:$0xff]
    %v160 = vld [vmem:[#allocation9 + $0x20] sm:$0xff]
    %v161 = vld [vmem:[#allocation9 + $0x28] sm:$0xff]
    %v162 = vld [vmem:[#allocation9 + $0x30] sm:$0xff]
    %v163 = vld [vmem:[#allocation9 + $0x38] sm:$0xff]
    %v164 = vld [vmem:[#allocation9 + $0x40] sm:$0xff]
    %v165 = vld [vmem:[#allocation9 + $0x48] sm:$0xff]
    %v166 = vld [vmem:[#allocation9 + $0x50] sm:$0xff]
    %v167 = vld [vmem:[#allocation9 + $0x58] sm:$0xff]
    %v168 = vld [vmem:[#allocation9 + $0x60] sm:$0xff]
    %v169 = vld [vmem:[#allocation9 + $0x68] sm:$0xff]
    %v170 = vld [vmem:[#allocation9 + $0x70] sm:$0xff]
    %v171 = vld [vmem:[#allocation9 + $0x78] sm:$0xff]
    %v172 = vld [vmem:[#allocation9 + $0x80] sm:$0xff]
    %v173 = vld [vmem:[#allocation9 + $0x88] sm:$0xff]
    %v174 = vld [vmem:[#allocation9 + $0x90] sm:$0xff]
    %v175 = vld [vmem:[#allocation9 + $0x98] sm:$0xff]
    %v176 = vld [vmem:[#allocation9 + $0xa0] sm:$0xff]
    %v177 = vld [vmem:[#allocation9 + $0xa8] sm:$0xff]
    %v178 = vld [vmem:[#allocation9 + $0xb0] sm:$0xff]
    %v179 = vld [vmem:[#allocation9 + $0xb8] sm:$0xff]
    %v180 = vld [vmem:[#allocation9 + $0xc0] sm:$0xff]
    %v181 = vld [vmem:[#allocation9 + $0xc8] sm:$0xff]
    %v182 = vld [vmem:[#allocation9 + $0xd0] sm:$0xff]
    %v183 = vld [vmem:[#allocation9 + $0xd8] sm:$0xff]
    %v184 = vld [vmem:[#allocation9 + $0xe0] sm:$0xff]
    %v185 = vld [vmem:[#allocation9 + $0xe8] sm:$0xff]
    %v186 = vld [vmem:[#allocation9 + $0xf0] sm:$0xff]
    %v187 = vld [vmem:[#allocation9 + $0xf8] sm:$0xff]
    %v188 = vld [vmem:[%s4] ss:$8 sm:$0xf]
    %v189 = vld [vmem:[%s0] sm:$0xff]
    %v190 = vld [vmem:[%s0 + $0x8] sm:$0xff]
    %v191 = vld [vmem:[%s0 + $0x10] sm:$0xff]
    %v192 = vld [vmem:[%s0 + $0x18] sm:$0xff]
    %v193 = vld [vmem:[%s0 + $0x20] sm:$0xff]
    %v194 = vld [vmem:[%s0 + $0x28] sm:$0xff]
    %v195 = vld [vmem:[%s0 + $0x30] sm:$0xff]
    %v196 = vld [vmem:[%s0 + $0x38] sm:$0xff]
    %v197 = vld [vmem:[%s0 + $0x40] sm:$0xff]
    %v198 = vld [vmem:[%s0 + $0x48] sm:$0xff]
    %v199 = vld [vmem:[%s0 + $0x50] sm:$0xff]
    %v200 = vld [vmem:[%s0 + $0x58] sm:$0xff]
    %v201 = vld [vmem:[%s0 + $0x60] sm:$0xff]
    %v202 = vld [vmem:[%s0 + $0x68] sm:$0xff]
    %v203 = vld [vmem:[%s0 + $0x70] sm:$0xff]
    %v204 = vld [vmem:[%s0 + $0x78] sm:$0xff]
    %v205 = vpack.c.bf16 %v191, %v189
    %v206 = vpack.c.bf16 %v192, %v190
    %v207 = vpack.c.bf16 %v195, %v193
    %v208 = vpack.c.bf16 %v196, %v194
    %v209 = vpack.c.bf16 %v199, %v197
    %v210 = vpack.c.bf16 %v200, %v198
    %v211 = vpack.c.bf16 %v203, %v201
    %v212 = vpack.c.bf16 %v204, %v202
    %v214 = vlaneseq
    %v215 = vshrl.u32 %v214, 7
    %v216 = vsub.s32 0, %v215
    %v217 = vrot.slane %v188, %v216
    %v218 = vlaneseq
    %v219 = vshrl.u32 %v218, 7
    %v220 = vsub.s32 1, %v219
    %v221 = vrot.slane %v188, %v220
    %v222 = vlaneseq
    %v223 = vshrl.u32 %v222, 7
    %v224 = vsub.s32 2, %v223
    %v225 = vrot.slane %v188, %v224
    %v226 = vlaneseq
    %v227 = vshrl.u32 %v226, 7
    %v228 = vsub.s32 3, %v227
    %v229 = vrot.slane %v188, %v228
    %v290 = vunpack.c.l.b16 %v100
    %v291 = vunpack.c.h.b16 %v100
    %v292 = vunpack.c.l.b16 %v101
    %v293 = vunpack.c.h.b16 %v101
    %v294 = vunpack.c.l.b16 %v102
    %v295 = vunpack.c.h.b16 %v102
    %v296 = vunpack.c.l.b16 %v103
    %v297 = vunpack.c.h.b16 %v103
    %v298 = vunpack.c.l.b16 %v104
    %v299 = vunpack.c.h.b16 %v104
    %v300 = vunpack.c.l.b16 %v105
    %v301 = vunpack.c.h.b16 %v105
    %v302 = vunpack.c.l.b16 %v106
    %v303 = vunpack.c.h.b16 %v106
    %v304 = vunpack.c.l.b16 %v107
    %v305 = vunpack.c.h.b16 %v107
    %v306 = vunpack.c.l.b16 %v108
    %v307 = vunpack.c.h.b16 %v108
    %v308 = vunpack.c.l.b16 %v109
    %v309 = vunpack.c.h.b16 %v109
    %v310 = vunpack.c.l.b16 %v110
    %v311 = vunpack.c.h.b16 %v110
    %v312 = vunpack.c.l.b16 %v111
    %v313 = vunpack.c.h.b16 %v111
    %v314 = vunpack.c.l.b16 %v112
    %v315 = vunpack.c.h.b16 %v112
    %v316 = vunpack.c.l.b16 %v113
    %v317 = vunpack.c.h.b16 %v113
    %v318 = vunpack.c.l.b16 %v114
    %v319 = vunpack.c.h.b16 %v114
    %v320 = vunpack.c.l.b16 %v115
    %v321 = vunpack.c.h.b16 %v115
    %v322 = vunpack.c.l.b16 %v116
    %v323 = vunpack.c.h.b16 %v116
    %v324 = vunpack.c.l.b16 %v117
    %v325 = vunpack.c.h.b16 %v117
    %v326 = vunpack.c.l.b16 %v118
    %v327 = vunpack.c.h.b16 %v118
    %v328 = vunpack.c.l.b16 %v119
    %v329 = vunpack.c.h.b16 %v119
    %v330 = vunpack.c.l.b16 %v120
    %v331 = vunpack.c.h.b16 %v120
    %v332 = vunpack.c.l.b16 %v121
    %v333 = vunpack.c.h.b16 %v121
    %v334 = vunpack.c.l.b16 %v122
    %v335 = vunpack.c.h.b16 %v122
    %v336 = vunpack.c.l.b16 %v123
    %v337 = vunpack.c.h.b16 %v123
    %v338 = vunpack.c.l.b16 %v124
    %v339 = vunpack.c.h.b16 %v124
    %v340 = vunpack.c.l.b16 %v125
    %v341 = vunpack.c.h.b16 %v125
    %v342 = vunpack.c.l.b16 %v126
    %v343 = vunpack.c.h.b16 %v126
    %v344 = vunpack.c.l.b16 %v127
    %v345 = vunpack.c.h.b16 %v127
    %v346 = vunpack.c.l.b16 %v128
    %v347 = vunpack.c.h.b16 %v128
    %v348 = vunpack.c.l.b16 %v129
    %v349 = vunpack.c.h.b16 %v129
    %v350 = vunpack.c.l.b16 %v130
    %v351 = vunpack.c.h.b16 %v130
    %v352 = vunpack.c.l.b16 %v131
    %v353 = vunpack.c.h.b16 %v131
    %v354 = vunpack.c.l.b16 %v132
    %v355 = vunpack.c.h.b16 %v132
    %v356 = vunpack.c.l.b16 %v133
    %v357 = vunpack.c.h.b16 %v133
    %v358 = vunpack.c.l.b16 %v134
    %v359 = vunpack.c.h.b16 %v134
    %v360 = vunpack.c.l.b16 %v135
    %v361 = vunpack.c.h.b16 %v135
    %v362 = vunpack.c.l.b16 %v136
    %v363 = vunpack.c.h.b16 %v136
    %v364 = vunpack.c.l.b16 %v137
    %v365 = vunpack.c.h.b16 %v137
    %v366 = vunpack.c.l.b16 %v138
    %v367 = vunpack.c.h.b16 %v138
    %v368 = vunpack.c.l.b16 %v139
    %v369 = vunpack.c.h.b16 %v139
    %v370 = vunpack.c.l.b16 %v140
    %v371 = vunpack.c.h.b16 %v140
    %v372 = vunpack.c.l.b16 %v141
    %v373 = vunpack.c.h.b16 %v141
    %v374 = vunpack.c.l.b16 %v142
    %v375 = vunpack.c.h.b16 %v142
    %v376 = vunpack.c.l.b16 %v143
    %v377 = vunpack.c.h.b16 %v143
    %v378 = vunpack.c.l.b16 %v144
    %v379 = vunpack.c.h.b16 %v144
    %v380 = vunpack.c.l.b16 %v145
    %v381 = vunpack.c.h.b16 %v145
    %v382 = vunpack.c.l.b16 %v146
    %v383 = vunpack.c.h.b16 %v146
    %v384 = vunpack.c.l.b16 %v147
    %v385 = vunpack.c.h.b16 %v147
    %v386 = vunpack.c.l.b16 %v148
    %v387 = vunpack.c.h.b16 %v148
    %v388 = vunpack.c.l.b16 %v149
    %v389 = vunpack.c.h.b16 %v149
    %v390 = vunpack.c.l.b16 %v150
    %v391 = vunpack.c.h.b16 %v150
    %v392 = vunpack.c.l.b16 %v151
    %v393 = vunpack.c.h.b16 %v151
    %v394 = vunpack.c.l.b16 %v152
    %v395 = vunpack.c.h.b16 %v152
    %v396 = vunpack.c.l.b16 %v153
    %v397 = vunpack.c.h.b16 %v153
    %v398 = vunpack.c.l.b16 %v154
    %v399 = vunpack.c.h.b16 %v154
    %v400 = vunpack.c.l.b16 %v155
    %v401 = vunpack.c.h.b16 %v155
    %v402 = vpack.c.b16 %v294, %v290
    %v403 = vpack.c.b16 %v295, %v291
    %v404 = vpack.c.b16 %v296, %v292
    %v405 = vpack.c.b16 %v297, %v293
    %v406 = vpack.c.b16 %v302, %v298
    %v407 = vpack.c.b16 %v303, %v299
    %v408 = vpack.c.b16 %v304, %v300
    %v409 = vpack.c.b16 %v305, %v301
    %v410 = vpack.c.b16 %v310, %v306
    %v411 = vpack.c.b16 %v311, %v307
    %v412 = vpack.c.b16 %v312, %v308
    %v413 = vpack.c.b16 %v313, %v309
    %v414 = vpack.c.b16 %v318, %v314
    %v415 = vpack.c.b16 %v319, %v315
    %v416 = vpack.c.b16 %v320, %v316
    %v417 = vpack.c.b16 %v321, %v317
    %v418 = vpack.c.b16 %v326, %v322
    %v419 = vpack.c.b16 %v327, %v323
    %v420 = vpack.c.b16 %v328, %v324
    %v421 = vpack.c.b16 %v329, %v325
    %v422 = vpack.c.b16 %v334, %v330
    %v423 = vpack.c.b16 %v335, %v331
    %v424 = vpack.c.b16 %v336, %v332
    %v425 = vpack.c.b16 %v337, %v333
    %v426 = vpack.c.b16 %v342, %v338
    %v427 = vpack.c.b16 %v343, %v339
    %v428 = vpack.c.b16 %v344, %v340
    %v429 = vpack.c.b16 %v345, %v341
    %v430 = vpack.c.b16 %v350, %v346
    %v431 = vpack.c.b16 %v351, %v347
    %v432 = vpack.c.b16 %v352, %v348
    %v433 = vpack.c.b16 %v353, %v349
    %v434 = vpack.c.b16 %v358, %v354
    %v435 = vpack.c.b16 %v359, %v355
    %v436 = vpack.c.b16 %v360, %v356
    %v437 = vpack.c.b16 %v361, %v357
    %v438 = vpack.c.b16 %v366, %v362
    %v439 = vpack.c.b16 %v367, %v363
    %v440 = vpack.c.b16 %v368, %v364
    %v441 = vpack.c.b16 %v369, %v365
    %v442 = vpack.c.b16 %v374, %v370
    %v443 = vpack.c.b16 %v375, %v371
    %v444 = vpack.c.b16 %v376, %v372
    %v445 = vpack.c.b16 %v377, %v373
    %v446 = vpack.c.b16 %v382, %v378
    %v447 = vpack.c.b16 %v383, %v379
    %v448 = vpack.c.b16 %v384, %v380
    %v449 = vpack.c.b16 %v385, %v381
    %v450 = vpack.c.b16 %v390, %v386
    %v451 = vpack.c.b16 %v391, %v387
    %v452 = vpack.c.b16 %v392, %v388
    %v453 = vpack.c.b16 %v393, %v389
    %v454 = vpack.c.b16 %v398, %v394
    %v455 = vpack.c.b16 %v399, %v395
    %v456 = vpack.c.b16 %v400, %v396
    %v457 = vpack.c.b16 %v401, %v397
    %vm514 = vcmask 785408
    %v516 = vsel %vm514, %v206, 0
    %v519 = vsel %vm514, %v208, 0
    %v522 = vsel %vm514, %v210, 0
    %v525 = vsel %vm514, %v212, 0
    %527 = vmatprep.subr.bf16.mxu0 %v431
    %528 = vmatpush1.bf16.msra.mxu0 %v430
    %529 = vmatprep.subr.bf16.mxu0 %v427
    %530 = vmatpush1.bf16.msra.mxu0 %v426
    %531 = vmatprep.subr.bf16.mxu0 %v423
    %532 = vmatpush1.bf16.msra.mxu0 %v422
    %533 = vmatprep.subr.bf16.mxu0 %v419
    %534 = vmatpush1.bf16.msra.mxu0 %v418
    %535 = vmatprep.subr.bf16.mxu0 %v415
    %536 = vmatpush1.bf16.msra.mxu0 %v414
    %537 = vmatprep.subr.bf16.mxu0 %v411
    %538 = vmatpush1.bf16.msra.mxu0 %v410
    %539 = vmatprep.subr.bf16.mxu0 %v407
    %540 = vmatpush1.bf16.msra.mxu0 %v406
    %541 = vmatprep.subr.bf16.mxu0 %v403
    %542 = vmatpush1.bf16.msra.mxu0 %v402
    %543 = vmatprep.subr.bf16.mxu0 0
    %544 = vmatpush2.bf16.msra.mxu0 0
    %545 = vmatprep.subr.bf16.mxu0 0
    %546 = vmatpush2.bf16.msra.mxu0 0
    %547 = vmatprep.subr.bf16.mxu0 %v455
    %548 = vmatpush2.bf16.msra.mxu0 %v454
    %549 = vmatprep.subr.bf16.mxu0 %v451
    %550 = vmatpush2.bf16.msra.mxu0 %v450
    %551 = vmatprep.subr.bf16.mxu0 %v447
    %552 = vmatpush2.bf16.msra.mxu0 %v446
    %553 = vmatprep.subr.bf16.mxu0 %v443
    %554 = vmatpush2.bf16.msra.mxu0 %v442
    %555 = vmatprep.subr.bf16.mxu0 %v439
    %556 = vmatpush2.bf16.msra.mxu0 %v438
    %557 = vmatprep.subr.bf16.mxu0 %v435
    %558 = vmatpush2.bf16.msra.mxu0 %v434
    %559 = vmatprep.mubr.bf16.mxu0 %v516
    %560 = vmatmul.mubr.bf16.gmra.mxu0 %v205
    %v561 = vpop.f32.mrf.mxu0
    %v562 = vadd.f32 %v217, %v561
    %v563 = vpop.f32.mrf.mxu0
    %v564 = vadd.f32 %v221, %v563
    %v565 = vpop.f32.mrf.mxu0
    %v566 = vadd.f32 %v217, %v565
    %v567 = vpop.f32.mrf.mxu0
    %v568 = vadd.f32 %v221, %v567
    %569 = vmatprep.mubr.bf16.mxu0 %v519
    %570 = vmatmul.mubr.bf16.gmra.mxu0 %v207
    %v571 = vpop.f32.mrf.mxu0
    %v572 = vadd.f32 %v217, %v571
    %v573 = vpop.f32.mrf.mxu0
    %v574 = vadd.f32 %v221, %v573
    %v575 = vpop.f32.mrf.mxu0
    %v576 = vadd.f32 %v217, %v575
    %v577 = vpop.f32.mrf.mxu0
    %v578 = vadd.f32 %v221, %v577
    %579 = vmatprep.mubr.bf16.mxu0 %v522
    %580 = vmatmul.mubr.bf16.gmra.mxu0 %v209
    %v581 = vpop.f32.mrf.mxu0
    %v582 = vadd.f32 %v217, %v581
    %v583 = vpop.f32.mrf.mxu0
    %v584 = vadd.f32 %v221, %v583
    %v585 = vpop.f32.mrf.mxu0
    %v586 = vadd.f32 %v217, %v585
    %v587 = vpop.f32.mrf.mxu0
    %v588 = vadd.f32 %v221, %v587
    %589 = vmatprep.mubr.bf16.mxu0 %v525
    %590 = vmatmul.mubr.bf16.gmra.mxu0 %v211
    %v591 = vpop.f32.mrf.mxu0
    %v592 = vadd.f32 %v217, %v591
    %v593 = vpop.f32.mrf.mxu0
    %v594 = vadd.f32 %v221, %v593
    %v595 = vpop.f32.mrf.mxu0
    %v596 = vadd.f32 %v217, %v595
    %v597 = vpop.f32.mrf.mxu0
    %v598 = vadd.f32 %v221, %v597
    %599 = vdwg.mxu0
    %600 = vmatprep.subr.bf16.mxu0 %v433
    %601 = vmatpush1.bf16.msra.mxu0 %v432
    %602 = vmatprep.subr.bf16.mxu0 %v429
    %603 = vmatpush1.bf16.msra.mxu0 %v428
    %604 = vmatprep.subr.bf16.mxu0 %v425
    %605 = vmatpush1.bf16.msra.mxu0 %v424
    %606 = vmatprep.subr.bf16.mxu0 %v421
    %607 = vmatpush1.bf16.msra.mxu0 %v420
    %608 = vmatprep.subr.bf16.mxu0 %v417
    %609 = vmatpush1.bf16.msra.mxu0 %v416
    %610 = vmatprep.subr.bf16.mxu0 %v413
    %611 = vmatpush1.bf16.msra.mxu0 %v412
    %612 = vmatprep.subr.bf16.mxu0 %v409
    %613 = vmatpush1.bf16.msra.mxu0 %v408
    %614 = vmatprep.subr.bf16.mxu0 %v405
    %615 = vmatpush1.bf16.msra.mxu0 %v404
    %616 = vmatprep.subr.bf16.mxu0 0
    %617 = vmatpush2.bf16.msra.mxu0 0
    %618 = vmatprep.subr.bf16.mxu0 0
    %619 = vmatpush2.bf16.msra.mxu0 0
    %620 = vmatprep.subr.bf16.mxu0 %v457
    %621 = vmatpush2.bf16.msra.mxu0 %v456
    %622 = vmatprep.subr.bf16.mxu0 %v453
    %623 = vmatpush2.bf16.msra.mxu0 %v452
    %624 = vmatprep.subr.bf16.mxu0 %v449
    %625 = vmatpush2.bf16.msra.mxu0 %v448
    %626 = vmatprep.subr.bf16.mxu0 %v445
    %627 = vmatpush2.bf16.msra.mxu0 %v444
    %628 = vmatprep.subr.bf16.mxu0 %v441
    %629 = vmatpush2.bf16.msra.mxu0 %v440
    %630 = vmatprep.subr.bf16.mxu0 %v437
    %631 = vmatpush2.bf16.msra.mxu0 %v436
    %632 = vmatprep.mubr.bf16.mxu0 %v516
    %633 = vmatmul.mubr.bf16.gmra.mxu0 %v205
    %v634 = vpop.f32.mrf.mxu0
    %v635 = vadd.f32 %v225, %v634
    %v636 = vpop.f32.mrf.mxu0
    %v637 = vadd.f32 %v229, %v636
    %v638 = vpop.f32.mrf.mxu0
    %v639 = vadd.f32 %v225, %v638
    %v640 = vpop.f32.mrf.mxu0
    %v641 = vadd.f32 %v229, %v640
    %642 = vmatprep.mubr.bf16.mxu0 %v519
    %643 = vmatmul.mubr.bf16.gmra.mxu0 %v207
    %v644 = vpop.f32.mrf.mxu0
    %v645 = vadd.f32 %v225, %v644
    %v646 = vpop.f32.mrf.mxu0
    %v647 = vadd.f32 %v229, %v646
    %v648 = vpop.f32.mrf.mxu0
    %v649 = vadd.f32 %v225, %v648
    %v650 = vpop.f32.mrf.mxu0
    %v651 = vadd.f32 %v229, %v650
    %652 = vmatprep.mubr.bf16.mxu0 %v522
    %653 = vmatmul.mubr.bf16.gmra.mxu0 %v209
    %v654 = vpop.f32.mrf.mxu0
    %v655 = vadd.f32 %v225, %v654
    %v656 = vpop.f32.mrf.mxu0
    %v657 = vadd.f32 %v229, %v656
    %v658 = vpop.f32.mrf.mxu0
    %v659 = vadd.f32 %v225, %v658
    %v660 = vpop.f32.mrf.mxu0
    %v661 = vadd.f32 %v229, %v660
    %662 = vmatprep.mubr.bf16.mxu0 %v525
    %663 = vmatmul.mubr.bf16.gmra.mxu0 %v211
    %v664 = vpop.f32.mrf.mxu0
    %v665 = vadd.f32 %v225, %v664
    %v666 = vpop.f32.mrf.mxu0
    %v667 = vadd.f32 %v229, %v666
    %v668 = vpop.f32.mrf.mxu0
    %v669 = vadd.f32 %v225, %v668
    %v670 = vpop.f32.mrf.mxu0
    %v671 = vadd.f32 %v229, %v670
    %672 = vdwg.mxu0
    %v705 = vunpack.c.l.b16 %v156
    %v706 = vunpack.c.h.b16 %v156
    %v707 = vunpack.c.l.b16 %v157
    %v708 = vunpack.c.h.b16 %v157
    %v709 = vunpack.c.l.b16 %v158
    %v710 = vunpack.c.h.b16 %v158
    %v711 = vunpack.c.l.b16 %v159
    %v712 = vunpack.c.h.b16 %v159
    %v713 = vunpack.c.l.b16 %v160
    %v714 = vunpack.c.h.b16 %v160
    %v715 = vunpack.c.l.b16 %v161
    %v716 = vunpack.c.h.b16 %v161
    %v717 = vunpack.c.l.b16 %v162
    %v718 = vunpack.c.h.b16 %v162
    %v719 = vunpack.c.l.b16 %v163
    %v720 = vunpack.c.h.b16 %v163
    %v721 = vunpack.c.l.b16 %v164
    %v722 = vunpack.c.h.b16 %v164
    %v723 = vunpack.c.l.b16 %v165
    %v724 = vunpack.c.h.b16 %v165
    %v725 = vunpack.c.l.b16 %v166
    %v726 = vunpack.c.h.b16 %v166
    %v727 = vunpack.c.l.b16 %v167
    %v728 = vunpack.c.h.b16 %v167
    %v729 = vunpack.c.l.b16 %v168
    %v730 = vunpack.c.h.b16 %v168
    %v731 = vunpack.c.l.b16 %v169
    %v732 = vunpack.c.h.b16 %v169
    %v733 = vunpack.c.l.b16 %v170
    %v734 = vunpack.c.h.b16 %v170
    %v735 = vunpack.c.l.b16 %v171
    %v736 = vunpack.c.h.b16 %v171
    %v737 = vunpack.c.l.b16 %v172
    %v738 = vunpack.c.h.b16 %v172
    %v739 = vunpack.c.l.b16 %v173
    %v740 = vunpack.c.h.b16 %v173
    %v741 = vunpack.c.l.b16 %v174
    %v742 = vunpack.c.h.b16 %v174
    %v743 = vunpack.c.l.b16 %v175
    %v744 = vunpack.c.h.b16 %v175
    %v745 = vunpack.c.l.b16 %v176
    %v746 = vunpack.c.h.b16 %v176
    %v747 = vunpack.c.l.b16 %v177
    %v748 = vunpack.c.h.b16 %v177
    %v749 = vunpack.c.l.b16 %v178
    %v750 = vunpack.c.h.b16 %v178
    %v751 = vunpack.c.l.b16 %v179
    %v752 = vunpack.c.h.b16 %v179
    %v753 = vunpack.c.l.b16 %v180
    %v754 = vunpack.c.h.b16 %v180
    %v755 = vunpack.c.l.b16 %v181
    %v756 = vunpack.c.h.b16 %v181
    %v757 = vunpack.c.l.b16 %v182
    %v758 = vunpack.c.h.b16 %v182
    %v759 = vunpack.c.l.b16 %v183
    %v760 = vunpack.c.h.b16 %v183
    %v761 = vunpack.c.l.b16 %v184
    %v762 = vunpack.c.h.b16 %v184
    %v763 = vunpack.c.l.b16 %v185
    %v764 = vunpack.c.h.b16 %v185
    %v765 = vunpack.c.l.b16 %v186
    %v766 = vunpack.c.h.b16 %v186
    %v767 = vunpack.c.l.b16 %v187
    %v768 = vunpack.c.h.b16 %v187
    %v769 = vpack.c.b16 %v709, %v705
    %v770 = vpack.c.b16 %v710, %v706
    %v771 = vpack.c.b16 %v711, %v707
    %v772 = vpack.c.b16 %v712, %v708
    %v773 = vpack.c.b16 %v717, %v713
    %v774 = vpack.c.b16 %v718, %v714
    %v775 = vpack.c.b16 %v719, %v715
    %v776 = vpack.c.b16 %v720, %v716
    %v777 = vpack.c.b16 %v725, %v721
    %v778 = vpack.c.b16 %v726, %v722
    %v779 = vpack.c.b16 %v727, %v723
    %v780 = vpack.c.b16 %v728, %v724
    %v781 = vpack.c.b16 %v733, %v729
    %v782 = vpack.c.b16 %v734, %v730
    %v783 = vpack.c.b16 %v735, %v731
    %v784 = vpack.c.b16 %v736, %v732
    %v785 = vpack.c.b16 %v741, %v737
    %v786 = vpack.c.b16 %v742, %v738
    %v787 = vpack.c.b16 %v743, %v739
    %v788 = vpack.c.b16 %v744, %v740
    %v789 = vpack.c.b16 %v749, %v745
    %v790 = vpack.c.b16 %v750, %v746
    %v791 = vpack.c.b16 %v751, %v747
    %v792 = vpack.c.b16 %v752, %v748
    %v793 = vpack.c.b16 %v757, %v753
    %v794 = vpack.c.b16 %v758, %v754
    %v795 = vpack.c.b16 %v759, %v755
    %v796 = vpack.c.b16 %v760, %v756
    %v797 = vpack.c.b16 %v765, %v761
    %v798 = vpack.c.b16 %v766, %v762
    %v799 = vpack.c.b16 %v767, %v763
    %v800 = vpack.c.b16 %v768, %v764
    %833 = vmatprep.subr.bf16.mxu0 %v798
    %834 = vmatpush1.bf16.msra.mxu0 %v797
    %835 = vmatprep.subr.bf16.mxu0 %v794
    %836 = vmatpush1.bf16.msra.mxu0 %v793
    %837 = vmatprep.subr.bf16.mxu0 %v790
    %838 = vmatpush1.bf16.msra.mxu0 %v789
    %839 = vmatprep.subr.bf16.mxu0 %v786
    %840 = vmatpush1.bf16.msra.mxu0 %v785
    %841 = vmatprep.subr.bf16.mxu0 %v782
    %842 = vmatpush1.bf16.msra.mxu0 %v781
    %843 = vmatprep.subr.bf16.mxu0 %v778
    %844 = vmatpush1.bf16.msra.mxu0 %v777
    %845 = vmatprep.subr.bf16.mxu0 %v774
    %846 = vmatpush1.bf16.msra.mxu0 %v773
    %847 = vmatprep.subr.bf16.mxu0 %v770
    %848 = vmatpush1.bf16.msra.mxu0 %v769
    %849 = vmatprep.subr.bf16.mxu0 0
    %850 = vmatpush2.bf16.msra.mxu0 0
    %851 = vmatprep.subr.bf16.mxu0 0
    %852 = vmatpush2.bf16.msra.mxu0 0
    %853 = vmatprep.subr.bf16.mxu0 0
    %854 = vmatpush2.bf16.msra.mxu0 0
    %855 = vmatprep.subr.bf16.mxu0 0
    %856 = vmatpush2.bf16.msra.mxu0 0
    %857 = vmatprep.subr.bf16.mxu0 0
    %858 = vmatpush2.bf16.msra.mxu0 0
    %859 = vmatprep.subr.bf16.mxu0 0
    %860 = vmatpush2.bf16.msra.mxu0 0
    %861 = vmatprep.subr.bf16.mxu0 0
    %862 = vmatpush2.bf16.msra.mxu0 0
    %863 = vmatprep.subr.bf16.mxu0 0
    %864 = vmatpush2.bf16.msra.mxu0 0
    %865 = vmatprep.mubr.bf16.mxu0 0
    %866 = vmatmul.mubr.bf16.gmra.mxu0 0
    %v867 = vpop.f32.mrf.mxu0
    %v868 = vadd.f32 0.0, %v867
    %v869 = vpop.f32.mrf.mxu0
    %v870 = vadd.f32 0.0, %v869
    %v871 = vpop.f32.mrf.mxu0
    %v872 = vpop.f32.mrf.mxu0
    %873 = vdwg.mxu0
    %874 = vmatprep.subr.bf16.mxu0 %v800
    %875 = vmatpush1.bf16.msra.mxu0 %v799
    %876 = vmatprep.subr.bf16.mxu0 %v796
    %877 = vmatpush1.bf16.msra.mxu0 %v795
    %878 = vmatprep.subr.bf16.mxu0 %v792
    %879 = vmatpush1.bf16.msra.mxu0 %v791
    %880 = vmatprep.subr.bf16.mxu0 %v788
    %881 = vmatpush1.bf16.msra.mxu0 %v787
    %882 = vmatprep.subr.bf16.mxu0 %v784
    %883 = vmatpush1.bf16.msra.mxu0 %v783
    %884 = vmatprep.subr.bf16.mxu0 %v780
    %885 = vmatpush1.bf16.msra.mxu0 %v779
    %886 = vmatprep.subr.bf16.mxu0 %v776
    %887 = vmatpush1.bf16.msra.mxu0 %v775
    %888 = vmatprep.subr.bf16.mxu0 %v772
    %889 = vmatpush1.bf16.msra.mxu0 %v771
    %890 = vmatprep.subr.bf16.mxu0 0
    %891 = vmatpush2.bf16.msra.mxu0 0
    %892 = vmatprep.subr.bf16.mxu0 0
    %893 = vmatpush2.bf16.msra.mxu0 0
    %894 = vmatprep.subr.bf16.mxu0 0
    %895 = vmatpush2.bf16.msra.mxu0 0
    %896 = vmatprep.subr.bf16.mxu0 0
    %897 = vmatpush2.bf16.msra.mxu0 0
    %898 = vmatprep.subr.bf16.mxu0 0
    %899 = vmatpush2.bf16.msra.mxu0 0
    %900 = vmatprep.subr.bf16.mxu0 0
    %901 = vmatpush2.bf16.msra.mxu0 0
    %902 = vmatprep.subr.bf16.mxu0 0
    %903 = vmatpush2.bf16.msra.mxu0 0
    %904 = vmatprep.subr.bf16.mxu0 0
    %905 = vmatpush2.bf16.msra.mxu0 0
    %906 = vmatprep.mubr.bf16.mxu0 0
    %907 = vmatmul.mubr.bf16.gmra.mxu0 0
    %v908 = vpop.f32.mrf.mxu0
    %v909 = vadd.f32 0.0, %v908
    %v910 = vpop.f32.mrf.mxu0
    %v911 = vadd.f32 0.0, %v910
    %v912 = vpop.f32.mrf.mxu0
    %v913 = vpop.f32.mrf.mxu0
    %914 = vdwg.mxu0
    %v915 = vadd.f32 %v562, %v868
    %v916 = vadd.f32 %v564, %v870
    %v917 = vadd.f32 %v635, %v909
    %v918 = vadd.f32 %v637, %v911
    %v919 = vxor.u32 %v915, 2147483648
    %v920 = vxor.u32 %v916, 2147483648
    %v921 = vxor.u32 %v917, 2147483648
    %v922 = vmul.f32 %v919, 1.442695
    %v923 = vpow.pop %v922
    %v924 = vmul.f32 %v920, 1.442695
    %v925 = vpow.pop %v924
    %v926 = vmul.f32 %v921, 1.442695
    %v927 = vpow.pop %v926
    %v928 = vadd.f32 %v923, 1.0
    %v929 = vadd.f32 %v925, 1.0
    %v930 = vadd.f32 %v927, 1.0
    %v931 = vrcp.pop %v928
    %v932 = vmul.f32 1.0, %v931
    %v933 = vrcp.pop %v929
    %v934 = vmul.f32 1.0, %v933
    %v935 = vrcp.pop %v930
    %v936 = vmul.f32 1.0, %v935
    %v937 = vtanh.pop %v918
    %v938 = vmul.f32 %v934, 0.0
    %v939 = vmul.f32 %v932, %v937
    %v940 = vadd.f32 %v938, %v939
    %v941 = vtanh.pop %v940
    %v942 = vmul.f32 %v936, %v941
    %v943 = vpack.c.bf16 %v942, %v942
    %944 = vmatprep.subr.bf16.mxu0 %v798
    %945 = vmatpush1.bf16.msra.mxu0 %v797
    %946 = vmatprep.subr.bf16.mxu0 %v794
    %947 = vmatpush1.bf16.msra.mxu0 %v793
    %948 = vmatprep.subr.bf16.mxu0 %v790
    %949 = vmatpush1.bf16.msra.mxu0 %v789
    %950 = vmatprep.subr.bf16.mxu0 %v786
    %951 = vmatpush1.bf16.msra.mxu0 %v785
    %952 = vmatprep.subr.bf16.mxu0 %v782
    %953 = vmatpush1.bf16.msra.mxu0 %v781
    %954 = vmatprep.subr.bf16.mxu0 %v778
    %955 = vmatpush1.bf16.msra.mxu0 %v777
    %956 = vmatprep.subr.bf16.mxu0 %v774
    %957 = vmatpush1.bf16.msra.mxu0 %v773
    %958 = vmatprep.subr.bf16.mxu0 %v770
    %959 = vmatpush1.bf16.msra.mxu0 %v769
    %960 = vmatprep.subr.bf16.mxu0 0
    %961 = vmatpush2.bf16.msra.mxu0 0
    %962 = vmatprep.subr.bf16.mxu0 0
    %963 = vmatpush2.bf16.msra.mxu0 0
    %964 = vmatprep.subr.bf16.mxu0 0
    %965 = vmatpush2.bf16.msra.mxu0 0
    %966 = vmatprep.subr.bf16.mxu0 0
    %967 = vmatpush2.bf16.msra.mxu0 0
    %968 = vmatprep.subr.bf16.mxu0 0
    %969 = vmatpush2.bf16.msra.mxu0 0
    %970 = vmatprep.subr.bf16.mxu0 0
    %971 = vmatpush2.bf16.msra.mxu0 0
    %972 = vmatprep.subr.bf16.mxu0 0
    %973 = vmatpush2.bf16.msra.mxu0 0
    %974 = vmatprep.subr.bf16.mxu0 0
    %975 = vmatpush2.bf16.msra.mxu0 0
    %976 = vmatprep.mubr.bf16.mxu0 0
    %977 = vmatmul.mubr.bf16.gmra.mxu0 %v943
    %v978 = vpop.f32.mrf.mxu0
    %v979 = vadd.f32 0.0, %v978
    %v980 = vpop.f32.mrf.mxu0
    %v981 = vadd.f32 0.0, %v980
    %v982 = vpop.f32.mrf.mxu0
    %v983 = vpop.f32.mrf.mxu0
    %984 = vdwg.mxu0
    %985 = vmatprep.subr.bf16.mxu0 %v800
    %986 = vmatpush1.bf16.msra.mxu0 %v799
    %987 = vmatprep.subr.bf16.mxu0 %v796
    %988 = vmatpush1.bf16.msra.mxu0 %v795
    %989 = vmatprep.subr.bf16.mxu0 %v792
    %990 = vmatpush1.bf16.msra.mxu0 %v791
    %991 = vmatprep.subr.bf16.mxu0 %v788
    %992 = vmatpush1.bf16.msra.mxu0 %v787
    %993 = vmatprep.subr.bf16.mxu0 %v784
    %994 = vmatpush1.bf16.msra.mxu0 %v783
    %995 = vmatprep.subr.bf16.mxu0 %v780
    %996 = vmatpush1.bf16.msra.mxu0 %v779
    %997 = vmatprep.subr.bf16.mxu0 %v776
    %998 = vmatpush1.bf16.msra.mxu0 %v775
    %999 = vmatprep.subr.bf16.mxu0 %v772
    %1000 = vmatpush1.bf16.msra.mxu0 %v771
    %1001 = vmatprep.subr.bf16.mxu0 0
    %1002 = vmatpush2.bf16.msra.mxu0 0
    %1003 = vmatprep.subr.bf16.mxu0 0
    %1004 = vmatpush2.bf16.msra.mxu0 0
    %1005 = vmatprep.subr.bf16.mxu0 0
    %1006 = vmatpush2.bf16.msra.mxu0 0
    %1007 = vmatprep.subr.bf16.mxu0 0
    %1008 = vmatpush2.bf16.msra.mxu0 0
    %1009 = vmatprep.subr.bf16.mxu0 0
    %1010 = vmatpush2.bf16.msra.mxu0 0
    %1011 = vmatprep.subr.bf16.mxu0 0
    %1012 = vmatpush2.bf16.msra.mxu0 0
    %1013 = vmatprep.subr.bf16.mxu0 0
    %1014 = vmatpush2.bf16.msra.mxu0 0
    %1015 = vmatprep.subr.bf16.mxu0 0
    %1016 = vmatpush2.bf16.msra.mxu0 0
    %1017 = vmatprep.mubr.bf16.mxu0 0
    %1018 = vmatmul.mubr.bf16.gmra.mxu0 %v943
    %v1019 = vpop.f32.mrf.mxu0
    %v1020 = vadd.f32 0.0, %v1019
    %v1021 = vpop.f32.mrf.mxu0
    %v1022 = vadd.f32 0.0, %v1021
    %v1023 = vpop.f32.mrf.mxu0
    %v1024 = vpop.f32.mrf.mxu0
    %1025 = vdwg.mxu0
    %v1026 = vadd.f32 %v566, %v979
    %v1027 = vadd.f32 %v568, %v981
    %v1028 = vadd.f32 %v639, %v1020
    %v1029 = vadd.f32 %v641, %v1022
    %v1030 = vxor.u32 %v1026, 2147483648
    %v1031 = vxor.u32 %v1027, 2147483648
    %v1032 = vxor.u32 %v1028, 2147483648
    %v1033 = vmul.f32 %v1030, 1.442695
    %v1034 = vpow.pop %v1033
    %v1035 = vmul.f32 %v1031, 1.442695
    %v1036 = vpow.pop %v1035
    %v1037 = vmul.f32 %v1032, 1.442695
    %v1038 = vpow.pop %v1037
    %v1039 = vadd.f32 %v1034, 1.0
    %v1040 = vadd.f32 %v1036, 1.0
    %v1041 = vadd.f32 %v1038, 1.0
    %v1042 = vrcp.pop %v1039
    %v1043 = vmul.f32 1.0, %v1042
    %v1044 = vrcp.pop %v1040
    %v1045 = vmul.f32 1.0, %v1044
    %v1046 = vrcp.pop %v1041
    %v1047 = vmul.f32 1.0, %v1046
    %v1048 = vtanh.pop %v1029
    %v1049 = vmul.f32 %v1045, %v940
    %v1050 = vmul.f32 %v1043, %v1048
    %v1051 = vadd.f32 %v1049, %v1050
    %v1052 = vtanh.pop %v1051
    %v1053 = vmul.f32 %v1047, %v1052
    %v1054 = vpack.c.bf16 %v1053, %v1053
    %1055 = vmatprep.subr.bf16.mxu0 %v798
    %1056 = vmatpush1.bf16.msra.mxu0 %v797
    %1057 = vmatprep.subr.bf16.mxu0 %v794
    %1058 = vmatpush1.bf16.msra.mxu0 %v793
    %1059 = vmatprep.subr.bf16.mxu0 %v790
    %1060 = vmatpush1.bf16.msra.mxu0 %v789
    %1061 = vmatprep.subr.bf16.mxu0 %v786
    %1062 = vmatpush1.bf16.msra.mxu0 %v785
    %1063 = vmatprep.subr.bf16.mxu0 %v782
    %1064 = vmatpush1.bf16.msra.mxu0 %v781
    %1065 = vmatprep.subr.bf16.mxu0 %v778
    %1066 = vmatpush1.bf16.msra.mxu0 %v777
    %1067 = vmatprep.subr.bf16.mxu0 %v774
    %1068 = vmatpush1.bf16.msra.mxu0 %v773
    %1069 = vmatprep.subr.bf16.mxu0 %v770
    %1070 = vmatpush1.bf16.msra.mxu0 %v769
    %1071 = vmatprep.subr.bf16.mxu0 0
    %1072 = vmatpush2.bf16.msra.mxu0 0
    %1073 = vmatprep.subr.bf16.mxu0 0
    %1074 = vmatpush2.bf16.msra.mxu0 0
    %1075 = vmatprep.subr.bf16.mxu0 0
    %1076 = vmatpush2.bf16.msra.mxu0 0
    %1077 = vmatprep.subr.bf16.mxu0 0
    %1078 = vmatpush2.bf16.msra.mxu0 0
    %1079 = vmatprep.subr.bf16.mxu0 0
    %1080 = vmatpush2.bf16.msra.mxu0 0
    %1081 = vmatprep.subr.bf16.mxu0 0
    %1082 = vmatpush2.bf16.msra.mxu0 0
    %1083 = vmatprep.subr.bf16.mxu0 0
    %1084 = vmatpush2.bf16.msra.mxu0 0
    %1085 = vmatprep.subr.bf16.mxu0 0
    %1086 = vmatpush2.bf16.msra.mxu0 0
    %1087 = vmatprep.mubr.bf16.mxu0 0
    %1088 = vmatmul.mubr.bf16.gmra.mxu0 %v1054
    %v1089 = vpop.f32.mrf.mxu0
    %v1090 = vadd.f32 0.0, %v1089
    %v1091 = vpop.f32.mrf.mxu0
    %v1092 = vadd.f32 0.0, %v1091
    %v1093 = vpop.f32.mrf.mxu0
    %v1094 = vpop.f32.mrf.mxu0
    %1095 = vdwg.mxu0
    %1096 = vmatprep.subr.bf16.mxu0 %v800
    %1097 = vmatpush1.bf16.msra.mxu0 %v799
    %1098 = vmatprep.subr.bf16.mxu0 %v796
    %1099 = vmatpush1.bf16.msra.mxu0 %v795
    %1100 = vmatprep.subr.bf16.mxu0 %v792
    %1101 = vmatpush1.bf16.msra.mxu0 %v791
    %1102 = vmatprep.subr.bf16.mxu0 %v788
    %1103 = vmatpush1.bf16.msra.mxu0 %v787
    %1104 = vmatprep.subr.bf16.mxu0 %v784
    %1105 = vmatpush1.bf16.msra.mxu0 %v783
    %1106 = vmatprep.subr.bf16.mxu0 %v780
    %1107 = vmatpush1.bf16.msra.mxu0 %v779
    %1108 = vmatprep.subr.bf16.mxu0 %v776
    %1109 = vmatpush1.bf16.msra.mxu0 %v775
    %1110 = vmatprep.subr.bf16.mxu0 %v772
    %1111 = vmatpush1.bf16.msra.mxu0 %v771
    %1112 = vmatprep.subr.bf16.mxu0 0
    %1113 = vmatpush2.bf16.msra.mxu0 0
    %1114 = vmatprep.subr.bf16.mxu0 0
    %1115 = vmatpush2.bf16.msra.mxu0 0
    %1116 = vmatprep.subr.bf16.mxu0 0
    %1117 = vmatpush2.bf16.msra.mxu0 0
    %1118 = vmatprep.subr.bf16.mxu0 0
    %1119 = vmatpush2.bf16.msra.mxu0 0
    %1120 = vmatprep.subr.bf16.mxu0 0
    %1121 = vmatpush2.bf16.msra.mxu0 0
    %1122 = vmatprep.subr.bf16.mxu0 0
    %1123 = vmatpush2.bf16.msra.mxu0 0
    %1124 = vmatprep.subr.bf16.mxu0 0
    %1125 = vmatpush2.bf16.msra.mxu0 0
    %1126 = vmatprep.subr.bf16.mxu0 0
    %1127 = vmatpush2.bf16.msra.mxu0 0
    %1128 = vmatprep.mubr.bf16.mxu0 0
    %1129 = vmatmul.mubr.bf16.gmra.mxu0 %v1054
    %v1130 = vpop.f32.mrf.mxu0
    %v1131 = vadd.f32 0.0, %v1130
    %v1132 = vpop.f32.mrf.mxu0
    %v1133 = vadd.f32 0.0, %v1132
    %v1134 = vpop.f32.mrf.mxu0
    %v1135 = vpop.f32.mrf.mxu0
    %1136 = vdwg.mxu0
    %v1137 = vadd.f32 %v572, %v1090
    %v1138 = vadd.f32 %v574, %v1092
    %v1139 = vadd.f32 %v645, %v1131
    %v1140 = vadd.f32 %v647, %v1133
    %v1141 = vxor.u32 %v1137, 2147483648
    %v1142 = vxor.u32 %v1138, 2147483648
    %v1143 = vxor.u32 %v1139, 2147483648
    %v1144 = vmul.f32 %v1141, 1.442695
    %v1145 = vpow.pop %v1144
    %v1146 = vmul.f32 %v1142, 1.442695
    %v1147 = vpow.pop %v1146
    %v1148 = vmul.f32 %v1143, 1.442695
    %v1149 = vpow.pop %v1148
    %v1150 = vadd.f32 %v1145, 1.0
    %v1151 = vadd.f32 %v1147, 1.0
    %v1152 = vadd.f32 %v1149, 1.0
    %v1153 = vrcp.pop %v1150
    %v1154 = vmul.f32 1.0, %v1153
    %v1155 = vrcp.pop %v1151
    %v1156 = vmul.f32 1.0, %v1155
    %v1157 = vrcp.pop %v1152
    %v1158 = vmul.f32 1.0, %v1157
    %v1159 = vtanh.pop %v1140
    %v1160 = vmul.f32 %v1156, %v1051
    %v1161 = vmul.f32 %v1154, %v1159
    %v1162 = vadd.f32 %v1160, %v1161
    %v1163 = vtanh.pop %v1162
    %v1164 = vmul.f32 %v1158, %v1163
    %v1165 = vpack.c.bf16 %v1164, %v1164
    %1166 = vmatprep.subr.bf16.mxu0 %v798
    %1167 = vmatpush1.bf16.msra.mxu0 %v797
    %1168 = vmatprep.subr.bf16.mxu0 %v794
    %1169 = vmatpush1.bf16.msra.mxu0 %v793
    %1170 = vmatprep.subr.bf16.mxu0 %v790
    %1171 = vmatpush1.bf16.msra.mxu0 %v789
    %1172 = vmatprep.subr.bf16.mxu0 %v786
    %1173 = vmatpush1.bf16.msra.mxu0 %v785
    %1174 = vmatprep.subr.bf16.mxu0 %v782
    %1175 = vmatpush1.bf16.msra.mxu0 %v781
    %1176 = vmatprep.subr.bf16.mxu0 %v778
    %1177 = vmatpush1.bf16.msra.mxu0 %v777
    %1178 = vmatprep.subr.bf16.mxu0 %v774
    %1179 = vmatpush1.bf16.msra.mxu0 %v773
    %1180 = vmatprep.subr.bf16.mxu0 %v770
    %1181 = vmatpush1.bf16.msra.mxu0 %v769
    %1182 = vmatprep.subr.bf16.mxu0 0
    %1183 = vmatpush2.bf16.msra.mxu0 0
    %1184 = vmatprep.subr.bf16.mxu0 0
    %1185 = vmatpush2.bf16.msra.mxu0 0
    %1186 = vmatprep.subr.bf16.mxu0 0
    %1187 = vmatpush2.bf16.msra.mxu0 0
    %1188 = vmatprep.subr.bf16.mxu0 0
    %1189 = vmatpush2.bf16.msra.mxu0 0
    %1190 = vmatprep.subr.bf16.mxu0 0
    %1191 = vmatpush2.bf16.msra.mxu0 0
    %1192 = vmatprep.subr.bf16.mxu0 0
    %1193 = vmatpush2.bf16.msra.mxu0 0
    %1194 = vmatprep.subr.bf16.mxu0 0
    %1195 = vmatpush2.bf16.msra.mxu0 0
    %1196 = vmatprep.subr.bf16.mxu0 0
    %1197 = vmatpush2.bf16.msra.mxu0 0
    %1198 = vmatprep.mubr.bf16.mxu0 0
    %1199 = vmatmul.mubr.bf16.gmra.mxu0 %v1165
    %v1200 = vpop.f32.mrf.mxu0
    %v1201 = vadd.f32 0.0, %v1200
    %v1202 = vpop.f32.mrf.mxu0
    %v1203 = vadd.f32 0.0, %v1202
    %v1204 = vpop.f32.mrf.mxu0
    %v1205 = vpop.f32.mrf.mxu0
    %1206 = vdwg.mxu0
    %1207 = vmatprep.subr.bf16.mxu0 %v800
    %1208 = vmatpush1.bf16.msra.mxu0 %v799
    %1209 = vmatprep.subr.bf16.mxu0 %v796
    %1210 = vmatpush1.bf16.msra.mxu0 %v795
    %1211 = vmatprep.subr.bf16.mxu0 %v792
    %1212 = vmatpush1.bf16.msra.mxu0 %v791
    %1213 = vmatprep.subr.bf16.mxu0 %v788
    %1214 = vmatpush1.bf16.msra.mxu0 %v787
    %1215 = vmatprep.subr.bf16.mxu0 %v784
    %1216 = vmatpush1.bf16.msra.mxu0 %v783
    %1217 = vmatprep.subr.bf16.mxu0 %v780
    %1218 = vmatpush1.bf16.msra.mxu0 %v779
    %1219 = vmatprep.subr.bf16.mxu0 %v776
    %1220 = vmatpush1.bf16.msra.mxu0 %v775
    %1221 = vmatprep.subr.bf16.mxu0 %v772
    %1222 = vmatpush1.bf16.msra.mxu0 %v771
    %1223 = vmatprep.subr.bf16.mxu0 0
    %1224 = vmatpush2.bf16.msra.mxu0 0
    %1225 = vmatprep.subr.bf16.mxu0 0
    %1226 = vmatpush2.bf16.msra.mxu0 0
    %1227 = vmatprep.subr.bf16.mxu0 0
    %1228 = vmatpush2.bf16.msra.mxu0 0
    %1229 = vmatprep.subr.bf16.mxu0 0
    %1230 = vmatpush2.bf16.msra.mxu0 0
    %1231 = vmatprep.subr.bf16.mxu0 0
    %1232 = vmatpush2.bf16.msra.mxu0 0
    %1233 = vmatprep.subr.bf16.mxu0 0
    %1234 = vmatpush2.bf16.msra.mxu0 0
    %1235 = vmatprep.subr.bf16.mxu0 0
    %1236 = vmatpush2.bf16.msra.mxu0 0
    %1237 = vmatprep.subr.bf16.mxu0 0
    %1238 = vmatpush2.bf16.msra.mxu0 0
    %1239 = vmatprep.mubr.bf16.mxu0 0
    %1240 = vmatmul.mubr.bf16.gmra.mxu0 %v1165
    %v1241 = vpop.f32.mrf.mxu0
    %v1242 = vadd.f32 0.0, %v1241
    %v1243 = vpop.f32.mrf.mxu0
    %v1244 = vadd.f32 0.0, %v1243
    %v1245 = vpop.f32.mrf.mxu0
    %v1246 = vpop.f32.mrf.mxu0
    %1247 = vdwg.mxu0
    %v1248 = vadd.f32 %v576, %v1201
    %v1249 = vadd.f32 %v578, %v1203
    %v1250 = vadd.f32 %v649, %v1242
    %v1251 = vadd.f32 %v651, %v1244
    %v1252 = vxor.u32 %v1248, 2147483648
    %v1253 = vxor.u32 %v1249, 2147483648
    %v1254 = vxor.u32 %v1250, 2147483648
    %v1255 = vmul.f32 %v1252, 1.442695
    %v1256 = vpow.pop %v1255
    %v1257 = vmul.f32 %v1253, 1.442695
    %v1258 = vpow.pop %v1257
    %v1259 = vmul.f32 %v1254, 1.442695
    %v1260 = vpow.pop %v1259
    %v1261 = vadd.f32 %v1256, 1.0
    %v1262 = vadd.f32 %v1258, 1.0
    %v1263 = vadd.f32 %v1260, 1.0
    %v1264 = vrcp.pop %v1261
    %v1265 = vmul.f32 1.0, %v1264
    %v1266 = vrcp.pop %v1262
    %v1267 = vmul.f32 1.0, %v1266
    %v1268 = vrcp.pop %v1263
    %v1269 = vmul.f32 1.0, %v1268
    %v1270 = vtanh.pop %v1251
    %v1271 = vmul.f32 %v1267, %v1162
    %v1272 = vmul.f32 %v1265, %v1270
    %v1273 = vadd.f32 %v1271, %v1272
    %v1274 = vtanh.pop %v1273
    %v1275 = vmul.f32 %v1269, %v1274
    %v1276 = vpack.c.bf16 %v1275, %v1275
    %1277 = vmatprep.subr.bf16.mxu0 %v798
    %1278 = vmatpush1.bf16.msra.mxu0 %v797
    %1279 = vmatprep.subr.bf16.mxu0 %v794
    %1280 = vmatpush1.bf16.msra.mxu0 %v793
    %1281 = vmatprep.subr.bf16.mxu0 %v790
    %1282 = vmatpush1.bf16.msra.mxu0 %v789
    %1283 = vmatprep.subr.bf16.mxu0 %v786
    %1284 = vmatpush1.bf16.msra.mxu0 %v785
    %1285 = vmatprep.subr.bf16.mxu0 %v782
    %1286 = vmatpush1.bf16.msra.mxu0 %v781
    %1287 = vmatprep.subr.bf16.mxu0 %v778
    %1288 = vmatpush1.bf16.msra.mxu0 %v777
    %1289 = vmatprep.subr.bf16.mxu0 %v774
    %1290 = vmatpush1.bf16.msra.mxu0 %v773
    %1291 = vmatprep.subr.bf16.mxu0 %v770
    %1292 = vmatpush1.bf16.msra.mxu0 %v769
    %1293 = vmatprep.subr.bf16.mxu0 0
    %1294 = vmatpush2.bf16.msra.mxu0 0
    %1295 = vmatprep.subr.bf16.mxu0 0
    %1296 = vmatpush2.bf16.msra.mxu0 0
    %1297 = vmatprep.subr.bf16.mxu0 0
    %1298 = vmatpush2.bf16.msra.mxu0 0
    %1299 = vmatprep.subr.bf16.mxu0 0
    %1300 = vmatpush2.bf16.msra.mxu0 0
    %1301 = vmatprep.subr.bf16.mxu0 0
    %1302 = vmatpush2.bf16.msra.mxu0 0
    %1303 = vmatprep.subr.bf16.mxu0 0
    %1304 = vmatpush2.bf16.msra.mxu0 0
    %1305 = vmatprep.subr.bf16.mxu0 0
    %1306 = vmatpush2.bf16.msra.mxu0 0
    %1307 = vmatprep.subr.bf16.mxu0 0
    %1308 = vmatpush2.bf16.msra.mxu0 0
    %1309 = vmatprep.mubr.bf16.mxu0 0
    %1310 = vmatmul.mubr.bf16.gmra.mxu0 %v1276
    %v1311 = vpop.f32.mrf.mxu0
    %v1312 = vadd.f32 0.0, %v1311
    %v1313 = vpop.f32.mrf.mxu0
    %v1314 = vadd.f32 0.0, %v1313
    %v1315 = vpop.f32.mrf.mxu0
    %v1316 = vpop.f32.mrf.mxu0
    %1317 = vdwg.mxu0
    %1318 = vmatprep.subr.bf16.mxu0 %v800
    %1319 = vmatpush1.bf16.msra.mxu0 %v799
    %1320 = vmatprep.subr.bf16.mxu0 %v796
    %1321 = vmatpush1.bf16.msra.mxu0 %v795
    %1322 = vmatprep.subr.bf16.mxu0 %v792
    %1323 = vmatpush1.bf16.msra.mxu0 %v791
    %1324 = vmatprep.subr.bf16.mxu0 %v788
    %1325 = vmatpush1.bf16.msra.mxu0 %v787
    %1326 = vmatprep.subr.bf16.mxu0 %v784
    %1327 = vmatpush1.bf16.msra.mxu0 %v783
    %1328 = vmatprep.subr.bf16.mxu0 %v780
    %1329 = vmatpush1.bf16.msra.mxu0 %v779
    %1330 = vmatprep.subr.bf16.mxu0 %v776
    %1331 = vmatpush1.bf16.msra.mxu0 %v775
    %1332 = vmatprep.subr.bf16.mxu0 %v772
    %1333 = vmatpush1.bf16.msra.mxu0 %v771
    %1334 = vmatprep.subr.bf16.mxu0 0
    %1335 = vmatpush2.bf16.msra.mxu0 0
    %1336 = vmatprep.subr.bf16.mxu0 0
    %1337 = vmatpush2.bf16.msra.mxu0 0
    %1338 = vmatprep.subr.bf16.mxu0 0
    %1339 = vmatpush2.bf16.msra.mxu0 0
    %1340 = vmatprep.subr.bf16.mxu0 0
    %1341 = vmatpush2.bf16.msra.mxu0 0
    %1342 = vmatprep.subr.bf16.mxu0 0
    %1343 = vmatpush2.bf16.msra.mxu0 0
    %1344 = vmatprep.subr.bf16.mxu0 0
    %1345 = vmatpush2.bf16.msra.mxu0 0
    %1346 = vmatprep.subr.bf16.mxu0 0
    %1347 = vmatpush2.bf16.msra.mxu0 0
    %1348 = vmatprep.subr.bf16.mxu0 0
    %1349 = vmatpush2.bf16.msra.mxu0 0
    %1350 = vmatprep.mubr.bf16.mxu0 0
    %1351 = vmatmul.mubr.bf16.gmra.mxu0 %v1276
    %v1352 = vpop.f32.mrf.mxu0
    %v1353 = vadd.f32 0.0, %v1352
    %v1354 = vpop.f32.mrf.mxu0
    %v1355 = vadd.f32 0.0, %v1354
    %v1356 = vpop.f32.mrf.mxu0
    %v1357 = vpop.f32.mrf.mxu0
    %1358 = vdwg.mxu0
    %v1359 = vadd.f32 %v582, %v1312
    %v1360 = vadd.f32 %v584, %v1314
    %v1361 = vadd.f32 %v655, %v1353
    %v1362 = vadd.f32 %v657, %v1355
    %v1363 = vxor.u32 %v1359, 2147483648
    %v1364 = vxor.u32 %v1360, 2147483648
    %v1365 = vxor.u32 %v1361, 2147483648
    %v1366 = vmul.f32 %v1363, 1.442695
    %v1367 = vpow.pop %v1366
    %v1368 = vmul.f32 %v1364, 1.442695
    %v1369 = vpow.pop %v1368
    %v1370 = vmul.f32 %v1365, 1.442695
    %v1371 = vpow.pop %v1370
    %v1372 = vadd.f32 %v1367, 1.0
    %v1373 = vadd.f32 %v1369, 1.0
    %v1374 = vadd.f32 %v1371, 1.0
    %v1375 = vrcp.pop %v1372
    %v1376 = vmul.f32 1.0, %v1375
    %v1377 = vrcp.pop %v1373
    %v1378 = vmul.f32 1.0, %v1377
    %v1379 = vrcp.pop %v1374
    %v1380 = vmul.f32 1.0, %v1379
    %v1381 = vtanh.pop %v1362
    %v1382 = vmul.f32 %v1378, %v1273
    %v1383 = vmul.f32 %v1376, %v1381
    %v1384 = vadd.f32 %v1382, %v1383
    %v1385 = vtanh.pop %v1384
    %v1386 = vmul.f32 %v1380, %v1385
    %v1387 = vpack.c.bf16 %v1386, %v1386
    %1388 = vmatprep.subr.bf16.mxu0 %v798
    %1389 = vmatpush1.bf16.msra.mxu0 %v797
    %1390 = vmatprep.subr.bf16.mxu0 %v794
    %1391 = vmatpush1.bf16.msra.mxu0 %v793
    %1392 = vmatprep.subr.bf16.mxu0 %v790
    %1393 = vmatpush1.bf16.msra.mxu0 %v789
    %1394 = vmatprep.subr.bf16.mxu0 %v786
    %1395 = vmatpush1.bf16.msra.mxu0 %v785
    %1396 = vmatprep.subr.bf16.mxu0 %v782
    %1397 = vmatpush1.bf16.msra.mxu0 %v781
    %1398 = vmatprep.subr.bf16.mxu0 %v778
    %1399 = vmatpush1.bf16.msra.mxu0 %v777
    %1400 = vmatprep.subr.bf16.mxu0 %v774
    %1401 = vmatpush1.bf16.msra.mxu0 %v773
    %1402 = vmatprep.subr.bf16.mxu0 %v770
    %1403 = vmatpush1.bf16.msra.mxu0 %v769
    %1404 = vmatprep.subr.bf16.mxu0 0
    %1405 = vmatpush2.bf16.msra.mxu0 0
    %1406 = vmatprep.subr.bf16.mxu0 0
    %1407 = vmatpush2.bf16.msra.mxu0 0
    %1408 = vmatprep.subr.bf16.mxu0 0
    %1409 = vmatpush2.bf16.msra.mxu0 0
    %1410 = vmatprep.subr.bf16.mxu0 0
    %1411 = vmatpush2.bf16.msra.mxu0 0
    %1412 = vmatprep.subr.bf16.mxu0 0
    %1413 = vmatpush2.bf16.msra.mxu0 0
    %1414 = vmatprep.subr.bf16.mxu0 0
    %1415 = vmatpush2.bf16.msra.mxu0 0
    %1416 = vmatprep.subr.bf16.mxu0 0
    %1417 = vmatpush2.bf16.msra.mxu0 0
    %1418 = vmatprep.subr.bf16.mxu0 0
    %1419 = vmatpush2.bf16.msra.mxu0 0
    %1420 = vmatprep.mubr.bf16.mxu0 0
    %1421 = vmatmul.mubr.bf16.gmra.mxu0 %v1387
    %v1422 = vpop.f32.mrf.mxu0
    %v1423 = vadd.f32 0.0, %v1422
    %v1424 = vpop.f32.mrf.mxu0
    %v1425 = vadd.f32 0.0, %v1424
    %v1426 = vpop.f32.mrf.mxu0
    %v1427 = vpop.f32.mrf.mxu0
    %1428 = vdwg.mxu0
    %1429 = vmatprep.subr.bf16.mxu0 %v800
    %1430 = vmatpush1.bf16.msra.mxu0 %v799
    %1431 = vmatprep.subr.bf16.mxu0 %v796
    %1432 = vmatpush1.bf16.msra.mxu0 %v795
    %1433 = vmatprep.subr.bf16.mxu0 %v792
    %1434 = vmatpush1.bf16.msra.mxu0 %v791
    %1435 = vmatprep.subr.bf16.mxu0 %v788
    %1436 = vmatpush1.bf16.msra.mxu0 %v787
    %1437 = vmatprep.subr.bf16.mxu0 %v784
    %1438 = vmatpush1.bf16.msra.mxu0 %v783
    %1439 = vmatprep.subr.bf16.mxu0 %v780
    %1440 = vmatpush1.bf16.msra.mxu0 %v779
    %1441 = vmatprep.subr.bf16.mxu0 %v776
    %1442 = vmatpush1.bf16.msra.mxu0 %v775
    %1443 = vmatprep.subr.bf16.mxu0 %v772
    %1444 = vmatpush1.bf16.msra.mxu0 %v771
    %1445 = vmatprep.subr.bf16.mxu0 0
    %1446 = vmatpush2.bf16.msra.mxu0 0
    %1447 = vmatprep.subr.bf16.mxu0 0
    %1448 = vmatpush2.bf16.msra.mxu0 0
    %1449 = vmatprep.subr.bf16.mxu0 0
    %1450 = vmatpush2.bf16.msra.mxu0 0
    %1451 = vmatprep.subr.bf16.mxu0 0
    %1452 = vmatpush2.bf16.msra.mxu0 0
    %1453 = vmatprep.subr.bf16.mxu0 0
    %1454 = vmatpush2.bf16.msra.mxu0 0
    %1455 = vmatprep.subr.bf16.mxu0 0
    %1456 = vmatpush2.bf16.msra.mxu0 0
    %1457 = vmatprep.subr.bf16.mxu0 0
    %1458 = vmatpush2.bf16.msra.mxu0 0
    %1459 = vmatprep.subr.bf16.mxu0 0
    %1460 = vmatpush2.bf16.msra.mxu0 0
    %1461 = vmatprep.mubr.bf16.mxu0 0
    %1462 = vmatmul.mubr.bf16.gmra.mxu0 %v1387
    %v1463 = vpop.f32.mrf.mxu0
    %v1464 = vadd.f32 0.0, %v1463
    %v1465 = vpop.f32.mrf.mxu0
    %v1466 = vadd.f32 0.0, %v1465
    %v1467 = vpop.f32.mrf.mxu0
    %v1468 = vpop.f32.mrf.mxu0
    %1469 = vdwg.mxu0
    %v1470 = vadd.f32 %v586, %v1423
    %v1471 = vadd.f32 %v588, %v1425
    %v1472 = vadd.f32 %v659, %v1464
    %v1473 = vadd.f32 %v661, %v1466
    %v1474 = vxor.u32 %v1470, 2147483648
    %v1475 = vxor.u32 %v1471, 2147483648
    %v1476 = vxor.u32 %v1472, 2147483648
    %v1477 = vmul.f32 %v1474, 1.442695
    %v1478 = vpow.pop %v1477
    %v1479 = vmul.f32 %v1475, 1.442695
    %v1480 = vpow.pop %v1479
    %v1481 = vmul.f32 %v1476, 1.442695
    %v1482 = vpow.pop %v1481
    %v1483 = vadd.f32 %v1478, 1.0
    %v1484 = vadd.f32 %v1480, 1.0
    %v1485 = vadd.f32 %v1482, 1.0
    %v1486 = vrcp.pop %v1483
    %v1487 = vmul.f32 1.0, %v1486
    %v1488 = vrcp.pop %v1484
    %v1489 = vmul.f32 1.0, %v1488
    %v1490 = vrcp.pop %v1485
    %v1491 = vmul.f32 1.0, %v1490
    %v1492 = vtanh.pop %v1473
    %v1493 = vmul.f32 %v1489, %v1384
    %v1494 = vmul.f32 %v1487, %v1492
    %v1495 = vadd.f32 %v1493, %v1494
    %v1496 = vtanh.pop %v1495
    %v1497 = vmul.f32 %v1491, %v1496
    %v1498 = vpack.c.bf16 %v1497, %v1497
    %1499 = vmatprep.subr.bf16.mxu0 %v798
    %1500 = vmatpush1.bf16.msra.mxu0 %v797
    %1501 = vmatprep.subr.bf16.mxu0 %v794
    %1502 = vmatpush1.bf16.msra.mxu0 %v793
    %1503 = vmatprep.subr.bf16.mxu0 %v790
    %1504 = vmatpush1.bf16.msra.mxu0 %v789
    %1505 = vmatprep.subr.bf16.mxu0 %v786
    %1506 = vmatpush1.bf16.msra.mxu0 %v785
    %1507 = vmatprep.subr.bf16.mxu0 %v782
    %1508 = vmatpush1.bf16.msra.mxu0 %v781
    %1509 = vmatprep.subr.bf16.mxu0 %v778
    %1510 = vmatpush1.bf16.msra.mxu0 %v777
    %1511 = vmatprep.subr.bf16.mxu0 %v774
    %1512 = vmatpush1.bf16.msra.mxu0 %v773
    %1513 = vmatprep.subr.bf16.mxu0 %v770
    %1514 = vmatpush1.bf16.msra.mxu0 %v769
    %1515 = vmatprep.subr.bf16.mxu0 0
    %1516 = vmatpush2.bf16.msra.mxu0 0
    %1517 = vmatprep.subr.bf16.mxu0 0
    %1518 = vmatpush2.bf16.msra.mxu0 0
    %1519 = vmatprep.subr.bf16.mxu0 0
    %1520 = vmatpush2.bf16.msra.mxu0 0
    %1521 = vmatprep.subr.bf16.mxu0 0
    %1522 = vmatpush2.bf16.msra.mxu0 0
    %1523 = vmatprep.subr.bf16.mxu0 0
    %1524 = vmatpush2.bf16.msra.mxu0 0
    %1525 = vmatprep.subr.bf16.mxu0 0
    %1526 = vmatpush2.bf16.msra.mxu0 0
    %1527 = vmatprep.subr.bf16.mxu0 0
    %1528 = vmatpush2.bf16.msra.mxu0 0
    %1529 = vmatprep.subr.bf16.mxu0 0
    %1530 = vmatpush2.bf16.msra.mxu0 0
    %1531 = vmatprep.mubr.bf16.mxu0 0
    %1532 = vmatmul.mubr.bf16.gmra.mxu0 %v1498
    %v1533 = vpop.f32.mrf.mxu0
    %v1534 = vadd.f32 0.0, %v1533
    %v1535 = vpop.f32.mrf.mxu0
    %v1536 = vadd.f32 0.0, %v1535
    %v1537 = vpop.f32.mrf.mxu0
    %v1538 = vpop.f32.mrf.mxu0
    %1539 = vdwg.mxu0
    %1540 = vmatprep.subr.bf16.mxu0 %v800
    %1541 = vmatpush1.bf16.msra.mxu0 %v799
    %1542 = vmatprep.subr.bf16.mxu0 %v796
    %1543 = vmatpush1.bf16.msra.mxu0 %v795
    %1544 = vmatprep.subr.bf16.mxu0 %v792
    %1545 = vmatpush1.bf16.msra.mxu0 %v791
    %1546 = vmatprep.subr.bf16.mxu0 %v788
    %1547 = vmatpush1.bf16.msra.mxu0 %v787
    %1548 = vmatprep.subr.bf16.mxu0 %v784
    %1549 = vmatpush1.bf16.msra.mxu0 %v783
    %1550 = vmatprep.subr.bf16.mxu0 %v780
    %1551 = vmatpush1.bf16.msra.mxu0 %v779
    %1552 = vmatprep.subr.bf16.mxu0 %v776
    %1553 = vmatpush1.bf16.msra.mxu0 %v775
    %1554 = vmatprep.subr.bf16.mxu0 %v772
    %1555 = vmatpush1.bf16.msra.mxu0 %v771
    %1556 = vmatprep.subr.bf16.mxu0 0
    %1557 = vmatpush2.bf16.msra.mxu0 0
    %1558 = vmatprep.subr.bf16.mxu0 0
    %1559 = vmatpush2.bf16.msra.mxu0 0
    %1560 = vmatprep.subr.bf16.mxu0 0
    %1561 = vmatpush2.bf16.msra.mxu0 0
    %1562 = vmatprep.subr.bf16.mxu0 0
    %1563 = vmatpush2.bf16.msra.mxu0 0
    %1564 = vmatprep.subr.bf16.mxu0 0
    %1565 = vmatpush2.bf16.msra.mxu0 0
    %1566 = vmatprep.subr.bf16.mxu0 0
    %1567 = vmatpush2.bf16.msra.mxu0 0
    %1568 = vmatprep.subr.bf16.mxu0 0
    %1569 = vmatpush2.bf16.msra.mxu0 0
    %1570 = vmatprep.subr.bf16.mxu0 0
    %1571 = vmatpush2.bf16.msra.mxu0 0
    %1572 = vmatprep.mubr.bf16.mxu0 0
    %1573 = vmatmul.mubr.bf16.gmra.mxu0 %v1498
    %v1574 = vpop.f32.mrf.mxu0
    %v1575 = vadd.f32 0.0, %v1574
    %v1576 = vpop.f32.mrf.mxu0
    %v1577 = vadd.f32 0.0, %v1576
    %v1578 = vpop.f32.mrf.mxu0
    %v1579 = vpop.f32.mrf.mxu0
    %1580 = vdwg.mxu0
    %v1581 = vadd.f32 %v592, %v1534
    %v1582 = vadd.f32 %v594, %v1536
    %v1583 = vadd.f32 %v665, %v1575
    %v1584 = vadd.f32 %v667, %v1577
    %v1585 = vxor.u32 %v1581, 2147483648
    %v1586 = vxor.u32 %v1582, 2147483648
    %v1587 = vxor.u32 %v1583, 2147483648
    %v1588 = vmul.f32 %v1585, 1.442695
    %v1589 = vpow.pop %v1588
    %v1590 = vmul.f32 %v1586, 1.442695
    %v1591 = vpow.pop %v1590
    %v1592 = vmul.f32 %v1587, 1.442695
    %v1593 = vpow.pop %v1592
    %v1594 = vadd.f32 %v1589, 1.0
    %v1595 = vadd.f32 %v1591, 1.0
    %v1596 = vadd.f32 %v1593, 1.0
    %v1597 = vrcp.pop %v1594
    %v1598 = vmul.f32 1.0, %v1597
    %v1599 = vrcp.pop %v1595
    %v1600 = vmul.f32 1.0, %v1599
    %v1601 = vrcp.pop %v1596
    %v1602 = vmul.f32 1.0, %v1601
    %v1603 = vtanh.pop %v1584
    %v1604 = vmul.f32 %v1600, %v1495
    %v1605 = vmul.f32 %v1598, %v1603
    %v1606 = vadd.f32 %v1604, %v1605
    %v1607 = vtanh.pop %v1606
    %v1608 = vmul.f32 %v1602, %v1607
    %v1609 = vpack.c.bf16 %v1608, %v1608
    %1610 = vmatprep.subr.bf16.mxu0 %v798
    %1611 = vmatpush1.bf16.msra.mxu0 %v797
    %1612 = vmatprep.subr.bf16.mxu0 %v794
    %1613 = vmatpush1.bf16.msra.mxu0 %v793
    %1614 = vmatprep.subr.bf16.mxu0 %v790
    %1615 = vmatpush1.bf16.msra.mxu0 %v789
    %1616 = vmatprep.subr.bf16.mxu0 %v786
    %1617 = vmatpush1.bf16.msra.mxu0 %v785
    %1618 = vmatprep.subr.bf16.mxu0 %v782
    %1619 = vmatpush1.bf16.msra.mxu0 %v781
    %1620 = vmatprep.subr.bf16.mxu0 %v778
    %1621 = vmatpush1.bf16.msra.mxu0 %v777
    %1622 = vmatprep.subr.bf16.mxu0 %v774
    %1623 = vmatpush1.bf16.msra.mxu0 %v773
    %1624 = vmatprep.subr.bf16.mxu0 %v770
    %1625 = vmatpush1.bf16.msra.mxu0 %v769
    %1626 = vmatprep.subr.bf16.mxu0 0
    %1627 = vmatpush2.bf16.msra.mxu0 0
    %1628 = vmatprep.subr.bf16.mxu0 0
    %1629 = vmatpush2.bf16.msra.mxu0 0
    %1630 = vmatprep.subr.bf16.mxu0 0
    %1631 = vmatpush2.bf16.msra.mxu0 0
    %1632 = vmatprep.subr.bf16.mxu0 0
    %1633 = vmatpush2.bf16.msra.mxu0 0
    %1634 = vmatprep.subr.bf16.mxu0 0
    %1635 = vmatpush2.bf16.msra.mxu0 0
    %1636 = vmatprep.subr.bf16.mxu0 0
    %1637 = vmatpush2.bf16.msra.mxu0 0
    %1638 = vmatprep.subr.bf16.mxu0 0
    %1639 = vmatpush2.bf16.msra.mxu0 0
    %1640 = vmatprep.subr.bf16.mxu0 0
    %1641 = vmatpush2.bf16.msra.mxu0 0
    %1642 = vmatprep.mubr.bf16.mxu0 0
    %1643 = vmatmul.mubr.bf16.gmra.mxu0 %v1609
    %v1644 = vpop.f32.mrf.mxu0
    %v1645 = vadd.f32 0.0, %v1644
    %v1646 = vpop.f32.mrf.mxu0
    %v1647 = vadd.f32 0.0, %v1646
    %v1648 = vpop.f32.mrf.mxu0
    %v1649 = vpop.f32.mrf.mxu0
    %1650 = vdwg.mxu0
    %1651 = vmatprep.subr.bf16.mxu0 %v800
    %1652 = vmatpush1.bf16.msra.mxu0 %v799
    %1653 = vmatprep.subr.bf16.mxu0 %v796
    %1654 = vmatpush1.bf16.msra.mxu0 %v795
    %1655 = vmatprep.subr.bf16.mxu0 %v792
    %1656 = vmatpush1.bf16.msra.mxu0 %v791
    %1657 = vmatprep.subr.bf16.mxu0 %v788
    %1658 = vmatpush1.bf16.msra.mxu0 %v787
    %1659 = vmatprep.subr.bf16.mxu0 %v784
    %1660 = vmatpush1.bf16.msra.mxu0 %v783
    %1661 = vmatprep.subr.bf16.mxu0 %v780
    %1662 = vmatpush1.bf16.msra.mxu0 %v779
    %1663 = vmatprep.subr.bf16.mxu0 %v776
    %1664 = vmatpush1.bf16.msra.mxu0 %v775
    %1665 = vmatprep.subr.bf16.mxu0 %v772
    %1666 = vmatpush1.bf16.msra.mxu0 %v771
    %1667 = vmatprep.subr.bf16.mxu0 0
    %1668 = vmatpush2.bf16.msra.mxu0 0
    %1669 = vmatprep.subr.bf16.mxu0 0
    %1670 = vmatpush2.bf16.msra.mxu0 0
    %1671 = vmatprep.subr.bf16.mxu0 0
    %1672 = vmatpush2.bf16.msra.mxu0 0
    %1673 = vmatprep.subr.bf16.mxu0 0
    %1674 = vmatpush2.bf16.msra.mxu0 0
    %1675 = vmatprep.subr.bf16.mxu0 0
    %1676 = vmatpush2.bf16.msra.mxu0 0
    %1677 = vmatprep.subr.bf16.mxu0 0
    %1678 = vmatpush2.bf16.msra.mxu0 0
    %1679 = vmatprep.subr.bf16.mxu0 0
    %1680 = vmatpush2.bf16.msra.mxu0 0
    %1681 = vmatprep.subr.bf16.mxu0 0
    %1682 = vmatpush2.bf16.msra.mxu0 0
    %1683 = vmatprep.mubr.bf16.mxu0 0
    %1684 = vmatmul.mubr.bf16.gmra.mxu0 %v1609
    %v1685 = vpop.f32.mrf.mxu0
    %v1686 = vadd.f32 0.0, %v1685
    %v1687 = vpop.f32.mrf.mxu0
    %v1688 = vadd.f32 0.0, %v1687
    %v1689 = vpop.f32.mrf.mxu0
    %v1690 = vpop.f32.mrf.mxu0
    %1691 = vdwg.mxu0
    %v1692 = vadd.f32 %v596, %v1645
    %v1693 = vadd.f32 %v598, %v1647
    %v1694 = vadd.f32 %v669, %v1686
    %v1695 = vadd.f32 %v671, %v1688
    %v1696 = vxor.u32 %v1692, 2147483648
    %v1697 = vxor.u32 %v1693, 2147483648
    %v1698 = vxor.u32 %v1694, 2147483648
    %v1699 = vmul.f32 %v1696, 1.442695
    %v1700 = vpow.pop %v1699
    %v1701 = vmul.f32 %v1697, 1.442695
    %v1702 = vpow.pop %v1701
    %v1703 = vmul.f32 %v1698, 1.442695
    %v1704 = vpow.pop %v1703
    %v1705 = vadd.f32 %v1700, 1.0
    %v1706 = vadd.f32 %v1702, 1.0
    %v1707 = vadd.f32 %v1704, 1.0
    %v1708 = vrcp.pop %v1705
    %v1709 = vmul.f32 1.0, %v1708
    %v1710 = vrcp.pop %v1706
    %v1711 = vmul.f32 1.0, %v1710
    %v1712 = vrcp.pop %v1707
    %v1713 = vmul.f32 1.0, %v1712
    %v1714 = vtanh.pop %v1695
    %v1715 = vmul.f32 %v1711, %v1606
    %v1716 = vmul.f32 %v1709, %v1714
    %v1717 = vadd.f32 %v1715, %v1716
    %v1718 = vtanh.pop %v1717
    %v1719 = vmul.f32 %v1713, %v1718
    %v1720 = vld [vmem:[%s1] sm:$0xff]
    %v1721 = vld [vmem:[%s1 + $0x8] sm:$0xff]
    %v1722 = vld [vmem:[%s1 + $0x10] sm:$0xff]
    %v1723 = vpack.c.bf16 %v1720, %v1720
    %v1724 = vpack.c.bf16 %v1721, %v1721
    %v1725 = vpack.c.bf16 %v1722, %v1722
    %v1726 = vpack.c.bf16 %v1719, %v1719
    %s1727 = scalar_lea.vmem %s4, 1
    %v1728 = vld [vmem:[%s1727] ss:$8 sm:$0xf]
    %s1729 = scalar_lea.vmem %s4, 2
    %v1730 = vld [vmem:[%s1729] ss:$8 sm:$0xf]
    %s1731 = scalar_lea.vmem %s4, 3
    %v1732 = vld [vmem:[%s1731] ss:$8 sm:$0xf]
    %s1733 = scalar_lea.vmem %s4, 4
    %v1734 = vld [vmem:[%s1733] ss:$8 sm:$0xf]
    %s1735 = scalar_lea.vmem %s4, 5
    %v1736 = vld [vmem:[%s1735] ss:$8 sm:$0xf]
    %s1737 = scalar_lea.vmem %s4, 6
    %v1738 = vld [vmem:[%s1737] ss:$8 sm:$0xf]
    %s1739 = scalar_lea.vmem %s4, 7
    %v1740 = vld [vmem:[%s1739] ss:$8 sm:$0x3]
    %s1741 = scalar_lea.vmem %s4, 32
    %v1742 = vld [vmem:[%s1741] ss:$8 sm:$0x3]
    %s1743 = scalar_lea.vmem %s4, 33
    %v1744 = vld [vmem:[%s1743] ss:$8 sm:$0x3]
    %s1745 = scalar_lea.vmem %s4, 34
    %v1746 = vld [vmem:[%s1745] ss:$8 sm:$0x3]
    %v1747 = vld [vmem:[%s4 + $0x23] ss:$0 sm:$0xff]
    %s1748 = smul.u32 4, 16
    %s1749 = smul.u32 %s1748, 4
    %s1750 = sshll.u32 %s1749, 4
    %1751 = dma.done [#allocation6], %s1750
    %s1752 = smul.u32 4, 48
    %s1753 = smul.u32 %s1752, 4
    %s1754 = sshll.u32 %s1753, 4
    %1755 = dma.done %s64, %s1754
    %v1756 = vld [vmem:[#allocation2] sm:$0xff]
    %v1757 = vld [vmem:[#allocation2 + $0x8] sm:$0xff]
    %v1758 = vld [vmem:[#allocation2 + $0x10] sm:$0xff]
    %v1759 = vld [vmem:[#allocation2 + $0x18] sm:$0xff]
    %v1760 = vld [vmem:[#allocation2 + $0x20] sm:$0xff]
    %v1761 = vld [vmem:[#allocation2 + $0x28] sm:$0xff]
    %v1762 = vld [vmem:[#allocation2 + $0x30] sm:$0xff]
    %v1763 = vld [vmem:[#allocation2 + $0x38] sm:$0xff]
    %v1764 = vld [vmem:[#allocation2 + $0x40] sm:$0xff]
    %v1765 = vld [vmem:[#allocation2 + $0x48] sm:$0xff]
    %v1766 = vld [vmem:[#allocation2 + $0x50] sm:$0xff]
    %v1767 = vld [vmem:[#allocation2 + $0x58] sm:$0xff]
    %v1768 = vld [vmem:[#allocation2 + $0x60] sm:$0xff]
    %v1769 = vld [vmem:[#allocation2 + $0x68] sm:$0xff]
    %v1770 = vld [vmem:[#allocation2 + $0x70] sm:$0xff]
    %v1771 = vld [vmem:[#allocation2 + $0x78] sm:$0xff]
    %v1772 = vld [vmem:[#allocation2 + $0x80] sm:$0xff]
    %v1773 = vld [vmem:[#allocation2 + $0x88] sm:$0xff]
    %v1774 = vld [vmem:[#allocation2 + $0x90] sm:$0xff]
    %v1775 = vld [vmem:[#allocation2 + $0x98] sm:$0xff]
    %v1776 = vld [vmem:[#allocation2 + $0xa0] sm:$0xff]
    %v1777 = vld [vmem:[#allocation2 + $0xa8] sm:$0xff]
    %v1778 = vld [vmem:[#allocation2 + $0xb0] sm:$0xff]
    %v1779 = vld [vmem:[#allocation2 + $0xb8] sm:$0xff]
    %v1780 = vld [vmem:[#allocation2 + $0xc0] sm:$0xff]
    %v1781 = vld [vmem:[#allocation2 + $0xc8] sm:$0xff]
    %v1782 = vld [vmem:[#allocation2 + $0xd0] sm:$0xff]
    %v1783 = vld [vmem:[#allocation2 + $0xd8] sm:$0xff]
    %v1784 = vld [vmem:[#allocation2 + $0xe0] sm:$0xff]
    %v1785 = vld [vmem:[#allocation2 + $0xe8] sm:$0xff]
    %v1786 = vld [vmem:[#allocation2 + $0xf0] sm:$0xff]
    %v1787 = vld [vmem:[#allocation2 + $0xf8] sm:$0xff]
    %v1788 = vld [vmem:[#allocation3] sm:$0xff]
    %v1789 = vld [vmem:[#allocation3 + $0x8] sm:$0xff]
    %v1790 = vld [vmem:[#allocation3 + $0x10] sm:$0xff]
    %v1791 = vld [vmem:[#allocation3 + $0x18] sm:$0xff]
    %v1792 = vld [vmem:[#allocation3 + $0x20] sm:$0xff]
    %v1793 = vld [vmem:[#allocation3 + $0x28] sm:$0xff]
    %v1794 = vld [vmem:[#allocation3 + $0x30] sm:$0xff]
    %v1795 = vld [vmem:[#allocation3 + $0x38] sm:$0xff]
    %v1796 = vld [vmem:[#allocation3 + $0x40] sm:$0xff]
    %v1797 = vld [vmem:[#allocation3 + $0x48] sm:$0xff]
    %v1798 = vld [vmem:[#allocation3 + $0x50] sm:$0xff]
    %v1799 = vld [vmem:[#allocation3 + $0x58] sm:$0xff]
    %v1800 = vld [vmem:[#allocation3 + $0x60] sm:$0xff]
    %v1801 = vld [vmem:[#allocation3 + $0x68] sm:$0xff]
    %v1802 = vld [vmem:[#allocation3 + $0x70] sm:$0xff]
    %v1803 = vld [vmem:[#allocation3 + $0x78] sm:$0xff]
    %v1804 = vld [vmem:[#allocation3 + $0x80] sm:$0xff]
    %v1805 = vld [vmem:[#allocation3 + $0x88] sm:$0xff]
    %v1806 = vld [vmem:[#allocation3 + $0x90] sm:$0xff]
    %v1807 = vld [vmem:[#allocation3 + $0x98] sm:$0xff]
    %v1808 = vld [vmem:[#allocation3 + $0xa0] sm:$0xff]
    %v1809 = vld [vmem:[#allocation3 + $0xa8] sm:$0xff]
    %v1810 = vld [vmem:[#allocation3 + $0xb0] sm:$0xff]
    %v1811 = vld [vmem:[#allocation3 + $0xb8] sm:$0xff]
    %v1812 = vld [vmem:[#allocation3 + $0xc0] sm:$0xff]
    %v1813 = vld [vmem:[#allocation3 + $0xc8] sm:$0xff]
    %v1814 = vld [vmem:[#allocation3 + $0xd0] sm:$0xff]
    %v1815 = vld [vmem:[#allocation3 + $0xd8] sm:$0xff]
    %v1816 = vld [vmem:[#allocation3 + $0xe0] sm:$0xff]
    %v1817 = vld [vmem:[#allocation3 + $0xe8] sm:$0xff]
    %v1818 = vld [vmem:[#allocation3 + $0xf0] sm:$0xff]
    %v1819 = vld [vmem:[#allocation3 + $0xf8] sm:$0xff]
    %v1820 = vld [vmem:[#allocation3 + $0x100] sm:$0xff]
    %v1821 = vld [vmem:[#allocation3 + $0x108] sm:$0xff]
    %v1822 = vld [vmem:[#allocation3 + $0x110] sm:$0xff]
    %v1823 = vld [vmem:[#allocation3 + $0x118] sm:$0xff]
    %v1824 = vld [vmem:[#allocation3 + $0x120] sm:$0xff]
    %v1825 = vld [vmem:[#allocation3 + $0x128] sm:$0xff]
    %v1826 = vld [vmem:[#allocation3 + $0x130] sm:$0xff]
    %v1827 = vld [vmem:[#allocation3 + $0x138] sm:$0xff]
    %v1828 = vld [vmem:[#allocation3 + $0x140] sm:$0xff]
    %v1829 = vld [vmem:[#allocation3 + $0x148] sm:$0xff]
    %v1830 = vld [vmem:[#allocation3 + $0x150] sm:$0xff]
    %v1831 = vld [vmem:[#allocation3 + $0x158] sm:$0xff]
    %v1832 = vld [vmem:[#allocation3 + $0x160] sm:$0xff]
    %v1833 = vld [vmem:[#allocation3 + $0x168] sm:$0xff]
    %v1834 = vld [vmem:[#allocation3 + $0x170] sm:$0xff]
    %v1835 = vld [vmem:[#allocation3 + $0x178] sm:$0xff]
    %v1836 = vld [vmem:[#allocation3 + $0x180] sm:$0xff]
    %v1837 = vld [vmem:[#allocation3 + $0x188] sm:$0xff]
    %v1838 = vld [vmem:[#allocation3 + $0x190] sm:$0xff]
    %v1839 = vld [vmem:[#allocation3 + $0x198] sm:$0xff]
    %v1840 = vld [vmem:[#allocation3 + $0x1a0] sm:$0xff]
    %v1841 = vld [vmem:[#allocation3 + $0x1a8] sm:$0xff]
    %v1842 = vld [vmem:[#allocation3 + $0x1b0] sm:$0xff]
    %v1843 = vld [vmem:[#allocation3 + $0x1b8] sm:$0xff]
    %v1844 = vld [vmem:[#allocation3 + $0x1c0] sm:$0xff]
    %v1845 = vld [vmem:[#allocation3 + $0x1c8] sm:$0xff]
    %v1846 = vld [vmem:[#allocation3 + $0x1d0] sm:$0xff]
    %v1847 = vld [vmem:[#allocation3 + $0x1d8] sm:$0xff]
    %v1848 = vld [vmem:[#allocation3 + $0x1e0] sm:$0xff]
    %v1849 = vld [vmem:[#allocation3 + $0x1e8] sm:$0xff]
    %v1850 = vld [vmem:[#allocation3 + $0x1f0] sm:$0xff]
    %v1851 = vld [vmem:[#allocation3 + $0x1f8] sm:$0xff]
    %v1852 = vld [vmem:[#allocation3 + $0x200] sm:$0xff]
    %v1853 = vld [vmem:[#allocation3 + $0x208] sm:$0xff]
    %v1854 = vld [vmem:[#allocation3 + $0x210] sm:$0xff]
    %v1855 = vld [vmem:[#allocation3 + $0x218] sm:$0xff]
    %v1856 = vld [vmem:[#allocation3 + $0x220] sm:$0xff]
    %v1857 = vld [vmem:[#allocation3 + $0x228] sm:$0xff]
    %v1858 = vld [vmem:[#allocation3 + $0x230] sm:$0xff]
    %v1859 = vld [vmem:[#allocation3 + $0x238] sm:$0xff]
    %v1860 = vld [vmem:[#allocation3 + $0x240] sm:$0xff]
    %v1861 = vld [vmem:[#allocation3 + $0x248] sm:$0xff]
    %v1862 = vld [vmem:[#allocation3 + $0x250] sm:$0xff]
    %v1863 = vld [vmem:[#allocation3 + $0x258] sm:$0xff]
    %v1864 = vld [vmem:[#allocation3 + $0x260] sm:$0xff]
    %v1865 = vld [vmem:[#allocation3 + $0x268] sm:$0xff]
    %v1866 = vld [vmem:[#allocation3 + $0x270] sm:$0xff]
    %v1867 = vld [vmem:[#allocation3 + $0x278] sm:$0xff]
    %v1868 = vld [vmem:[#allocation3 + $0x280] sm:$0xff]
    %v1869 = vld [vmem:[#allocation3 + $0x288] sm:$0xff]
    %v1870 = vld [vmem:[#allocation3 + $0x290] sm:$0xff]
    %v1871 = vld [vmem:[#allocation3 + $0x298] sm:$0xff]
    %v1872 = vld [vmem:[#allocation3 + $0x2a0] sm:$0xff]
    %v1873 = vld [vmem:[#allocation3 + $0x2a8] sm:$0xff]
    %v1874 = vld [vmem:[#allocation3 + $0x2b0] sm:$0xff]
    %v1875 = vld [vmem:[#allocation3 + $0x2b8] sm:$0xff]
    %v1876 = vld [vmem:[#allocation3 + $0x2c0] sm:$0xff]
    %v1877 = vld [vmem:[#allocation3 + $0x2c8] sm:$0xff]
    %v1878 = vld [vmem:[#allocation3 + $0x2d0] sm:$0xff]
    %v1879 = vld [vmem:[#allocation3 + $0x2d8] sm:$0xff]
    %v1880 = vld [vmem:[#allocation3 + $0x2e0] sm:$0xff]
    %v1881 = vld [vmem:[#allocation3 + $0x2e8] sm:$0xff]
    %v1882 = vld [vmem:[#allocation3 + $0x2f0] sm:$0xff]
    %v1883 = vld [vmem:[#allocation3 + $0x2f8] sm:$0xff]
    %v1980 = vunpack.c.l.b16 %v1788
    %v1981 = vunpack.c.h.b16 %v1788
    %v1982 = vunpack.c.l.b16 %v1789
    %v1983 = vunpack.c.h.b16 %v1789
    %v1984 = vunpack.c.l.b16 %v1790
    %v1985 = vunpack.c.h.b16 %v1790
    %v1986 = vunpack.c.l.b16 %v1791
    %v1987 = vunpack.c.h.b16 %v1791
    %v1988 = vunpack.c.l.b16 %v1792
    %v1989 = vunpack.c.h.b16 %v1792
    %v1990 = vunpack.c.l.b16 %v1793
    %v1991 = vunpack.c.h.b16 %v1793
    %v1992 = vunpack.c.l.b16 %v1794
    %v1993 = vunpack.c.h.b16 %v1794
    %v1994 = vunpack.c.l.b16 %v1795
    %v1995 = vunpack.c.h.b16 %v1795
    %v1996 = vunpack.c.l.b16 %v1796
    %v1997 = vunpack.c.h.b16 %v1796
    %v1998 = vunpack.c.l.b16 %v1797
    %v1999 = vunpack.c.h.b16 %v1797
    %v2000 = vunpack.c.l.b16 %v1798
    %v2001 = vunpack.c.h.b16 %v1798
    %v2002 = vunpack.c.l.b16 %v1799
    %v2003 = vunpack.c.h.b16 %v1799
    %v2004 = vunpack.c.l.b16 %v1800
    %v2005 = vunpack.c.h.b16 %v1800
    %v2006 = vunpack.c.l.b16 %v1801
    %v2007 = vunpack.c.h.b16 %v1801
    %v2008 = vunpack.c.l.b16 %v1802
    %v2009 = vunpack.c.h.b16 %v1802
    %v2010 = vunpack.c.l.b16 %v1803
    %v2011 = vunpack.c.h.b16 %v1803
    %v2012 = vunpack.c.l.b16 %v1804
    %v2013 = vunpack.c.h.b16 %v1804
    %v2014 = vunpack.c.l.b16 %v1805
    %v2015 = vunpack.c.h.b16 %v1805
    %v2016 = vunpack.c.l.b16 %v1806
    %v2017 = vunpack.c.h.b16 %v1806
    %v2018 = vunpack.c.l.b16 %v1807
    %v2019 = vunpack.c.h.b16 %v1807
    %v2020 = vunpack.c.l.b16 %v1808
    %v2021 = vunpack.c.h.b16 %v1808
    %v2022 = vunpack.c.l.b16 %v1809
    %v2023 = vunpack.c.h.b16 %v1809
    %v2024 = vunpack.c.l.b16 %v1810
    %v2025 = vunpack.c.h.b16 %v1810
    %v2026 = vunpack.c.l.b16 %v1811
    %v2027 = vunpack.c.h.b16 %v1811
    %v2028 = vunpack.c.l.b16 %v1812
    %v2029 = vunpack.c.h.b16 %v1812
    %v2030 = vunpack.c.l.b16 %v1813
    %v2031 = vunpack.c.h.b16 %v1813
    %v2032 = vunpack.c.l.b16 %v1814
    %v2033 = vunpack.c.h.b16 %v1814
    %v2034 = vunpack.c.l.b16 %v1815
    %v2035 = vunpack.c.h.b16 %v1815
    %v2036 = vunpack.c.l.b16 %v1816
    %v2037 = vunpack.c.h.b16 %v1816
    %v2038 = vunpack.c.l.b16 %v1817
    %v2039 = vunpack.c.h.b16 %v1817
    %v2040 = vunpack.c.l.b16 %v1818
    %v2041 = vunpack.c.h.b16 %v1818
    %v2042 = vunpack.c.l.b16 %v1819
    %v2043 = vunpack.c.h.b16 %v1819
    %v2044 = vunpack.c.l.b16 %v1820
    %v2045 = vunpack.c.h.b16 %v1820
    %v2046 = vunpack.c.l.b16 %v1821
    %v2047 = vunpack.c.h.b16 %v1821
    %v2048 = vunpack.c.l.b16 %v1822
    %v2049 = vunpack.c.h.b16 %v1822
    %v2050 = vunpack.c.l.b16 %v1823
    %v2051 = vunpack.c.h.b16 %v1823
    %v2052 = vunpack.c.l.b16 %v1824
    %v2053 = vunpack.c.h.b16 %v1824
    %v2054 = vunpack.c.l.b16 %v1825
    %v2055 = vunpack.c.h.b16 %v1825
    %v2056 = vunpack.c.l.b16 %v1826
    %v2057 = vunpack.c.h.b16 %v1826
    %v2058 = vunpack.c.l.b16 %v1827
    %v2059 = vunpack.c.h.b16 %v1827
    %v2060 = vunpack.c.l.b16 %v1828
    %v2061 = vunpack.c.h.b16 %v1828
    %v2062 = vunpack.c.l.b16 %v1829
    %v2063 = vunpack.c.h.b16 %v1829
    %v2064 = vunpack.c.l.b16 %v1830
    %v2065 = vunpack.c.h.b16 %v1830
    %v2066 = vunpack.c.l.b16 %v1831
    %v2067 = vunpack.c.h.b16 %v1831
    %v2068 = vunpack.c.l.b16 %v1832
    %v2069 = vunpack.c.h.b16 %v1832
    %v2070 = vunpack.c.l.b16 %v1833
    %v2071 = vunpack.c.h.b16 %v1833
    %v2072 = vunpack.c.l.b16 %v1834
    %v2073 = vunpack.c.h.b16 %v1834
    %v2074 = vunpack.c.l.b16 %v1835
    %v2075 = vunpack.c.h.b16 %v1835
    %v2076 = vunpack.c.l.b16 %v1836
    %v2077 = vunpack.c.h.b16 %v1836
    %v2078 = vunpack.c.l.b16 %v1837
    %v2079 = vunpack.c.h.b16 %v1837
    %v2080 = vunpack.c.l.b16 %v1838
    %v2081 = vunpack.c.h.b16 %v1838
    %v2082 = vunpack.c.l.b16 %v1839
    %v2083 = vunpack.c.h.b16 %v1839
    %v2084 = vunpack.c.l.b16 %v1840
    %v2085 = vunpack.c.h.b16 %v1840
    %v2086 = vunpack.c.l.b16 %v1841
    %v2087 = vunpack.c.h.b16 %v1841
    %v2088 = vunpack.c.l.b16 %v1842
    %v2089 = vunpack.c.h.b16 %v1842
    %v2090 = vunpack.c.l.b16 %v1843
    %v2091 = vunpack.c.h.b16 %v1843
    %v2092 = vunpack.c.l.b16 %v1844
    %v2093 = vunpack.c.h.b16 %v1844
    %v2094 = vunpack.c.l.b16 %v1845
    %v2095 = vunpack.c.h.b16 %v1845
    %v2096 = vunpack.c.l.b16 %v1846
    %v2097 = vunpack.c.h.b16 %v1846
    %v2098 = vunpack.c.l.b16 %v1847
    %v2099 = vunpack.c.h.b16 %v1847
    %v2100 = vunpack.c.l.b16 %v1848
    %v2101 = vunpack.c.h.b16 %v1848
    %v2102 = vunpack.c.l.b16 %v1849
    %v2103 = vunpack.c.h.b16 %v1849
    %v2104 = vunpack.c.l.b16 %v1850
    %v2105 = vunpack.c.h.b16 %v1850
    %v2106 = vunpack.c.l.b16 %v1851
    %v2107 = vunpack.c.h.b16 %v1851
    %v2108 = vunpack.c.l.b16 %v1852
    %v2109 = vunpack.c.h.b16 %v1852
    %v2110 = vunpack.c.l.b16 %v1853
    %v2111 = vunpack.c.h.b16 %v1853
    %v2112 = vunpack.c.l.b16 %v1854
    %v2113 = vunpack.c.h.b16 %v1854
    %v2114 = vunpack.c.l.b16 %v1855
    %v2115 = vunpack.c.h.b16 %v1855
    %v2116 = vunpack.c.l.b16 %v1856
    %v2117 = vunpack.c.h.b16 %v1856
    %v2118 = vunpack.c.l.b16 %v1857
    %v2119 = vunpack.c.h.b16 %v1857
    %v2120 = vunpack.c.l.b16 %v1858
    %v2121 = vunpack.c.h.b16 %v1858
    %v2122 = vunpack.c.l.b16 %v1859
    %v2123 = vunpack.c.h.b16 %v1859
    %v2124 = vunpack.c.l.b16 %v1860
    %v2125 = vunpack.c.h.b16 %v1860
    %v2126 = vunpack.c.l.b16 %v1861
    %v2127 = vunpack.c.h.b16 %v1861
    %v2128 = vunpack.c.l.b16 %v1862
    %v2129 = vunpack.c.h.b16 %v1862
    %v2130 = vunpack.c.l.b16 %v1863
    %v2131 = vunpack.c.h.b16 %v1863
    %v2132 = vunpack.c.l.b16 %v1864
    %v2133 = vunpack.c.h.b16 %v1864
    %v2134 = vunpack.c.l.b16 %v1865
    %v2135 = vunpack.c.h.b16 %v1865
    %v2136 = vunpack.c.l.b16 %v1866
    %v2137 = vunpack.c.h.b16 %v1866
    %v2138 = vunpack.c.l.b16 %v1867
    %v2139 = vunpack.c.h.b16 %v1867
    %v2140 = vunpack.c.l.b16 %v1868
    %v2141 = vunpack.c.h.b16 %v1868
    %v2142 = vunpack.c.l.b16 %v1869
    %v2143 = vunpack.c.h.b16 %v1869
    %v2144 = vunpack.c.l.b16 %v1870
    %v2145 = vunpack.c.h.b16 %v1870
    %v2146 = vunpack.c.l.b16 %v1871
    %v2147 = vunpack.c.h.b16 %v1871
    %v2148 = vunpack.c.l.b16 %v1872
    %v2149 = vunpack.c.h.b16 %v1872
    %v2150 = vunpack.c.l.b16 %v1873
    %v2151 = vunpack.c.h.b16 %v1873
    %v2152 = vunpack.c.l.b16 %v1874
    %v2153 = vunpack.c.h.b16 %v1874
    %v2154 = vunpack.c.l.b16 %v1875
    %v2155 = vunpack.c.h.b16 %v1875
    %v2156 = vunpack.c.l.b16 %v1876
    %v2157 = vunpack.c.h.b16 %v1876
    %v2158 = vunpack.c.l.b16 %v1877
    %v2159 = vunpack.c.h.b16 %v1877
    %v2160 = vunpack.c.l.b16 %v1878
    %v2161 = vunpack.c.h.b16 %v1878
    %v2162 = vunpack.c.l.b16 %v1879
    %v2163 = vunpack.c.h.b16 %v1879
    %v2164 = vunpack.c.l.b16 %v1880
    %v2165 = vunpack.c.h.b16 %v1880
    %v2166 = vunpack.c.l.b16 %v1881
    %v2167 = vunpack.c.h.b16 %v1881
    %v2168 = vunpack.c.l.b16 %v1882
    %v2169 = vunpack.c.h.b16 %v1882
    %v2170 = vunpack.c.l.b16 %v1883
    %v2171 = vunpack.c.h.b16 %v1883
    %v2172 = vpack.c.b16 %v1984, %v1980
    %v2173 = vpack.c.b16 %v1985, %v1981
    %v2174 = vpack.c.b16 %v1986, %v1982
    %v2175 = vpack.c.b16 %v1987, %v1983
    %v2176 = vpack.c.b16 %v1992, %v1988
    %v2177 = vpack.c.b16 %v1993, %v1989
    %v2178 = vpack.c.b16 %v1994, %v1990
    %v2179 = vpack.c.b16 %v1995, %v1991
    %v2180 = vpack.c.b16 %v2000, %v1996
    %v2181 = vpack.c.b16 %v2001, %v1997
    %v2182 = vpack.c.b16 %v2002, %v1998
    %v2183 = vpack.c.b16 %v2003, %v1999
    %v2184 = vpack.c.b16 %v2008, %v2004
    %v2185 = vpack.c.b16 %v2009, %v2005
    %v2186 = vpack.c.b16 %v2010, %v2006
    %v2187 = vpack.c.b16 %v2011, %v2007
    %v2188 = vpack.c.b16 %v2016, %v2012
    %v2189 = vpack.c.b16 %v2017, %v2013
    %v2190 = vpack.c.b16 %v2018, %v2014
    %v2191 = vpack.c.b16 %v2019, %v2015
    %v2192 = vpack.c.b16 %v2024, %v2020
    %v2193 = vpack.c.b16 %v2025, %v2021
    %v2194 = vpack.c.b16 %v2026, %v2022
    %v2195 = vpack.c.b16 %v2027, %v2023
    %v2196 = vpack.c.b16 %v2032, %v2028
    %v2197 = vpack.c.b16 %v2033, %v2029
    %v2198 = vpack.c.b16 %v2034, %v2030
    %v2199 = vpack.c.b16 %v2035, %v2031
    %v2200 = vpack.c.b16 %v2040, %v2036
    %v2201 = vpack.c.b16 %v2041, %v2037
    %v2202 = vpack.c.b16 %v2042, %v2038
    %v2203 = vpack.c.b16 %v2043, %v2039
    %v2204 = vpack.c.b16 %v2048, %v2044
    %v2205 = vpack.c.b16 %v2049, %v2045
    %v2206 = vpack.c.b16 %v2050, %v2046
    %v2207 = vpack.c.b16 %v2051, %v2047
    %v2208 = vpack.c.b16 %v2056, %v2052
    %v2209 = vpack.c.b16 %v2057, %v2053
    %v2210 = vpack.c.b16 %v2058, %v2054
    %v2211 = vpack.c.b16 %v2059, %v2055
    %v2212 = vpack.c.b16 %v2064, %v2060
    %v2213 = vpack.c.b16 %v2065, %v2061
    %v2214 = vpack.c.b16 %v2066, %v2062
    %v2215 = vpack.c.b16 %v2067, %v2063
    %v2216 = vpack.c.b16 %v2072, %v2068
    %v2217 = vpack.c.b16 %v2073, %v2069
    %v2218 = vpack.c.b16 %v2074, %v2070
    %v2219 = vpack.c.b16 %v2075, %v2071
    %v2220 = vpack.c.b16 %v2080, %v2076
    %v2221 = vpack.c.b16 %v2081, %v2077
    %v2222 = vpack.c.b16 %v2082, %v2078
    %v2223 = vpack.c.b16 %v2083, %v2079
    %v2224 = vpack.c.b16 %v2088, %v2084
    %v2225 = vpack.c.b16 %v2089, %v2085
    %v2226 = vpack.c.b16 %v2090, %v2086
    %v2227 = vpack.c.b16 %v2091, %v2087
    %v2228 = vpack.c.b16 %v2096, %v2092
    %v2229 = vpack.c.b16 %v2097, %v2093
    %v2230 = vpack.c.b16 %v2098, %v2094
    %v2231 = vpack.c.b16 %v2099, %v2095
    %v2232 = vpack.c.b16 %v2104, %v2100
    %v2233 = vpack.c.b16 %v2105, %v2101
    %v2234 = vpack.c.b16 %v2106, %v2102
    %v2235 = vpack.c.b16 %v2107, %v2103
    %v2236 = vpack.c.b16 %v2112, %v2108
    %v2237 = vpack.c.b16 %v2113, %v2109
    %v2238 = vpack.c.b16 %v2114, %v2110
    %v2239 = vpack.c.b16 %v2115, %v2111
    %v2240 = vpack.c.b16 %v2120, %v2116
    %v2241 = vpack.c.b16 %v2121, %v2117
    %v2242 = vpack.c.b16 %v2122, %v2118
    %v2243 = vpack.c.b16 %v2123, %v2119
    %v2244 = vpack.c.b16 %v2128, %v2124
    %v2245 = vpack.c.b16 %v2129, %v2125
    %v2246 = vpack.c.b16 %v2130, %v2126
    %v2247 = vpack.c.b16 %v2131, %v2127
    %v2248 = vpack.c.b16 %v2136, %v2132
    %v2249 = vpack.c.b16 %v2137, %v2133
    %v2250 = vpack.c.b16 %v2138, %v2134
    %v2251 = vpack.c.b16 %v2139, %v2135
    %v2252 = vpack.c.b16 %v2144, %v2140
    %v2253 = vpack.c.b16 %v2145, %v2141
    %v2254 = vpack.c.b16 %v2146, %v2142
    %v2255 = vpack.c.b16 %v2147, %v2143
    %v2256 = vpack.c.b16 %v2152, %v2148
    %v2257 = vpack.c.b16 %v2153, %v2149
    %v2258 = vpack.c.b16 %v2154, %v2150
    %v2259 = vpack.c.b16 %v2155, %v2151
    %v2260 = vpack.c.b16 %v2160, %v2156
    %v2261 = vpack.c.b16 %v2161, %v2157
    %v2262 = vpack.c.b16 %v2162, %v2158
    %v2263 = vpack.c.b16 %v2163, %v2159
    %v2264 = vpack.c.b16 %v2168, %v2164
    %v2265 = vpack.c.b16 %v2169, %v2165
    %v2266 = vpack.c.b16 %v2170, %v2166
    %v2267 = vpack.c.b16 %v2171, %v2167
    %2364 = vmatprep.subr.bf16.mxu0 %v2201
    %2365 = vmatpush1.bf16.msra.mxu0 %v2200
    %2366 = vmatprep.subr.bf16.mxu0 %v2197
    %2367 = vmatpush1.bf16.msra.mxu0 %v2196
    %2368 = vmatprep.subr.bf16.mxu0 %v2193
    %2369 = vmatpush1.bf16.msra.mxu0 %v2192
    %2370 = vmatprep.subr.bf16.mxu0 %v2189
    %2371 = vmatpush1.bf16.msra.mxu0 %v2188
    %2372 = vmatprep.subr.bf16.mxu0 %v2185
    %2373 = vmatpush1.bf16.msra.mxu0 %v2184
    %2374 = vmatprep.subr.bf16.mxu0 %v2181
    %2375 = vmatpush1.bf16.msra.mxu0 %v2180
    %2376 = vmatprep.subr.bf16.mxu0 %v2177
    %2377 = vmatpush1.bf16.msra.mxu0 %v2176
    %2378 = vmatprep.subr.bf16.mxu0 %v2173
    %2379 = vmatpush1.bf16.msra.mxu0 %v2172
    %2380 = vmatprep.subr.bf16.mxu0 %v2233
    %2381 = vmatpush2.bf16.msra.mxu0 %v2232
    %2382 = vmatprep.subr.bf16.mxu0 %v2229
    %2383 = vmatpush2.bf16.msra.mxu0 %v2228
    %2384 = vmatprep.subr.bf16.mxu0 %v2225
    %2385 = vmatpush2.bf16.msra.mxu0 %v2224
    %2386 = vmatprep.subr.bf16.mxu0 %v2221
    %2387 = vmatpush2.bf16.msra.mxu0 %v2220
    %2388 = vmatprep.subr.bf16.mxu0 %v2217
    %2389 = vmatpush2.bf16.msra.mxu0 %v2216
    %2390 = vmatprep.subr.bf16.mxu0 %v2213
    %2391 = vmatpush2.bf16.msra.mxu0 %v2212
    %2392 = vmatprep.subr.bf16.mxu0 %v2209
    %2393 = vmatpush2.bf16.msra.mxu0 %v2208
    %2394 = vmatprep.subr.bf16.mxu0 %v2205
    %2395 = vmatpush2.bf16.msra.mxu0 %v2204
    %2396 = vmatprep.mubr.bf16.mxu0 %v1724
    %2397 = vmatmul.mubr.bf16.gmra.mxu0 %v1723
    %v2398 = vpop.f32.mrf.mxu0
    %v2399 = vadd.f32 0.0, %v2398
    %v2400 = vpop.f32.mrf.mxu0
    %v2401 = vadd.f32 0.0, %v2400
    %v2402 = vpop.f32.mrf.mxu0
    %v2403 = vpop.f32.mrf.mxu0
    %2404 = vdwg.mxu0
    %2405 = vmatprep.subr.bf16.mxu0 %v2265
    %2406 = vmatpush1.bf16.msra.mxu0 %v2264
    %2407 = vmatprep.subr.bf16.mxu0 %v2261
    %2408 = vmatpush1.bf16.msra.mxu0 %v2260
    %2409 = vmatprep.subr.bf16.mxu0 %v2257
    %2410 = vmatpush1.bf16.msra.mxu0 %v2256
    %2411 = vmatprep.subr.bf16.mxu0 %v2253
    %2412 = vmatpush1.bf16.msra.mxu0 %v2252
    %2413 = vmatprep.subr.bf16.mxu0 %v2249
    %2414 = vmatpush1.bf16.msra.mxu0 %v2248
    %2415 = vmatprep.subr.bf16.mxu0 %v2245
    %2416 = vmatpush1.bf16.msra.mxu0 %v2244
    %2417 = vmatprep.subr.bf16.mxu0 %v2241
    %2418 = vmatpush1.bf16.msra.mxu0 %v2240
    %2419 = vmatprep.subr.bf16.mxu0 %v2237
    %2420 = vmatpush1.bf16.msra.mxu0 %v2236
    %2421 = vmatprep.subr.bf16.mxu0 0
    %2422 = vmatpush2.bf16.msra.mxu0 0
    %2423 = vmatprep.subr.bf16.mxu0 0
    %2424 = vmatpush2.bf16.msra.mxu0 0
    %2425 = vmatprep.subr.bf16.mxu0 0
    %2426 = vmatpush2.bf16.msra.mxu0 0
    %2427 = vmatprep.subr.bf16.mxu0 0
    %2428 = vmatpush2.bf16.msra.mxu0 0
    %2429 = vmatprep.subr.bf16.mxu0 0
    %2430 = vmatpush2.bf16.msra.mxu0 0
    %2431 = vmatprep.subr.bf16.mxu0 0
    %2432 = vmatpush2.bf16.msra.mxu0 0
    %2433 = vmatprep.subr.bf16.mxu0 0
    %2434 = vmatpush2.bf16.msra.mxu0 0
    %2435 = vmatprep.subr.bf16.mxu0 0
    %2436 = vmatpush2.bf16.msra.mxu0 0
    %2437 = vmatprep.mubr.bf16.mxu0 0
    %2438 = vmatmul.mubr.bf16.gmra.mxu0 %v1725
    %v2439 = vpop.f32.mrf.mxu0
    %v2440 = vadd.f32 %v2399, %v2439
    %v2441 = vpop.f32.mrf.mxu0
    %v2442 = vadd.f32 %v2401, %v2441
    %v2443 = vpop.f32.mrf.mxu0
    %v2444 = vpop.f32.mrf.mxu0
    %2445 = vdwg.mxu0
    %2446 = vmatprep.subr.bf16.mxu0 %v2203
    %2447 = vmatpush1.bf16.msra.mxu0 %v2202
    %2448 = vmatprep.subr.bf16.mxu0 %v2199
    %2449 = vmatpush1.bf16.msra.mxu0 %v2198
    %2450 = vmatprep.subr.bf16.mxu0 %v2195
    %2451 = vmatpush1.bf16.msra.mxu0 %v2194
    %2452 = vmatprep.subr.bf16.mxu0 %v2191
    %2453 = vmatpush1.bf16.msra.mxu0 %v2190
    %2454 = vmatprep.subr.bf16.mxu0 %v2187
    %2455 = vmatpush1.bf16.msra.mxu0 %v2186
    %2456 = vmatprep.subr.bf16.mxu0 %v2183
    %2457 = vmatpush1.bf16.msra.mxu0 %v2182
    %2458 = vmatprep.subr.bf16.mxu0 %v2179
    %2459 = vmatpush1.bf16.msra.mxu0 %v2178
    %2460 = vmatprep.subr.bf16.mxu0 %v2175
    %2461 = vmatpush1.bf16.msra.mxu0 %v2174
    %2462 = vmatprep.subr.bf16.mxu0 %v2235
    %2463 = vmatpush2.bf16.msra.mxu0 %v2234
    %2464 = vmatprep.subr.bf16.mxu0 %v2231
    %2465 = vmatpush2.bf16.msra.mxu0 %v2230
    %2466 = vmatprep.subr.bf16.mxu0 %v2227
    %2467 = vmatpush2.bf16.msra.mxu0 %v2226
    %2468 = vmatprep.subr.bf16.mxu0 %v2223
    %2469 = vmatpush2.bf16.msra.mxu0 %v2222
    %2470 = vmatprep.subr.bf16.mxu0 %v2219
    %2471 = vmatpush2.bf16.msra.mxu0 %v2218
    %2472 = vmatprep.subr.bf16.mxu0 %v2215
    %2473 = vmatpush2.bf16.msra.mxu0 %v2214
    %2474 = vmatprep.subr.bf16.mxu0 %v2211
    %2475 = vmatpush2.bf16.msra.mxu0 %v2210
    %2476 = vmatprep.subr.bf16.mxu0 %v2207
    %2477 = vmatpush2.bf16.msra.mxu0 %v2206
    %2478 = vmatprep.mubr.bf16.mxu0 %v1724
    %2479 = vmatmul.mubr.bf16.gmra.mxu0 %v1723
    %v2480 = vpop.f32.mrf.mxu0
    %v2481 = vadd.f32 0.0, %v2480
    %v2482 = vpop.f32.mrf.mxu0
    %v2483 = vadd.f32 0.0, %v2482
    %v2484 = vpop.f32.mrf.mxu0
    %v2485 = vpop.f32.mrf.mxu0
    %2486 = vdwg.mxu0
    %2487 = vmatprep.subr.bf16.mxu0 %v2267
    %2488 = vmatpush1.bf16.msra.mxu0 %v2266
    %2489 = vmatprep.subr.bf16.mxu0 %v2263
    %2490 = vmatpush1.bf16.msra.mxu0 %v2262
    %2491 = vmatprep.subr.bf16.mxu0 %v2259
    %2492 = vmatpush1.bf16.msra.mxu0 %v2258
    %2493 = vmatprep.subr.bf16.mxu0 %v2255
    %2494 = vmatpush1.bf16.msra.mxu0 %v2254
    %2495 = vmatprep.subr.bf16.mxu0 %v2251
    %2496 = vmatpush1.bf16.msra.mxu0 %v2250
    %2497 = vmatprep.subr.bf16.mxu0 %v2247
    %2498 = vmatpush1.bf16.msra.mxu0 %v2246
    %2499 = vmatprep.subr.bf16.mxu0 %v2243
    %2500 = vmatpush1.bf16.msra.mxu0 %v2242
    %2501 = vmatprep.subr.bf16.mxu0 %v2239
    %2502 = vmatpush1.bf16.msra.mxu0 %v2238
    %2503 = vmatprep.subr.bf16.mxu0 0
    %2504 = vmatpush2.bf16.msra.mxu0 0
    %2505 = vmatprep.subr.bf16.mxu0 0
    %2506 = vmatpush2.bf16.msra.mxu0 0
    %2507 = vmatprep.subr.bf16.mxu0 0
    %2508 = vmatpush2.bf16.msra.mxu0 0
    %2509 = vmatprep.subr.bf16.mxu0 0
    %2510 = vmatpush2.bf16.msra.mxu0 0
    %2511 = vmatprep.subr.bf16.mxu0 0
    %2512 = vmatpush2.bf16.msra.mxu0 0
    %2513 = vmatprep.subr.bf16.mxu0 0
    %2514 = vmatpush2.bf16.msra.mxu0 0
    %2515 = vmatprep.subr.bf16.mxu0 0
    %2516 = vmatpush2.bf16.msra.mxu0 0
    %2517 = vmatprep.subr.bf16.mxu0 0
    %2518 = vmatpush2.bf16.msra.mxu0 0
    %2519 = vmatprep.mubr.bf16.mxu0 0
    %2520 = vmatmul.mubr.bf16.gmra.mxu0 %v1725
    %v2521 = vpop.f32.mrf.mxu0
    %v2522 = vadd.f32 %v2481, %v2521
    %v2523 = vpop.f32.mrf.mxu0
    %v2524 = vadd.f32 %v2483, %v2523
    %v2525 = vpop.f32.mrf.mxu0
    %v2526 = vpop.f32.mrf.mxu0
    %2527 = vdwg.mxu0
    %v2560 = vunpack.c.l.b16 %v1756
    %v2561 = vunpack.c.h.b16 %v1756
    %v2562 = vunpack.c.l.b16 %v1757
    %v2563 = vunpack.c.h.b16 %v1757
    %v2564 = vunpack.c.l.b16 %v1758
    %v2565 = vunpack.c.h.b16 %v1758
    %v2566 = vunpack.c.l.b16 %v1759
    %v2567 = vunpack.c.h.b16 %v1759
    %v2568 = vunpack.c.l.b16 %v1760
    %v2569 = vunpack.c.h.b16 %v1760
    %v2570 = vunpack.c.l.b16 %v1761
    %v2571 = vunpack.c.h.b16 %v1761
    %v2572 = vunpack.c.l.b16 %v1762
    %v2573 = vunpack.c.h.b16 %v1762
    %v2574 = vunpack.c.l.b16 %v1763
    %v2575 = vunpack.c.h.b16 %v1763
    %v2576 = vunpack.c.l.b16 %v1764
    %v2577 = vunpack.c.h.b16 %v1764
    %v2578 = vunpack.c.l.b16 %v1765
    %v2579 = vunpack.c.h.b16 %v1765
    %v2580 = vunpack.c.l.b16 %v1766
    %v2581 = vunpack.c.h.b16 %v1766
    %v2582 = vunpack.c.l.b16 %v1767
    %v2583 = vunpack.c.h.b16 %v1767
    %v2584 = vunpack.c.l.b16 %v1768
    %v2585 = vunpack.c.h.b16 %v1768
    %v2586 = vunpack.c.l.b16 %v1769
    %v2587 = vunpack.c.h.b16 %v1769
    %v2588 = vunpack.c.l.b16 %v1770
    %v2589 = vunpack.c.h.b16 %v1770
    %v2590 = vunpack.c.l.b16 %v1771
    %v2591 = vunpack.c.h.b16 %v1771
    %v2592 = vunpack.c.l.b16 %v1772
    %v2593 = vunpack.c.h.b16 %v1772
    %v2594 = vunpack.c.l.b16 %v1773
    %v2595 = vunpack.c.h.b16 %v1773
    %v2596 = vunpack.c.l.b16 %v1774
    %v2597 = vunpack.c.h.b16 %v1774
    %v2598 = vunpack.c.l.b16 %v1775
    %v2599 = vunpack.c.h.b16 %v1775
    %v2600 = vunpack.c.l.b16 %v1776
    %v2601 = vunpack.c.h.b16 %v1776
    %v2602 = vunpack.c.l.b16 %v1777
    %v2603 = vunpack.c.h.b16 %v1777
    %v2604 = vunpack.c.l.b16 %v1778
    %v2605 = vunpack.c.h.b16 %v1778
    %v2606 = vunpack.c.l.b16 %v1779
    %v2607 = vunpack.c.h.b16 %v1779
    %v2608 = vunpack.c.l.b16 %v1780
    %v2609 = vunpack.c.h.b16 %v1780
    %v2610 = vunpack.c.l.b16 %v1781
    %v2611 = vunpack.c.h.b16 %v1781
    %v2612 = vunpack.c.l.b16 %v1782
    %v2613 = vunpack.c.h.b16 %v1782
    %v2614 = vunpack.c.l.b16 %v1783
    %v2615 = vunpack.c.h.b16 %v1783
    %v2616 = vunpack.c.l.b16 %v1784
    %v2617 = vunpack.c.h.b16 %v1784
    %v2618 = vunpack.c.l.b16 %v1785
    %v2619 = vunpack.c.h.b16 %v1785
    %v2620 = vunpack.c.l.b16 %v1786
    %v2621 = vunpack.c.h.b16 %v1786
    %v2622 = vunpack.c.l.b16 %v1787
    %v2623 = vunpack.c.h.b16 %v1787
    %v2624 = vpack.c.b16 %v2564, %v2560
    %v2625 = vpack.c.b16 %v2565, %v2561
    %v2626 = vpack.c.b16 %v2566, %v2562
    %v2627 = vpack.c.b16 %v2567, %v2563
    %v2628 = vpack.c.b16 %v2572, %v2568
    %v2629 = vpack.c.b16 %v2573, %v2569
    %v2630 = vpack.c.b16 %v2574, %v2570
    %v2631 = vpack.c.b16 %v2575, %v2571
    %v2632 = vpack.c.b16 %v2580, %v2576
    %v2633 = vpack.c.b16 %v2581, %v2577
    %v2634 = vpack.c.b16 %v2582, %v2578
    %v2635 = vpack.c.b16 %v2583, %v2579
    %v2636 = vpack.c.b16 %v2588, %v2584
    %v2637 = vpack.c.b16 %v2589, %v2585
    %v2638 = vpack.c.b16 %v2590, %v2586
    %v2639 = vpack.c.b16 %v2591, %v2587
    %v2640 = vpack.c.b16 %v2596, %v2592
    %v2641 = vpack.c.b16 %v2597, %v2593
    %v2642 = vpack.c.b16 %v2598, %v2594
    %v2643 = vpack.c.b16 %v2599, %v2595
    %v2644 = vpack.c.b16 %v2604, %v2600
    %v2645 = vpack.c.b16 %v2605, %v2601
    %v2646 = vpack.c.b16 %v2606, %v2602
    %v2647 = vpack.c.b16 %v2607, %v2603
    %v2648 = vpack.c.b16 %v2612, %v2608
    %v2649 = vpack.c.b16 %v2613, %v2609
    %v2650 = vpack.c.b16 %v2614, %v2610
    %v2651 = vpack.c.b16 %v2615, %v2611
    %v2652 = vpack.c.b16 %v2620, %v2616
    %v2653 = vpack.c.b16 %v2621, %v2617
    %v2654 = vpack.c.b16 %v2622, %v2618
    %v2655 = vpack.c.b16 %v2623, %v2619
    %2688 = vmatprep.subr.bf16.mxu0 %v2653
    %2689 = vmatpush1.bf16.msra.mxu0 %v2652
    %2690 = vmatprep.subr.bf16.mxu0 %v2649
    %2691 = vmatpush1.bf16.msra.mxu0 %v2648
    %2692 = vmatprep.subr.bf16.mxu0 %v2645
    %2693 = vmatpush1.bf16.msra.mxu0 %v2644
    %2694 = vmatprep.subr.bf16.mxu0 %v2641
    %2695 = vmatpush1.bf16.msra.mxu0 %v2640
    %2696 = vmatprep.subr.bf16.mxu0 %v2637
    %2697 = vmatpush1.bf16.msra.mxu0 %v2636
    %2698 = vmatprep.subr.bf16.mxu0 %v2633
    %2699 = vmatpush1.bf16.msra.mxu0 %v2632
    %2700 = vmatprep.subr.bf16.mxu0 %v2629
    %2701 = vmatpush1.bf16.msra.mxu0 %v2628
    %2702 = vmatprep.subr.bf16.mxu0 %v2625
    %2703 = vmatpush1.bf16.msra.mxu0 %v2624
    %2704 = vmatprep.subr.bf16.mxu0 0
    %2705 = vmatpush2.bf16.msra.mxu0 0
    %2706 = vmatprep.subr.bf16.mxu0 0
    %2707 = vmatpush2.bf16.msra.mxu0 0
    %2708 = vmatprep.subr.bf16.mxu0 0
    %2709 = vmatpush2.bf16.msra.mxu0 0
    %2710 = vmatprep.subr.bf16.mxu0 0
    %2711 = vmatpush2.bf16.msra.mxu0 0
    %2712 = vmatprep.subr.bf16.mxu0 0
    %2713 = vmatpush2.bf16.msra.mxu0 0
    %2714 = vmatprep.subr.bf16.mxu0 0
    %2715 = vmatpush2.bf16.msra.mxu0 0
    %2716 = vmatprep.subr.bf16.mxu0 0
    %2717 = vmatpush2.bf16.msra.mxu0 0
    %2718 = vmatprep.subr.bf16.mxu0 0
    %2719 = vmatpush2.bf16.msra.mxu0 0
    %2720 = vmatprep.mubr.bf16.mxu0 0
    %2721 = vmatmul.mubr.bf16.gmra.mxu0 %v1726
    %v2722 = vpop.f32.mrf.mxu0
    %v2723 = vadd.f32 %v2440, %v2722
    %v2724 = vpop.f32.mrf.mxu0
    %v2725 = vadd.f32 %v2442, %v2724
    %v2726 = vpop.f32.mrf.mxu0
    %v2727 = vpop.f32.mrf.mxu0
    %2728 = vdwg.mxu0
    %2729 = vmatprep.subr.bf16.mxu0 %v2655
    %2730 = vmatpush1.bf16.msra.mxu0 %v2654
    %2731 = vmatprep.subr.bf16.mxu0 %v2651
    %2732 = vmatpush1.bf16.msra.mxu0 %v2650
    %2733 = vmatprep.subr.bf16.mxu0 %v2647
    %2734 = vmatpush1.bf16.msra.mxu0 %v2646
    %2735 = vmatprep.subr.bf16.mxu0 %v2643
    %2736 = vmatpush1.bf16.msra.mxu0 %v2642
    %2737 = vmatprep.subr.bf16.mxu0 %v2639
    %2738 = vmatpush1.bf16.msra.mxu0 %v2638
    %2739 = vmatprep.subr.bf16.mxu0 %v2635
    %2740 = vmatpush1.bf16.msra.mxu0 %v2634
    %2741 = vmatprep.subr.bf16.mxu0 %v2631
    %2742 = vmatpush1.bf16.msra.mxu0 %v2630
    %2743 = vmatprep.subr.bf16.mxu0 %v2627
    %2744 = vmatpush1.bf16.msra.mxu0 %v2626
    %2745 = vmatprep.subr.bf16.mxu0 0
    %2746 = vmatpush2.bf16.msra.mxu0 0
    %2747 = vmatprep.subr.bf16.mxu0 0
    %2748 = vmatpush2.bf16.msra.mxu0 0
    %2749 = vmatprep.subr.bf16.mxu0 0
    %2750 = vmatpush2.bf16.msra.mxu0 0
    %2751 = vmatprep.subr.bf16.mxu0 0
    %2752 = vmatpush2.bf16.msra.mxu0 0
    %2753 = vmatprep.subr.bf16.mxu0 0
    %2754 = vmatpush2.bf16.msra.mxu0 0
    %2755 = vmatprep.subr.bf16.mxu0 0
    %2756 = vmatpush2.bf16.msra.mxu0 0
    %2757 = vmatprep.subr.bf16.mxu0 0
    %2758 = vmatpush2.bf16.msra.mxu0 0
    %2759 = vmatprep.subr.bf16.mxu0 0
    %2760 = vmatpush2.bf16.msra.mxu0 0
    %2761 = vmatprep.mubr.bf16.mxu0 0
    %2762 = vmatmul.mubr.bf16.gmra.mxu0 %v1726
    %v2763 = vpop.f32.mrf.mxu0
    %v2764 = vadd.f32 %v2522, %v2763
    %v2765 = vpop.f32.mrf.mxu0
    %v2766 = vadd.f32 %v2524, %v2765
    %v2767 = vpop.f32.mrf.mxu0
    %v2768 = vpop.f32.mrf.mxu0
    %2769 = vdwg.mxu0
    %v2771 = vlaneseq
    %v2772 = vshrl.u32 %v2771, 7
    %v2773 = vsub.s32 0, %v2772
    %v2774 = vrot.slane %v1728, %v2773
    %v2775 = vlaneseq
    %v2776 = vshrl.u32 %v2775, 7
    %v2777 = vsub.s32 1, %v2776
    %v2778 = vrot.slane %v1728, %v2777
    %v2779 = vlaneseq
    %v2780 = vshrl.u32 %v2779, 7
    %v2781 = vsub.s32 2, %v2780
    %v2782 = vrot.slane %v1728, %v2781
    %v2783 = vlaneseq
    %v2784 = vshrl.u32 %v2783, 7
    %v2785 = vsub.s32 3, %v2784
    %v2786 = vrot.slane %v1728, %v2785
    %v2791 = vadd.f32 %v2723, %v2774
    %v2792 = vadd.f32 %v2725, %v2778
    %v2793 = vadd.f32 %v2764, %v2782
    %v2794 = vadd.f32 %v2766, %v2786
    %v2795 = vadd.f32 %v2791, %v2792
    %v2796 = vadd.f32 %v2795, %v2793
    %v2797 = vadd.f32 %v2796, %v2794
    %2798 = vadd.xlane.f32.xlu0 %v2797
    %v2799 = vpop.xlane.xlu0 %2798
    %v2800 = vrcp.pop 512.0
    %v2801 = vmul.f32 %v2799, %v2800
    %v2802 = vsub.f32 %v2791, %v2801
    %v2803 = vsub.f32 %v2792, %v2801
    %v2804 = vsub.f32 %v2793, %v2801
    %v2805 = vsub.f32 %v2794, %v2801
    %v2806 = vmul.f32 %v2802, %v2802
    %v2807 = vmul.f32 %v2803, %v2803
    %v2808 = vmul.f32 %v2804, %v2804
    %v2809 = vmul.f32 %v2805, %v2805
    %v2810 = vadd.f32 %v2806, %v2807
    %v2811 = vadd.f32 %v2810, %v2808
    %v2812 = vadd.f32 %v2811, %v2809
    %2813 = vadd.xlane.f32.xlu0 %v2812
    %v2814 = vpop.xlane.xlu0 %2813
    %v2815 = vmul.f32 %v2814, %v2800
    %v2816 = vadd.f32 %v2815, 1e-05
    %v2817 = vrsqrt.pop %v2816
    %v2818 = vmul.f32 %v2802, %v2817
    %v2819 = vmul.f32 %v2803, %v2817
    %v2820 = vmul.f32 %v2804, %v2817
    %v2821 = vmul.f32 %v2805, %v2817
    %v2823 = vlaneseq
    %v2824 = vshrl.u32 %v2823, 7
    %v2825 = vsub.s32 0, %v2824
    %v2826 = vrot.slane %v1730, %v2825
    %v2827 = vlaneseq
    %v2828 = vshrl.u32 %v2827, 7
    %v2829 = vsub.s32 1, %v2828
    %v2830 = vrot.slane %v1730, %v2829
    %v2831 = vlaneseq
    %v2832 = vshrl.u32 %v2831, 7
    %v2833 = vsub.s32 2, %v2832
    %v2834 = vrot.slane %v1730, %v2833
    %v2835 = vlaneseq
    %v2836 = vshrl.u32 %v2835, 7
    %v2837 = vsub.s32 3, %v2836
    %v2838 = vrot.slane %v1730, %v2837
    %v2843 = vmul.f32 %v2818, %v2826
    %v2844 = vmul.f32 %v2819, %v2830
    %v2845 = vmul.f32 %v2820, %v2834
    %v2846 = vmul.f32 %v2821, %v2838
    %v2848 = vlaneseq
    %v2849 = vshrl.u32 %v2848, 7
    %v2850 = vsub.s32 0, %v2849
    %v2851 = vrot.slane %v1732, %v2850
    %v2852 = vlaneseq
    %v2853 = vshrl.u32 %v2852, 7
    %v2854 = vsub.s32 1, %v2853
    %v2855 = vrot.slane %v1732, %v2854
    %v2856 = vlaneseq
    %v2857 = vshrl.u32 %v2856, 7
    %v2858 = vsub.s32 2, %v2857
    %v2859 = vrot.slane %v1732, %v2858
    %v2860 = vlaneseq
    %v2861 = vshrl.u32 %v2860, 7
    %v2862 = vsub.s32 3, %v2861
    %v2863 = vrot.slane %v1732, %v2862
    %v2868 = vadd.f32 %v2843, %v2851
    %v2869 = vadd.f32 %v2844, %v2855
    %v2870 = vadd.f32 %v2845, %v2859
    %v2871 = vadd.f32 %v2846, %v2863
    %v2872 = vmax.f32 %v2868, 0.0
    %v2873 = vmax.f32 %v2869, 0.0
    %v2874 = vmax.f32 %v2870, 0.0
    %v2875 = vmax.f32 %v2871, 0.0
    %s2876 = smul.u32 4, 64
    %s2877 = smul.u32 %s2876, 4
    %s2878 = sshll.u32 %s2877, 4
    %2879 = dma.done %s76, %s2878
    %v2880 = vpack.c.bf16 %v2872, %v2872
    %v2881 = vpack.c.bf16 %v2873, %v2873
    %v2882 = vpack.c.bf16 %v2874, %v2874
    %v2883 = vpack.c.bf16 %v2875, %v2875
    %v2884 = vld [vmem:[#allocation4] sm:$0xff]
    %v2885 = vld [vmem:[#allocation4 + $0x8] sm:$0xff]
    %v2886 = vld [vmem:[#allocation4 + $0x10] sm:$0xff]
    %v2887 = vld [vmem:[#allocation4 + $0x18] sm:$0xff]
    %v2888 = vld [vmem:[#allocation4 + $0x20] sm:$0xff]
    %v2889 = vld [vmem:[#allocation4 + $0x28] sm:$0xff]
    %v2890 = vld [vmem:[#allocation4 + $0x30] sm:$0xff]
    %v2891 = vld [vmem:[#allocation4 + $0x38] sm:$0xff]
    %v2892 = vld [vmem:[#allocation4 + $0x40] sm:$0xff]
    %v2893 = vld [vmem:[#allocation4 + $0x48] sm:$0xff]
    %v2894 = vld [vmem:[#allocation4 + $0x50] sm:$0xff]
    %v2895 = vld [vmem:[#allocation4 + $0x58] sm:$0xff]
    %v2896 = vld [vmem:[#allocation4 + $0x60] sm:$0xff]
    %v2897 = vld [vmem:[#allocation4 + $0x68] sm:$0xff]
    %v2898 = vld [vmem:[#allocation4 + $0x70] sm:$0xff]
    %v2899 = vld [vmem:[#allocation4 + $0x78] sm:$0xff]
    %v2900 = vld [vmem:[#allocation4 + $0x80] sm:$0xff]
    %v2901 = vld [vmem:[#allocation4 + $0x88] sm:$0xff]
    %v2902 = vld [vmem:[#allocation4 + $0x90] sm:$0xff]
    %v2903 = vld [vmem:[#allocation4 + $0x98] sm:$0xff]
    %v2904 = vld [vmem:[#allocation4 + $0xa0] sm:$0xff]
    %v2905 = vld [vmem:[#allocation4 + $0xa8] sm:$0xff]
    %v2906 = vld [vmem:[#allocation4 + $0xb0] sm:$0xff]
    %v2907 = vld [vmem:[#allocation4 + $0xb8] sm:$0xff]
    %v2908 = vld [vmem:[#allocation4 + $0xc0] sm:$0xff]
    %v2909 = vld [vmem:[#allocation4 + $0xc8] sm:$0xff]
    %v2910 = vld [vmem:[#allocation4 + $0xd0] sm:$0xff]
    %v2911 = vld [vmem:[#allocation4 + $0xd8] sm:$0xff]
    %v2912 = vld [vmem:[#allocation4 + $0xe0] sm:$0xff]
    %v2913 = vld [vmem:[#allocation4 + $0xe8] sm:$0xff]
    %v2914 = vld [vmem:[#allocation4 + $0xf0] sm:$0xff]
    %v2915 = vld [vmem:[#allocation4 + $0xf8] sm:$0xff]
    %v2916 = vld [vmem:[#allocation4 + $0x100] sm:$0xff]
    %v2917 = vld [vmem:[#allocation4 + $0x108] sm:$0xff]
    %v2918 = vld [vmem:[#allocation4 + $0x110] sm:$0xff]
    %v2919 = vld [vmem:[#allocation4 + $0x118] sm:$0xff]
    %v2920 = vld [vmem:[#allocation4 + $0x120] sm:$0xff]
    %v2921 = vld [vmem:[#allocation4 + $0x128] sm:$0xff]
    %v2922 = vld [vmem:[#allocation4 + $0x130] sm:$0xff]
    %v2923 = vld [vmem:[#allocation4 + $0x138] sm:$0xff]
    %v2924 = vld [vmem:[#allocation4 + $0x140] sm:$0xff]
    %v2925 = vld [vmem:[#allocation4 + $0x148] sm:$0xff]
    %v2926 = vld [vmem:[#allocation4 + $0x150] sm:$0xff]
    %v2927 = vld [vmem:[#allocation4 + $0x158] sm:$0xff]
    %v2928 = vld [vmem:[#allocation4 + $0x160] sm:$0xff]
    %v2929 = vld [vmem:[#allocation4 + $0x168] sm:$0xff]
    %v2930 = vld [vmem:[#allocation4 + $0x170] sm:$0xff]
    %v2931 = vld [vmem:[#allocation4 + $0x178] sm:$0xff]
    %v2932 = vld [vmem:[#allocation4 + $0x180] sm:$0xff]
    %v2933 = vld [vmem:[#allocation4 + $0x188] sm:$0xff]
    %v2934 = vld [vmem:[#allocation4 + $0x190] sm:$0xff]
    %v2935 = vld [vmem:[#allocation4 + $0x198] sm:$0xff]
    %v2936 = vld [vmem:[#allocation4 + $0x1a0] sm:$0xff]
    %v2937 = vld [vmem:[#allocation4 + $0x1a8] sm:$0xff]
    %v2938 = vld [vmem:[#allocation4 + $0x1b0] sm:$0xff]
    %v2939 = vld [vmem:[#allocation4 + $0x1b8] sm:$0xff]
    %v2940 = vld [vmem:[#allocation4 + $0x1c0] sm:$0xff]
    %v2941 = vld [vmem:[#allocation4 + $0x1c8] sm:$0xff]
    %v2942 = vld [vmem:[#allocation4 + $0x1d0] sm:$0xff]
    %v2943 = vld [vmem:[#allocation4 + $0x1d8] sm:$0xff]
    %v2944 = vld [vmem:[#allocation4 + $0x1e0] sm:$0xff]
    %v2945 = vld [vmem:[#allocation4 + $0x1e8] sm:$0xff]
    %v2946 = vld [vmem:[#allocation4 + $0x1f0] sm:$0xff]
    %v2947 = vld [vmem:[#allocation4 + $0x1f8] sm:$0xff]
    %v2948 = vld [vmem:[#allocation4 + $0x200] sm:$0xff]
    %v2949 = vld [vmem:[#allocation4 + $0x208] sm:$0xff]
    %v2950 = vld [vmem:[#allocation4 + $0x210] sm:$0xff]
    %v2951 = vld [vmem:[#allocation4 + $0x218] sm:$0xff]
    %v2952 = vld [vmem:[#allocation4 + $0x220] sm:$0xff]
    %v2953 = vld [vmem:[#allocation4 + $0x228] sm:$0xff]
    %v2954 = vld [vmem:[#allocation4 + $0x230] sm:$0xff]
    %v2955 = vld [vmem:[#allocation4 + $0x238] sm:$0xff]
    %v2956 = vld [vmem:[#allocation4 + $0x240] sm:$0xff]
    %v2957 = vld [vmem:[#allocation4 + $0x248] sm:$0xff]
    %v2958 = vld [vmem:[#allocation4 + $0x250] sm:$0xff]
    %v2959 = vld [vmem:[#allocation4 + $0x258] sm:$0xff]
    %v2960 = vld [vmem:[#allocation4 + $0x260] sm:$0xff]
    %v2961 = vld [vmem:[#allocation4 + $0x268] sm:$0xff]
    %v2962 = vld [vmem:[#allocation4 + $0x270] sm:$0xff]
    %v2963 = vld [vmem:[#allocation4 + $0x278] sm:$0xff]
    %v2964 = vld [vmem:[#allocation4 + $0x280] sm:$0xff]
    %v2965 = vld [vmem:[#allocation4 + $0x288] sm:$0xff]
    %v2966 = vld [vmem:[#allocation4 + $0x290] sm:$0xff]
    %v2967 = vld [vmem:[#allocation4 + $0x298] sm:$0xff]
    %v2968 = vld [vmem:[#allocation4 + $0x2a0] sm:$0xff]
    %v2969 = vld [vmem:[#allocation4 + $0x2a8] sm:$0xff]
    %v2970 = vld [vmem:[#allocation4 + $0x2b0] sm:$0xff]
    %v2971 = vld [vmem:[#allocation4 + $0x2b8] sm:$0xff]
    %v2972 = vld [vmem:[#allocation4 + $0x2c0] sm:$0xff]
    %v2973 = vld [vmem:[#allocation4 + $0x2c8] sm:$0xff]
    %v2974 = vld [vmem:[#allocation4 + $0x2d0] sm:$0xff]
    %v2975 = vld [vmem:[#allocation4 + $0x2d8] sm:$0xff]
    %v2976 = vld [vmem:[#allocation4 + $0x2e0] sm:$0xff]
    %v2977 = vld [vmem:[#allocation4 + $0x2e8] sm:$0xff]
    %v2978 = vld [vmem:[#allocation4 + $0x2f0] sm:$0xff]
    %v2979 = vld [vmem:[#allocation4 + $0x2f8] sm:$0xff]
    %v2980 = vld [vmem:[#allocation4 + $0x300] sm:$0xff]
    %v2981 = vld [vmem:[#allocation4 + $0x308] sm:$0xff]
    %v2982 = vld [vmem:[#allocation4 + $0x310] sm:$0xff]
    %v2983 = vld [vmem:[#allocation4 + $0x318] sm:$0xff]
    %v2984 = vld [vmem:[#allocation4 + $0x320] sm:$0xff]
    %v2985 = vld [vmem:[#allocation4 + $0x328] sm:$0xff]
    %v2986 = vld [vmem:[#allocation4 + $0x330] sm:$0xff]
    %v2987 = vld [vmem:[#allocation4 + $0x338] sm:$0xff]
    %v2988 = vld [vmem:[#allocation4 + $0x340] sm:$0xff]
    %v2989 = vld [vmem:[#allocation4 + $0x348] sm:$0xff]
    %v2990 = vld [vmem:[#allocation4 + $0x350] sm:$0xff]
    %v2991 = vld [vmem:[#allocation4 + $0x358] sm:$0xff]
    %v2992 = vld [vmem:[#allocation4 + $0x360] sm:$0xff]
    %v2993 = vld [vmem:[#allocation4 + $0x368] sm:$0xff]
    %v2994 = vld [vmem:[#allocation4 + $0x370] sm:$0xff]
    %v2995 = vld [vmem:[#allocation4 + $0x378] sm:$0xff]
    %v2996 = vld [vmem:[#allocation4 + $0x380] sm:$0xff]
    %v2997 = vld [vmem:[#allocation4 + $0x388] sm:$0xff]
    %v2998 = vld [vmem:[#allocation4 + $0x390] sm:$0xff]
    %v2999 = vld [vmem:[#allocation4 + $0x398] sm:$0xff]
    %v3000 = vld [vmem:[#allocation4 + $0x3a0] sm:$0xff]
    %v3001 = vld [vmem:[#allocation4 + $0x3a8] sm:$0xff]
    %v3002 = vld [vmem:[#allocation4 + $0x3b0] sm:$0xff]
    %v3003 = vld [vmem:[#allocation4 + $0x3b8] sm:$0xff]
    %v3004 = vld [vmem:[#allocation4 + $0x3c0] sm:$0xff]
    %v3005 = vld [vmem:[#allocation4 + $0x3c8] sm:$0xff]
    %v3006 = vld [vmem:[#allocation4 + $0x3d0] sm:$0xff]
    %v3007 = vld [vmem:[#allocation4 + $0x3d8] sm:$0xff]
    %v3008 = vld [vmem:[#allocation4 + $0x3e0] sm:$0xff]
    %v3009 = vld [vmem:[#allocation4 + $0x3e8] sm:$0xff]
    %v3010 = vld [vmem:[#allocation4 + $0x3f0] sm:$0xff]
    %v3011 = vld [vmem:[#allocation4 + $0x3f8] sm:$0xff]
    %v3013 = vlaneseq
    %v3014 = vshrl.u32 %v3013, 7
    %v3015 = vsub.s32 0, %v3014
    %v3016 = vrot.slane %v1734, %v3015
    %v3017 = vlaneseq
    %v3018 = vshrl.u32 %v3017, 7
    %v3019 = vsub.s32 1, %v3018
    %v3020 = vrot.slane %v1734, %v3019
    %v3021 = vlaneseq
    %v3022 = vshrl.u32 %v3021, 7
    %v3023 = vsub.s32 2, %v3022
    %v3024 = vrot.slane %v1734, %v3023
    %v3025 = vlaneseq
    %v3026 = vshrl.u32 %v3025, 7
    %v3027 = vsub.s32 3, %v3026
    %v3028 = vrot.slane %v1734, %v3027
    %v3161 = vunpack.c.l.b16 %v2884
    %v3162 = vunpack.c.h.b16 %v2884
    %v3163 = vunpack.c.l.b16 %v2885
    %v3164 = vunpack.c.h.b16 %v2885
    %v3165 = vunpack.c.l.b16 %v2886
    %v3166 = vunpack.c.h.b16 %v2886
    %v3167 = vunpack.c.l.b16 %v2887
    %v3168 = vunpack.c.h.b16 %v2887
    %v3169 = vunpack.c.l.b16 %v2888
    %v3170 = vunpack.c.h.b16 %v2888
    %v3171 = vunpack.c.l.b16 %v2889
    %v3172 = vunpack.c.h.b16 %v2889
    %v3173 = vunpack.c.l.b16 %v2890
    %v3174 = vunpack.c.h.b16 %v2890
    %v3175 = vunpack.c.l.b16 %v2891
    %v3176 = vunpack.c.h.b16 %v2891
    %v3177 = vunpack.c.l.b16 %v2892
    %v3178 = vunpack.c.h.b16 %v2892
    %v3179 = vunpack.c.l.b16 %v2893
    %v3180 = vunpack.c.h.b16 %v2893
    %v3181 = vunpack.c.l.b16 %v2894
    %v3182 = vunpack.c.h.b16 %v2894
    %v3183 = vunpack.c.l.b16 %v2895
    %v3184 = vunpack.c.h.b16 %v2895
    %v3185 = vunpack.c.l.b16 %v2896
    %v3186 = vunpack.c.h.b16 %v2896
    %v3187 = vunpack.c.l.b16 %v2897
    %v3188 = vunpack.c.h.b16 %v2897
    %v3189 = vunpack.c.l.b16 %v2898
    %v3190 = vunpack.c.h.b16 %v2898
    %v3191 = vunpack.c.l.b16 %v2899
    %v3192 = vunpack.c.h.b16 %v2899
    %v3193 = vunpack.c.l.b16 %v2900
    %v3194 = vunpack.c.h.b16 %v2900
    %v3195 = vunpack.c.l.b16 %v2901
    %v3196 = vunpack.c.h.b16 %v2901
    %v3197 = vunpack.c.l.b16 %v2902
    %v3198 = vunpack.c.h.b16 %v2902
    %v3199 = vunpack.c.l.b16 %v2903
    %v3200 = vunpack.c.h.b16 %v2903
    %v3201 = vunpack.c.l.b16 %v2904
    %v3202 = vunpack.c.h.b16 %v2904
    %v3203 = vunpack.c.l.b16 %v2905
    %v3204 = vunpack.c.h.b16 %v2905
    %v3205 = vunpack.c.l.b16 %v2906
    %v3206 = vunpack.c.h.b16 %v2906
    %v3207 = vunpack.c.l.b16 %v2907
    %v3208 = vunpack.c.h.b16 %v2907
    %v3209 = vunpack.c.l.b16 %v2908
    %v3210 = vunpack.c.h.b16 %v2908
    %v3211 = vunpack.c.l.b16 %v2909
    %v3212 = vunpack.c.h.b16 %v2909
    %v3213 = vunpack.c.l.b16 %v2910
    %v3214 = vunpack.c.h.b16 %v2910
    %v3215 = vunpack.c.l.b16 %v2911
    %v3216 = vunpack.c.h.b16 %v2911
    %v3217 = vunpack.c.l.b16 %v2912
    %v3218 = vunpack.c.h.b16 %v2912
    %v3219 = vunpack.c.l.b16 %v2913
    %v3220 = vunpack.c.h.b16 %v2913
    %v3221 = vunpack.c.l.b16 %v2914
    %v3222 = vunpack.c.h.b16 %v2914
    %v3223 = vunpack.c.l.b16 %v2915
    %v3224 = vunpack.c.h.b16 %v2915
    %v3225 = vunpack.c.l.b16 %v2916
    %v3226 = vunpack.c.h.b16 %v2916
    %v3227 = vunpack.c.l.b16 %v2917
    %v3228 = vunpack.c.h.b16 %v2917
    %v3229 = vunpack.c.l.b16 %v2918
    %v3230 = vunpack.c.h.b16 %v2918
    %v3231 = vunpack.c.l.b16 %v2919
    %v3232 = vunpack.c.h.b16 %v2919
    %v3233 = vunpack.c.l.b16 %v2920
    %v3234 = vunpack.c.h.b16 %v2920
    %v3235 = vunpack.c.l.b16 %v2921
    %v3236 = vunpack.c.h.b16 %v2921
    %v3237 = vunpack.c.l.b16 %v2922
    %v3238 = vunpack.c.h.b16 %v2922
    %v3239 = vunpack.c.l.b16 %v2923
    %v3240 = vunpack.c.h.b16 %v2923
    %v3241 = vunpack.c.l.b16 %v2924
    %v3242 = vunpack.c.h.b16 %v2924
    %v3243 = vunpack.c.l.b16 %v2925
    %v3244 = vunpack.c.h.b16 %v2925
    %v3245 = vunpack.c.l.b16 %v2926
    %v3246 = vunpack.c.h.b16 %v2926
    %v3247 = vunpack.c.l.b16 %v2927
    %v3248 = vunpack.c.h.b16 %v2927
    %v3249 = vunpack.c.l.b16 %v2928
    %v3250 = vunpack.c.h.b16 %v2928
    %v3251 = vunpack.c.l.b16 %v2929
    %v3252 = vunpack.c.h.b16 %v2929
    %v3253 = vunpack.c.l.b16 %v2930
    %v3254 = vunpack.c.h.b16 %v2930
    %v3255 = vunpack.c.l.b16 %v2931
    %v3256 = vunpack.c.h.b16 %v2931
    %v3257 = vunpack.c.l.b16 %v2932
    %v3258 = vunpack.c.h.b16 %v2932
    %v3259 = vunpack.c.l.b16 %v2933
    %v3260 = vunpack.c.h.b16 %v2933
    %v3261 = vunpack.c.l.b16 %v2934
    %v3262 = vunpack.c.h.b16 %v2934
    %v3263 = vunpack.c.l.b16 %v2935
    %v3264 = vunpack.c.h.b16 %v2935
    %v3265 = vunpack.c.l.b16 %v2936
    %v3266 = vunpack.c.h.b16 %v2936
    %v3267 = vunpack.c.l.b16 %v2937
    %v3268 = vunpack.c.h.b16 %v2937
    %v3269 = vunpack.c.l.b16 %v2938
    %v3270 = vunpack.c.h.b16 %v2938
    %v3271 = vunpack.c.l.b16 %v2939
    %v3272 = vunpack.c.h.b16 %v2939
    %v3273 = vunpack.c.l.b16 %v2940
    %v3274 = vunpack.c.h.b16 %v2940
    %v3275 = vunpack.c.l.b16 %v2941
    %v3276 = vunpack.c.h.b16 %v2941
    %v3277 = vunpack.c.l.b16 %v2942
    %v3278 = vunpack.c.h.b16 %v2942
    %v3279 = vunpack.c.l.b16 %v2943
    %v3280 = vunpack.c.h.b16 %v2943
    %v3281 = vunpack.c.l.b16 %v2944
    %v3282 = vunpack.c.h.b16 %v2944
    %v3283 = vunpack.c.l.b16 %v2945
    %v3284 = vunpack.c.h.b16 %v2945
    %v3285 = vunpack.c.l.b16 %v2946
    %v3286 = vunpack.c.h.b16 %v2946
    %v3287 = vunpack.c.l.b16 %v2947
    %v3288 = vunpack.c.h.b16 %v2947
    %v3289 = vunpack.c.l.b16 %v2948
    %v3290 = vunpack.c.h.b16 %v2948
    %v3291 = vunpack.c.l.b16 %v2949
    %v3292 = vunpack.c.h.b16 %v2949
    %v3293 = vunpack.c.l.b16 %v2950
    %v3294 = vunpack.c.h.b16 %v2950
    %v3295 = vunpack.c.l.b16 %v2951
    %v3296 = vunpack.c.h.b16 %v2951
    %v3297 = vunpack.c.l.b16 %v2952
    %v3298 = vunpack.c.h.b16 %v2952
    %v3299 = vunpack.c.l.b16 %v2953
    %v3300 = vunpack.c.h.b16 %v2953
    %v3301 = vunpack.c.l.b16 %v2954
    %v3302 = vunpack.c.h.b16 %v2954
    %v3303 = vunpack.c.l.b16 %v2955
    %v3304 = vunpack.c.h.b16 %v2955
    %v3305 = vunpack.c.l.b16 %v2956
    %v3306 = vunpack.c.h.b16 %v2956
    %v3307 = vunpack.c.l.b16 %v2957
    %v3308 = vunpack.c.h.b16 %v2957
    %v3309 = vunpack.c.l.b16 %v2958
    %v3310 = vunpack.c.h.b16 %v2958
    %v3311 = vunpack.c.l.b16 %v2959
    %v3312 = vunpack.c.h.b16 %v2959
    %v3313 = vunpack.c.l.b16 %v2960
    %v3314 = vunpack.c.h.b16 %v2960
    %v3315 = vunpack.c.l.b16 %v2961
    %v3316 = vunpack.c.h.b16 %v2961
    %v3317 = vunpack.c.l.b16 %v2962
    %v3318 = vunpack.c.h.b16 %v2962
    %v3319 = vunpack.c.l.b16 %v2963
    %v3320 = vunpack.c.h.b16 %v2963
    %v3321 = vunpack.c.l.b16 %v2964
    %v3322 = vunpack.c.h.b16 %v2964
    %v3323 = vunpack.c.l.b16 %v2965
    %v3324 = vunpack.c.h.b16 %v2965
    %v3325 = vunpack.c.l.b16 %v2966
    %v3326 = vunpack.c.h.b16 %v2966
    %v3327 = vunpack.c.l.b16 %v2967
    %v3328 = vunpack.c.h.b16 %v2967
    %v3329 = vunpack.c.l.b16 %v2968
    %v3330 = vunpack.c.h.b16 %v2968
    %v3331 = vunpack.c.l.b16 %v2969
    %v3332 = vunpack.c.h.b16 %v2969
    %v3333 = vunpack.c.l.b16 %v2970
    %v3334 = vunpack.c.h.b16 %v2970
    %v3335 = vunpack.c.l.b16 %v2971
    %v3336 = vunpack.c.h.b16 %v2971
    %v3337 = vunpack.c.l.b16 %v2972
    %v3338 = vunpack.c.h.b16 %v2972
    %v3339 = vunpack.c.l.b16 %v2973
    %v3340 = vunpack.c.h.b16 %v2973
    %v3341 = vunpack.c.l.b16 %v2974
    %v3342 = vunpack.c.h.b16 %v2974
    %v3343 = vunpack.c.l.b16 %v2975
    %v3344 = vunpack.c.h.b16 %v2975
    %v3345 = vunpack.c.l.b16 %v2976
    %v3346 = vunpack.c.h.b16 %v2976
    %v3347 = vunpack.c.l.b16 %v2977
    %v3348 = vunpack.c.h.b16 %v2977
    %v3349 = vunpack.c.l.b16 %v2978
    %v3350 = vunpack.c.h.b16 %v2978
    %v3351 = vunpack.c.l.b16 %v2979
    %v3352 = vunpack.c.h.b16 %v2979
    %v3353 = vunpack.c.l.b16 %v2980
    %v3354 = vunpack.c.h.b16 %v2980
    %v3355 = vunpack.c.l.b16 %v2981
    %v3356 = vunpack.c.h.b16 %v2981
    %v3357 = vunpack.c.l.b16 %v2982
    %v3358 = vunpack.c.h.b16 %v2982
    %v3359 = vunpack.c.l.b16 %v2983
    %v3360 = vunpack.c.h.b16 %v2983
    %v3361 = vunpack.c.l.b16 %v2984
    %v3362 = vunpack.c.h.b16 %v2984
    %v3363 = vunpack.c.l.b16 %v2985
    %v3364 = vunpack.c.h.b16 %v2985
    %v3365 = vunpack.c.l.b16 %v2986
    %v3366 = vunpack.c.h.b16 %v2986
    %v3367 = vunpack.c.l.b16 %v2987
    %v3368 = vunpack.c.h.b16 %v2987
    %v3369 = vunpack.c.l.b16 %v2988
    %v3370 = vunpack.c.h.b16 %v2988
    %v3371 = vunpack.c.l.b16 %v2989
    %v3372 = vunpack.c.h.b16 %v2989
    %v3373 = vunpack.c.l.b16 %v2990
    %v3374 = vunpack.c.h.b16 %v2990
    %v3375 = vunpack.c.l.b16 %v2991
    %v3376 = vunpack.c.h.b16 %v2991
    %v3377 = vunpack.c.l.b16 %v2992
    %v3378 = vunpack.c.h.b16 %v2992
    %v3379 = vunpack.c.l.b16 %v2993
    %v3380 = vunpack.c.h.b16 %v2993
    %v3381 = vunpack.c.l.b16 %v2994
    %v3382 = vunpack.c.h.b16 %v2994
    %v3383 = vunpack.c.l.b16 %v2995
    %v3384 = vunpack.c.h.b16 %v2995
    %v3385 = vunpack.c.l.b16 %v2996
    %v3386 = vunpack.c.h.b16 %v2996
    %v3387 = vunpack.c.l.b16 %v2997
    %v3388 = vunpack.c.h.b16 %v2997
    %v3389 = vunpack.c.l.b16 %v2998
    %v3390 = vunpack.c.h.b16 %v2998
    %v3391 = vunpack.c.l.b16 %v2999
    %v3392 = vunpack.c.h.b16 %v2999
    %v3393 = vunpack.c.l.b16 %v3000
    %v3394 = vunpack.c.h.b16 %v3000
    %v3395 = vunpack.c.l.b16 %v3001
    %v3396 = vunpack.c.h.b16 %v3001
    %v3397 = vunpack.c.l.b16 %v3002
    %v3398 = vunpack.c.h.b16 %v3002
    %v3399 = vunpack.c.l.b16 %v3003
    %v3400 = vunpack.c.h.b16 %v3003
    %v3401 = vunpack.c.l.b16 %v3004
    %v3402 = vunpack.c.h.b16 %v3004
    %v3403 = vunpack.c.l.b16 %v3005
    %v3404 = vunpack.c.h.b16 %v3005
    %v3405 = vunpack.c.l.b16 %v3006
    %v3406 = vunpack.c.h.b16 %v3006
    %v3407 = vunpack.c.l.b16 %v3007
    %v3408 = vunpack.c.h.b16 %v3007
    %v3409 = vunpack.c.l.b16 %v3008
    %v3410 = vunpack.c.h.b16 %v3008
    %v3411 = vunpack.c.l.b16 %v3009
    %v3412 = vunpack.c.h.b16 %v3009
    %v3413 = vunpack.c.l.b16 %v3010
    %v3414 = vunpack.c.h.b16 %v3010
    %v3415 = vunpack.c.l.b16 %v3011
    %v3416 = vunpack.c.h.b16 %v3011
    %v3417 = vpack.c.b16 %v3165, %v3161
    %v3418 = vpack.c.b16 %v3166, %v3162
    %v3419 = vpack.c.b16 %v3167, %v3163
    %v3420 = vpack.c.b16 %v3168, %v3164
    %v3421 = vpack.c.b16 %v3173, %v3169
    %v3422 = vpack.c.b16 %v3174, %v3170
    %v3423 = vpack.c.b16 %v3175, %v3171
    %v3424 = vpack.c.b16 %v3176, %v3172
    %v3425 = vpack.c.b16 %v3181, %v3177
    %v3426 = vpack.c.b16 %v3182, %v3178
    %v3427 = vpack.c.b16 %v3183, %v3179
    %v3428 = vpack.c.b16 %v3184, %v3180
    %v3429 = vpack.c.b16 %v3189, %v3185
    %v3430 = vpack.c.b16 %v3190, %v3186
    %v3431 = vpack.c.b16 %v3191, %v3187
    %v3432 = vpack.c.b16 %v3192, %v3188
    %v3433 = vpack.c.b16 %v3197, %v3193
    %v3434 = vpack.c.b16 %v3198, %v3194
    %v3435 = vpack.c.b16 %v3199, %v3195
    %v3436 = vpack.c.b16 %v3200, %v3196
    %v3437 = vpack.c.b16 %v3205, %v3201
    %v3438 = vpack.c.b16 %v3206, %v3202
    %v3439 = vpack.c.b16 %v3207, %v3203
    %v3440 = vpack.c.b16 %v3208, %v3204
    %v3441 = vpack.c.b16 %v3213, %v3209
    %v3442 = vpack.c.b16 %v3214, %v3210
    %v3443 = vpack.c.b16 %v3215, %v3211
    %v3444 = vpack.c.b16 %v3216, %v3212
    %v3445 = vpack.c.b16 %v3221, %v3217
    %v3446 = vpack.c.b16 %v3222, %v3218
    %v3447 = vpack.c.b16 %v3223, %v3219
    %v3448 = vpack.c.b16 %v3224, %v3220
    %v3449 = vpack.c.b16 %v3229, %v3225
    %v3450 = vpack.c.b16 %v3230, %v3226
    %v3451 = vpack.c.b16 %v3231, %v3227
    %v3452 = vpack.c.b16 %v3232, %v3228
    %v3453 = vpack.c.b16 %v3237, %v3233
    %v3454 = vpack.c.b16 %v3238, %v3234
    %v3455 = vpack.c.b16 %v3239, %v3235
    %v3456 = vpack.c.b16 %v3240, %v3236
    %v3457 = vpack.c.b16 %v3245, %v3241
    %v3458 = vpack.c.b16 %v3246, %v3242
    %v3459 = vpack.c.b16 %v3247, %v3243
    %v3460 = vpack.c.b16 %v3248, %v3244
    %v3461 = vpack.c.b16 %v3253, %v3249
    %v3462 = vpack.c.b16 %v3254, %v3250
    %v3463 = vpack.c.b16 %v3255, %v3251
    %v3464 = vpack.c.b16 %v3256, %v3252
    %v3465 = vpack.c.b16 %v3261, %v3257
    %v3466 = vpack.c.b16 %v3262, %v3258
    %v3467 = vpack.c.b16 %v3263, %v3259
    %v3468 = vpack.c.b16 %v3264, %v3260
    %v3469 = vpack.c.b16 %v3269, %v3265
    %v3470 = vpack.c.b16 %v3270, %v3266
    %v3471 = vpack.c.b16 %v3271, %v3267
    %v3472 = vpack.c.b16 %v3272, %v3268
    %v3473 = vpack.c.b16 %v3277, %v3273
    %v3474 = vpack.c.b16 %v3278, %v3274
    %v3475 = vpack.c.b16 %v3279, %v3275
    %v3476 = vpack.c.b16 %v3280, %v3276
    %v3477 = vpack.c.b16 %v3285, %v3281
    %v3478 = vpack.c.b16 %v3286, %v3282
    %v3479 = vpack.c.b16 %v3287, %v3283
    %v3480 = vpack.c.b16 %v3288, %v3284
    %v3481 = vpack.c.b16 %v3293, %v3289
    %v3482 = vpack.c.b16 %v3294, %v3290
    %v3483 = vpack.c.b16 %v3295, %v3291
    %v3484 = vpack.c.b16 %v3296, %v3292
    %v3485 = vpack.c.b16 %v3301, %v3297
    %v3486 = vpack.c.b16 %v3302, %v3298
    %v3487 = vpack.c.b16 %v3303, %v3299
    %v3488 = vpack.c.b16 %v3304, %v3300
    %v3489 = vpack.c.b16 %v3309, %v3305
    %v3490 = vpack.c.b16 %v3310, %v3306
    %v3491 = vpack.c.b16 %v3311, %v3307
    %v3492 = vpack.c.b16 %v3312, %v3308
    %v3493 = vpack.c.b16 %v3317, %v3313
    %v3494 = vpack.c.b16 %v3318, %v3314
    %v3495 = vpack.c.b16 %v3319, %v3315
    %v3496 = vpack.c.b16 %v3320, %v3316
    %v3497 = vpack.c.b16 %v3325, %v3321
    %v3498 = vpack.c.b16 %v3326, %v3322
    %v3499 = vpack.c.b16 %v3327, %v3323
    %v3500 = vpack.c.b16 %v3328, %v3324
    %v3501 = vpack.c.b16 %v3333, %v3329
    %v3502 = vpack.c.b16 %v3334, %v3330
    %v3503 = vpack.c.b16 %v3335, %v3331
    %v3504 = vpack.c.b16 %v3336, %v3332
    %v3505 = vpack.c.b16 %v3341, %v3337
    %v3506 = vpack.c.b16 %v3342, %v3338
    %v3507 = vpack.c.b16 %v3343, %v3339
    %v3508 = vpack.c.b16 %v3344, %v3340
    %v3509 = vpack.c.b16 %v3349, %v3345
    %v3510 = vpack.c.b16 %v3350, %v3346
    %v3511 = vpack.c.b16 %v3351, %v3347
    %v3512 = vpack.c.b16 %v3352, %v3348
    %v3513 = vpack.c.b16 %v3357, %v3353
    %v3514 = vpack.c.b16 %v3358, %v3354
    %v3515 = vpack.c.b16 %v3359, %v3355
    %v3516 = vpack.c.b16 %v3360, %v3356
    %v3517 = vpack.c.b16 %v3365, %v3361
    %v3518 = vpack.c.b16 %v3366, %v3362
    %v3519 = vpack.c.b16 %v3367, %v3363
    %v3520 = vpack.c.b16 %v3368, %v3364
    %v3521 = vpack.c.b16 %v3373, %v3369
    %v3522 = vpack.c.b16 %v3374, %v3370
    %v3523 = vpack.c.b16 %v3375, %v3371
    %v3524 = vpack.c.b16 %v3376, %v3372
    %v3525 = vpack.c.b16 %v3381, %v3377
    %v3526 = vpack.c.b16 %v3382, %v3378
    %v3527 = vpack.c.b16 %v3383, %v3379
    %v3528 = vpack.c.b16 %v3384, %v3380
    %v3529 = vpack.c.b16 %v3389, %v3385
    %v3530 = vpack.c.b16 %v3390, %v3386
    %v3531 = vpack.c.b16 %v3391, %v3387
    %v3532 = vpack.c.b16 %v3392, %v3388
    %v3533 = vpack.c.b16 %v3397, %v3393
    %v3534 = vpack.c.b16 %v3398, %v3394
    %v3535 = vpack.c.b16 %v3399, %v3395
    %v3536 = vpack.c.b16 %v3400, %v3396
    %v3537 = vpack.c.b16 %v3405, %v3401
    %v3538 = vpack.c.b16 %v3406, %v3402
    %v3539 = vpack.c.b16 %v3407, %v3403
    %v3540 = vpack.c.b16 %v3408, %v3404
    %v3541 = vpack.c.b16 %v3413, %v3409
    %v3542 = vpack.c.b16 %v3414, %v3410
    %v3543 = vpack.c.b16 %v3415, %v3411
    %v3544 = vpack.c.b16 %v3416, %v3412
    %3673 = vmatprep.subr.bf16.mxu0 %v3446
    %3674 = vmatpush1.bf16.msra.mxu0 %v3445
    %3675 = vmatprep.subr.bf16.mxu0 %v3442
    %3676 = vmatpush1.bf16.msra.mxu0 %v3441
    %3677 = vmatprep.subr.bf16.mxu0 %v3438
    %3678 = vmatpush1.bf16.msra.mxu0 %v3437
    %3679 = vmatprep.subr.bf16.mxu0 %v3434
    %3680 = vmatpush1.bf16.msra.mxu0 %v3433
    %3681 = vmatprep.subr.bf16.mxu0 %v3430
    %3682 = vmatpush1.bf16.msra.mxu0 %v3429
    %3683 = vmatprep.subr.bf16.mxu0 %v3426
    %3684 = vmatpush1.bf16.msra.mxu0 %v3425
    %3685 = vmatprep.subr.bf16.mxu0 %v3422
    %3686 = vmatpush1.bf16.msra.mxu0 %v3421
    %3687 = vmatprep.subr.bf16.mxu0 %v3418
    %3688 = vmatpush1.bf16.msra.mxu0 %v3417
    %3689 = vmatprep.subr.bf16.mxu0 %v3478
    %3690 = vmatpush2.bf16.msra.mxu0 %v3477
    %3691 = vmatprep.subr.bf16.mxu0 %v3474
    %3692 = vmatpush2.bf16.msra.mxu0 %v3473
    %3693 = vmatprep.subr.bf16.mxu0 %v3470
    %3694 = vmatpush2.bf16.msra.mxu0 %v3469
    %3695 = vmatprep.subr.bf16.mxu0 %v3466
    %3696 = vmatpush2.bf16.msra.mxu0 %v3465
    %3697 = vmatprep.subr.bf16.mxu0 %v3462
    %3698 = vmatpush2.bf16.msra.mxu0 %v3461
    %3699 = vmatprep.subr.bf16.mxu0 %v3458
    %3700 = vmatpush2.bf16.msra.mxu0 %v3457
    %3701 = vmatprep.subr.bf16.mxu0 %v3454
    %3702 = vmatpush2.bf16.msra.mxu0 %v3453
    %3703 = vmatprep.subr.bf16.mxu0 %v3450
    %3704 = vmatpush2.bf16.msra.mxu0 %v3449
    %3705 = vmatprep.mubr.bf16.mxu0 %v2881
    %3706 = vmatmul.mubr.bf16.gmra.mxu0 %v2880
    %v3707 = vpop.f32.mrf.mxu0
    %v3708 = vadd.f32 %v3016, %v3707
    %v3709 = vpop.f32.mrf.mxu0
    %v3710 = vadd.f32 %v3020, %v3709
    %v3711 = vpop.f32.mrf.mxu0
    %v3712 = vpop.f32.mrf.mxu0
    %3713 = vdwg.mxu0
    %3714 = vmatprep.subr.bf16.mxu0 %v3510
    %3715 = vmatpush1.bf16.msra.mxu0 %v3509
    %3716 = vmatprep.subr.bf16.mxu0 %v3506
    %3717 = vmatpush1.bf16.msra.mxu0 %v3505
    %3718 = vmatprep.subr.bf16.mxu0 %v3502
    %3719 = vmatpush1.bf16.msra.mxu0 %v3501
    %3720 = vmatprep.subr.bf16.mxu0 %v3498
    %3721 = vmatpush1.bf16.msra.mxu0 %v3497
    %3722 = vmatprep.subr.bf16.mxu0 %v3494
    %3723 = vmatpush1.bf16.msra.mxu0 %v3493
    %3724 = vmatprep.subr.bf16.mxu0 %v3490
    %3725 = vmatpush1.bf16.msra.mxu0 %v3489
    %3726 = vmatprep.subr.bf16.mxu0 %v3486
    %3727 = vmatpush1.bf16.msra.mxu0 %v3485
    %3728 = vmatprep.subr.bf16.mxu0 %v3482
    %3729 = vmatpush1.bf16.msra.mxu0 %v3481
    %3730 = vmatprep.subr.bf16.mxu0 %v3542
    %3731 = vmatpush2.bf16.msra.mxu0 %v3541
    %3732 = vmatprep.subr.bf16.mxu0 %v3538
    %3733 = vmatpush2.bf16.msra.mxu0 %v3537
    %3734 = vmatprep.subr.bf16.mxu0 %v3534
    %3735 = vmatpush2.bf16.msra.mxu0 %v3533
    %3736 = vmatprep.subr.bf16.mxu0 %v3530
    %3737 = vmatpush2.bf16.msra.mxu0 %v3529
    %3738 = vmatprep.subr.bf16.mxu0 %v3526
    %3739 = vmatpush2.bf16.msra.mxu0 %v3525
    %3740 = vmatprep.subr.bf16.mxu0 %v3522
    %3741 = vmatpush2.bf16.msra.mxu0 %v3521
    %3742 = vmatprep.subr.bf16.mxu0 %v3518
    %3743 = vmatpush2.bf16.msra.mxu0 %v3517
    %3744 = vmatprep.subr.bf16.mxu0 %v3514
    %3745 = vmatpush2.bf16.msra.mxu0 %v3513
    %3746 = vmatprep.mubr.bf16.mxu0 %v2883
    %3747 = vmatmul.mubr.bf16.gmra.mxu0 %v2882
    %v3748 = vpop.f32.mrf.mxu0
    %v3749 = vadd.f32 %v3708, %v3748
    %v3750 = vpop.f32.mrf.mxu0
    %v3751 = vadd.f32 %v3710, %v3750
    %v3752 = vpop.f32.mrf.mxu0
    %v3753 = vpop.f32.mrf.mxu0
    %3754 = vdwg.mxu0
    %3755 = vmatprep.subr.bf16.mxu0 %v3448
    %3756 = vmatpush1.bf16.msra.mxu0 %v3447
    %3757 = vmatprep.subr.bf16.mxu0 %v3444
    %3758 = vmatpush1.bf16.msra.mxu0 %v3443
    %3759 = vmatprep.subr.bf16.mxu0 %v3440
    %3760 = vmatpush1.bf16.msra.mxu0 %v3439
    %3761 = vmatprep.subr.bf16.mxu0 %v3436
    %3762 = vmatpush1.bf16.msra.mxu0 %v3435
    %3763 = vmatprep.subr.bf16.mxu0 %v3432
    %3764 = vmatpush1.bf16.msra.mxu0 %v3431
    %3765 = vmatprep.subr.bf16.mxu0 %v3428
    %3766 = vmatpush1.bf16.msra.mxu0 %v3427
    %3767 = vmatprep.subr.bf16.mxu0 %v3424
    %3768 = vmatpush1.bf16.msra.mxu0 %v3423
    %3769 = vmatprep.subr.bf16.mxu0 %v3420
    %3770 = vmatpush1.bf16.msra.mxu0 %v3419
    %3771 = vmatprep.subr.bf16.mxu0 %v3480
    %3772 = vmatpush2.bf16.msra.mxu0 %v3479
    %3773 = vmatprep.subr.bf16.mxu0 %v3476
    %3774 = vmatpush2.bf16.msra.mxu0 %v3475
    %3775 = vmatprep.subr.bf16.mxu0 %v3472
    %3776 = vmatpush2.bf16.msra.mxu0 %v3471
    %3777 = vmatprep.subr.bf16.mxu0 %v3468
    %3778 = vmatpush2.bf16.msra.mxu0 %v3467
    %3779 = vmatprep.subr.bf16.mxu0 %v3464
    %3780 = vmatpush2.bf16.msra.mxu0 %v3463
    %3781 = vmatprep.subr.bf16.mxu0 %v3460
    %3782 = vmatpush2.bf16.msra.mxu0 %v3459
    %3783 = vmatprep.subr.bf16.mxu0 %v3456
    %3784 = vmatpush2.bf16.msra.mxu0 %v3455
    %3785 = vmatprep.subr.bf16.mxu0 %v3452
    %3786 = vmatpush2.bf16.msra.mxu0 %v3451
    %3787 = vmatprep.mubr.bf16.mxu0 %v2881
    %3788 = vmatmul.mubr.bf16.gmra.mxu0 %v2880
    %v3789 = vpop.f32.mrf.mxu0
    %v3790 = vadd.f32 %v3024, %v3789
    %v3791 = vpop.f32.mrf.mxu0
    %v3792 = vadd.f32 %v3028, %v3791
    %v3793 = vpop.f32.mrf.mxu0
    %v3794 = vpop.f32.mrf.mxu0
    %3795 = vdwg.mxu0
    %3796 = vmatprep.subr.bf16.mxu0 %v3512
    %3797 = vmatpush1.bf16.msra.mxu0 %v3511
    %3798 = vmatprep.subr.bf16.mxu0 %v3508
    %3799 = vmatpush1.bf16.msra.mxu0 %v3507
    %3800 = vmatprep.subr.bf16.mxu0 %v3504
    %3801 = vmatpush1.bf16.msra.mxu0 %v3503
    %3802 = vmatprep.subr.bf16.mxu0 %v3500
    %3803 = vmatpush1.bf16.msra.mxu0 %v3499
    %3804 = vmatprep.subr.bf16.mxu0 %v3496
    %3805 = vmatpush1.bf16.msra.mxu0 %v3495
    %3806 = vmatprep.subr.bf16.mxu0 %v3492
    %3807 = vmatpush1.bf16.msra.mxu0 %v3491
    %3808 = vmatprep.subr.bf16.mxu0 %v3488
    %3809 = vmatpush1.bf16.msra.mxu0 %v3487
    %3810 = vmatprep.subr.bf16.mxu0 %v3484
    %3811 = vmatpush1.bf16.msra.mxu0 %v3483
    %3812 = vmatprep.subr.bf16.mxu0 %v3544
    %3813 = vmatpush2.bf16.msra.mxu0 %v3543
    %3814 = vmatprep.subr.bf16.mxu0 %v3540
    %3815 = vmatpush2.bf16.msra.mxu0 %v3539
    %3816 = vmatprep.subr.bf16.mxu0 %v3536
    %3817 = vmatpush2.bf16.msra.mxu0 %v3535
    %3818 = vmatprep.subr.bf16.mxu0 %v3532
    %3819 = vmatpush2.bf16.msra.mxu0 %v3531
    %3820 = vmatprep.subr.bf16.mxu0 %v3528
    %3821 = vmatpush2.bf16.msra.mxu0 %v3527
    %3822 = vmatprep.subr.bf16.mxu0 %v3524
    %3823 = vmatpush2.bf16.msra.mxu0 %v3523
    %3824 = vmatprep.subr.bf16.mxu0 %v3520
    %3825 = vmatpush2.bf16.msra.mxu0 %v3519
    %3826 = vmatprep.subr.bf16.mxu0 %v3516
    %3827 = vmatpush2.bf16.msra.mxu0 %v3515
    %3828 = vmatprep.mubr.bf16.mxu0 %v2883
    %3829 = vmatmul.mubr.bf16.gmra.mxu0 %v2882
    %v3830 = vpop.f32.mrf.mxu0
    %v3831 = vadd.f32 %v3790, %v3830
    %v3832 = vpop.f32.mrf.mxu0
    %v3833 = vadd.f32 %v3792, %v3832
    %v3834 = vpop.f32.mrf.mxu0
    %v3835 = vpop.f32.mrf.mxu0
    %3836 = vdwg.mxu0
    %v3837 = vadd.f32 %v3749, %v3751
    %v3838 = vadd.f32 %v3837, %v3831
    %v3839 = vadd.f32 %v3838, %v3833
    %3840 = vadd.xlane.f32.xlu0 %v3839
    %v3841 = vpop.xlane.xlu0 %3840
    %v3842 = vmul.f32 %v3841, %v2800
    %v3843 = vsub.f32 %v3749, %v3842
    %v3844 = vsub.f32 %v3751, %v3842
    %v3845 = vsub.f32 %v3831, %v3842
    %v3846 = vsub.f32 %v3833, %v3842
    %v3847 = vmul.f32 %v3843, %v3843
    %v3848 = vmul.f32 %v3844, %v3844
    %v3849 = vmul.f32 %v3845, %v3845
    %v3850 = vmul.f32 %v3846, %v3846
    %v3851 = vadd.f32 %v3847, %v3848
    %v3852 = vadd.f32 %v3851, %v3849
    %v3853 = vadd.f32 %v3852, %v3850
    %3854 = vadd.xlane.f32.xlu0 %v3853
    %v3855 = vpop.xlane.xlu0 %3854
    %v3856 = vmul.f32 %v3855, %v2800
    %v3857 = vadd.f32 %v3856, 1e-05
    %v3858 = vrsqrt.pop %v3857
    %v3859 = vmul.f32 %v3843, %v3858
    %v3860 = vmul.f32 %v3844, %v3858
    %v3861 = vmul.f32 %v3845, %v3858
    %v3862 = vmul.f32 %v3846, %v3858
    %v3864 = vlaneseq
    %v3865 = vshrl.u32 %v3864, 7
    %v3866 = vsub.s32 0, %v3865
    %v3867 = vrot.slane %v1736, %v3866
    %v3868 = vlaneseq
    %v3869 = vshrl.u32 %v3868, 7
    %v3870 = vsub.s32 1, %v3869
    %v3871 = vrot.slane %v1736, %v3870
    %v3872 = vlaneseq
    %v3873 = vshrl.u32 %v3872, 7
    %v3874 = vsub.s32 2, %v3873
    %v3875 = vrot.slane %v1736, %v3874
    %v3876 = vlaneseq
    %v3877 = vshrl.u32 %v3876, 7
    %v3878 = vsub.s32 3, %v3877
    %v3879 = vrot.slane %v1736, %v3878
    %v3884 = vmul.f32 %v3859, %v3867
    %v3885 = vmul.f32 %v3860, %v3871
    %v3886 = vmul.f32 %v3861, %v3875
    %v3887 = vmul.f32 %v3862, %v3879
    %v3889 = vlaneseq
    %v3890 = vshrl.u32 %v3889, 7
    %v3891 = vsub.s32 0, %v3890
    %v3892 = vrot.slane %v1738, %v3891
    %v3893 = vlaneseq
    %v3894 = vshrl.u32 %v3893, 7
    %v3895 = vsub.s32 1, %v3894
    %v3896 = vrot.slane %v1738, %v3895
    %v3897 = vlaneseq
    %v3898 = vshrl.u32 %v3897, 7
    %v3899 = vsub.s32 2, %v3898
    %v3900 = vrot.slane %v1738, %v3899
    %v3901 = vlaneseq
    %v3902 = vshrl.u32 %v3901, 7
    %v3903 = vsub.s32 3, %v3902
    %v3904 = vrot.slane %v1738, %v3903
    %v3909 = vadd.f32 %v3884, %v3892
    %v3910 = vadd.f32 %v3885, %v3896
    %v3911 = vadd.f32 %v3886, %v3900
    %v3912 = vadd.f32 %v3887, %v3904
    %v3913 = vmax.f32 %v3909, 0.0
    %v3914 = vmax.f32 %v3910, 0.0
    %v3915 = vmax.f32 %v3911, 0.0
    %v3916 = vmax.f32 %v3912, 0.0
    %s3917 = smul.u32 %s2876, 2
    %s3918 = sshll.u32 %s3917, 4
    %3919 = dma.done %s88, %s3918
    %v3920 = vpack.c.bf16 %v3913, %v3913
    %v3921 = vpack.c.bf16 %v3914, %v3914
    %v3922 = vpack.c.bf16 %v3915, %v3915
    %v3923 = vpack.c.bf16 %v3916, %v3916
    %v3924 = vld [vmem:[#allocation5] sm:$0xff]
    %v3925 = vld [vmem:[#allocation5 + $0x8] sm:$0xff]
    %v3926 = vld [vmem:[#allocation5 + $0x10] sm:$0xff]
    %v3927 = vld [vmem:[#allocation5 + $0x18] sm:$0xff]
    %v3928 = vld [vmem:[#allocation5 + $0x20] sm:$0xff]
    %v3929 = vld [vmem:[#allocation5 + $0x28] sm:$0xff]
    %v3930 = vld [vmem:[#allocation5 + $0x30] sm:$0xff]
    %v3931 = vld [vmem:[#allocation5 + $0x38] sm:$0xff]
    %v3932 = vld [vmem:[#allocation5 + $0x40] sm:$0xff]
    %v3933 = vld [vmem:[#allocation5 + $0x48] sm:$0xff]
    %v3934 = vld [vmem:[#allocation5 + $0x50] sm:$0xff]
    %v3935 = vld [vmem:[#allocation5 + $0x58] sm:$0xff]
    %v3936 = vld [vmem:[#allocation5 + $0x60] sm:$0xff]
    %v3937 = vld [vmem:[#allocation5 + $0x68] sm:$0xff]
    %v3938 = vld [vmem:[#allocation5 + $0x70] sm:$0xff]
    %v3939 = vld [vmem:[#allocation5 + $0x78] sm:$0xff]
    %v3940 = vld [vmem:[#allocation5 + $0x80] sm:$0xff]
    %v3941 = vld [vmem:[#allocation5 + $0x88] sm:$0xff]
    %v3942 = vld [vmem:[#allocation5 + $0x90] sm:$0xff]
    %v3943 = vld [vmem:[#allocation5 + $0x98] sm:$0xff]
    %v3944 = vld [vmem:[#allocation5 + $0xa0] sm:$0xff]
    %v3945 = vld [vmem:[#allocation5 + $0xa8] sm:$0xff]
    %v3946 = vld [vmem:[#allocation5 + $0xb0] sm:$0xff]
    %v3947 = vld [vmem:[#allocation5 + $0xb8] sm:$0xff]
    %v3948 = vld [vmem:[#allocation5 + $0xc0] sm:$0xff]
    %v3949 = vld [vmem:[#allocation5 + $0xc8] sm:$0xff]
    %v3950 = vld [vmem:[#allocation5 + $0xd0] sm:$0xff]
    %v3951 = vld [vmem:[#allocation5 + $0xd8] sm:$0xff]
    %v3952 = vld [vmem:[#allocation5 + $0xe0] sm:$0xff]
    %v3953 = vld [vmem:[#allocation5 + $0xe8] sm:$0xff]
    %v3954 = vld [vmem:[#allocation5 + $0xf0] sm:$0xff]
    %v3955 = vld [vmem:[#allocation5 + $0xf8] sm:$0xff]
    %v3956 = vld [vmem:[#allocation5 + $0x100] sm:$0xff]
    %v3957 = vld [vmem:[#allocation5 + $0x108] sm:$0xff]
    %v3958 = vld [vmem:[#allocation5 + $0x110] sm:$0xff]
    %v3959 = vld [vmem:[#allocation5 + $0x118] sm:$0xff]
    %v3960 = vld [vmem:[#allocation5 + $0x120] sm:$0xff]
    %v3961 = vld [vmem:[#allocation5 + $0x128] sm:$0xff]
    %v3962 = vld [vmem:[#allocation5 + $0x130] sm:$0xff]
    %v3963 = vld [vmem:[#allocation5 + $0x138] sm:$0xff]
    %v3964 = vld [vmem:[#allocation5 + $0x140] sm:$0xff]
    %v3965 = vld [vmem:[#allocation5 + $0x148] sm:$0xff]
    %v3966 = vld [vmem:[#allocation5 + $0x150] sm:$0xff]
    %v3967 = vld [vmem:[#allocation5 + $0x158] sm:$0xff]
    %v3968 = vld [vmem:[#allocation5 + $0x160] sm:$0xff]
    %v3969 = vld [vmem:[#allocation5 + $0x168] sm:$0xff]
    %v3970 = vld [vmem:[#allocation5 + $0x170] sm:$0xff]
    %v3971 = vld [vmem:[#allocation5 + $0x178] sm:$0xff]
    %v3972 = vld [vmem:[#allocation5 + $0x180] sm:$0xff]
    %v3973 = vld [vmem:[#allocation5 + $0x188] sm:$0xff]
    %v3974 = vld [vmem:[#allocation5 + $0x190] sm:$0xff]
    %v3975 = vld [vmem:[#allocation5 + $0x198] sm:$0xff]
    %v3976 = vld [vmem:[#allocation5 + $0x1a0] sm:$0xff]
    %v3977 = vld [vmem:[#allocation5 + $0x1a8] sm:$0xff]
    %v3978 = vld [vmem:[#allocation5 + $0x1b0] sm:$0xff]
    %v3979 = vld [vmem:[#allocation5 + $0x1b8] sm:$0xff]
    %v3980 = vld [vmem:[#allocation5 + $0x1c0] sm:$0xff]
    %v3981 = vld [vmem:[#allocation5 + $0x1c8] sm:$0xff]
    %v3982 = vld [vmem:[#allocation5 + $0x1d0] sm:$0xff]
    %v3983 = vld [vmem:[#allocation5 + $0x1d8] sm:$0xff]
    %v3984 = vld [vmem:[#allocation5 + $0x1e0] sm:$0xff]
    %v3985 = vld [vmem:[#allocation5 + $0x1e8] sm:$0xff]
    %v3986 = vld [vmem:[#allocation5 + $0x1f0] sm:$0xff]
    %v3987 = vld [vmem:[#allocation5 + $0x1f8] sm:$0xff]
    %v3989 = vlaneseq
    %v3990 = vshrl.u32 %v3989, 7
    %v3991 = vsub.s32 0, %v3990
    %v3992 = vrot.slane %v1740, %v3991
    %v3993 = vlaneseq
    %v3994 = vshrl.u32 %v3993, 7
    %v3995 = vsub.s32 1, %v3994
    %v3996 = vrot.slane %v1740, %v3995
    %v4063 = vunpack.c.l.b16 %v3924
    %v4064 = vunpack.c.h.b16 %v3924
    %v4065 = vunpack.c.l.b16 %v3925
    %v4066 = vunpack.c.h.b16 %v3925
    %v4067 = vunpack.c.l.b16 %v3926
    %v4068 = vunpack.c.h.b16 %v3926
    %v4069 = vunpack.c.l.b16 %v3927
    %v4070 = vunpack.c.h.b16 %v3927
    %v4071 = vunpack.c.l.b16 %v3928
    %v4072 = vunpack.c.h.b16 %v3928
    %v4073 = vunpack.c.l.b16 %v3929
    %v4074 = vunpack.c.h.b16 %v3929
    %v4075 = vunpack.c.l.b16 %v3930
    %v4076 = vunpack.c.h.b16 %v3930
    %v4077 = vunpack.c.l.b16 %v3931
    %v4078 = vunpack.c.h.b16 %v3931
    %v4079 = vunpack.c.l.b16 %v3932
    %v4080 = vunpack.c.h.b16 %v3932
    %v4081 = vunpack.c.l.b16 %v3933
    %v4082 = vunpack.c.h.b16 %v3933
    %v4083 = vunpack.c.l.b16 %v3934
    %v4084 = vunpack.c.h.b16 %v3934
    %v4085 = vunpack.c.l.b16 %v3935
    %v4086 = vunpack.c.h.b16 %v3935
    %v4087 = vunpack.c.l.b16 %v3936
    %v4088 = vunpack.c.h.b16 %v3936
    %v4089 = vunpack.c.l.b16 %v3937
    %v4090 = vunpack.c.h.b16 %v3937
    %v4091 = vunpack.c.l.b16 %v3938
    %v4092 = vunpack.c.h.b16 %v3938
    %v4093 = vunpack.c.l.b16 %v3939
    %v4094 = vunpack.c.h.b16 %v3939
    %v4095 = vunpack.c.l.b16 %v3940
    %v4096 = vunpack.c.h.b16 %v3940
    %v4097 = vunpack.c.l.b16 %v3941
    %v4098 = vunpack.c.h.b16 %v3941
    %v4099 = vunpack.c.l.b16 %v3942
    %v4100 = vunpack.c.h.b16 %v3942
    %v4101 = vunpack.c.l.b16 %v3943
    %v4102 = vunpack.c.h.b16 %v3943
    %v4103 = vunpack.c.l.b16 %v3944
    %v4104 = vunpack.c.h.b16 %v3944
    %v4105 = vunpack.c.l.b16 %v3945
    %v4106 = vunpack.c.h.b16 %v3945
    %v4107 = vunpack.c.l.b16 %v3946
    %v4108 = vunpack.c.h.b16 %v3946
    %v4109 = vunpack.c.l.b16 %v3947
    %v4110 = vunpack.c.h.b16 %v3947
    %v4111 = vunpack.c.l.b16 %v3948
    %v4112 = vunpack.c.h.b16 %v3948
    %v4113 = vunpack.c.l.b16 %v3949
    %v4114 = vunpack.c.h.b16 %v3949
    %v4115 = vunpack.c.l.b16 %v3950
    %v4116 = vunpack.c.h.b16 %v3950
    %v4117 = vunpack.c.l.b16 %v3951
    %v4118 = vunpack.c.h.b16 %v3951
    %v4119 = vunpack.c.l.b16 %v3952
    %v4120 = vunpack.c.h.b16 %v3952
    %v4121 = vunpack.c.l.b16 %v3953
    %v4122 = vunpack.c.h.b16 %v3953
    %v4123 = vunpack.c.l.b16 %v3954
    %v4124 = vunpack.c.h.b16 %v3954
    %v4125 = vunpack.c.l.b16 %v3955
    %v4126 = vunpack.c.h.b16 %v3955
    %v4127 = vunpack.c.l.b16 %v3956
    %v4128 = vunpack.c.h.b16 %v3956
    %v4129 = vunpack.c.l.b16 %v3957
    %v4130 = vunpack.c.h.b16 %v3957
    %v4131 = vunpack.c.l.b16 %v3958
    %v4132 = vunpack.c.h.b16 %v3958
    %v4133 = vunpack.c.l.b16 %v3959
    %v4134 = vunpack.c.h.b16 %v3959
    %v4135 = vunpack.c.l.b16 %v3960
    %v4136 = vunpack.c.h.b16 %v3960
    %v4137 = vunpack.c.l.b16 %v3961
    %v4138 = vunpack.c.h.b16 %v3961
    %v4139 = vunpack.c.l.b16 %v3962
    %v4140 = vunpack.c.h.b16 %v3962
    %v4141 = vunpack.c.l.b16 %v3963
    %v4142 = vunpack.c.h.b16 %v3963
    %v4143 = vunpack.c.l.b16 %v3964
    %v4144 = vunpack.c.h.b16 %v3964
    %v4145 = vunpack.c.l.b16 %v3965
    %v4146 = vunpack.c.h.b16 %v3965
    %v4147 = vunpack.c.l.b16 %v3966
    %v4148 = vunpack.c.h.b16 %v3966
    %v4149 = vunpack.c.l.b16 %v3967
    %v4150 = vunpack.c.h.b16 %v3967
    %v4151 = vunpack.c.l.b16 %v3968
    %v4152 = vunpack.c.h.b16 %v3968
    %v4153 = vunpack.c.l.b16 %v3969
    %v4154 = vunpack.c.h.b16 %v3969
    %v4155 = vunpack.c.l.b16 %v3970
    %v4156 = vunpack.c.h.b16 %v3970
    %v4157 = vunpack.c.l.b16 %v3971
    %v4158 = vunpack.c.h.b16 %v3971
    %v4159 = vunpack.c.l.b16 %v3972
    %v4160 = vunpack.c.h.b16 %v3972
    %v4161 = vunpack.c.l.b16 %v3973
    %v4162 = vunpack.c.h.b16 %v3973
    %v4163 = vunpack.c.l.b16 %v3974
    %v4164 = vunpack.c.h.b16 %v3974
    %v4165 = vunpack.c.l.b16 %v3975
    %v4166 = vunpack.c.h.b16 %v3975
    %v4167 = vunpack.c.l.b16 %v3976
    %v4168 = vunpack.c.h.b16 %v3976
    %v4169 = vunpack.c.l.b16 %v3977
    %v4170 = vunpack.c.h.b16 %v3977
    %v4171 = vunpack.c.l.b16 %v3978
    %v4172 = vunpack.c.h.b16 %v3978
    %v4173 = vunpack.c.l.b16 %v3979
    %v4174 = vunpack.c.h.b16 %v3979
    %v4175 = vunpack.c.l.b16 %v3980
    %v4176 = vunpack.c.h.b16 %v3980
    %v4177 = vunpack.c.l.b16 %v3981
    %v4178 = vunpack.c.h.b16 %v3981
    %v4179 = vunpack.c.l.b16 %v3982
    %v4180 = vunpack.c.h.b16 %v3982
    %v4181 = vunpack.c.l.b16 %v3983
    %v4182 = vunpack.c.h.b16 %v3983
    %v4183 = vunpack.c.l.b16 %v3984
    %v4184 = vunpack.c.h.b16 %v3984
    %v4185 = vunpack.c.l.b16 %v3985
    %v4186 = vunpack.c.h.b16 %v3985
    %v4187 = vunpack.c.l.b16 %v3986
    %v4188 = vunpack.c.h.b16 %v3986
    %v4189 = vunpack.c.l.b16 %v3987
    %v4190 = vunpack.c.h.b16 %v3987
    %v4191 = vpack.c.b16 %v4065, %v4063
    %v4192 = vpack.c.b16 %v4066, %v4064
    %v4193 = vpack.c.b16 %v4069, %v4067
    %v4194 = vpack.c.b16 %v4070, %v4068
    %v4195 = vpack.c.b16 %v4073, %v4071
    %v4196 = vpack.c.b16 %v4074, %v4072
    %v4197 = vpack.c.b16 %v4077, %v4075
    %v4198 = vpack.c.b16 %v4078, %v4076
    %v4199 = vpack.c.b16 %v4081, %v4079
    %v4200 = vpack.c.b16 %v4082, %v4080
    %v4201 = vpack.c.b16 %v4085, %v4083
    %v4202 = vpack.c.b16 %v4086, %v4084
    %v4203 = vpack.c.b16 %v4089, %v4087
    %v4204 = vpack.c.b16 %v4090, %v4088
    %v4205 = vpack.c.b16 %v4093, %v4091
    %v4206 = vpack.c.b16 %v4094, %v4092
    %v4207 = vpack.c.b16 %v4097, %v4095
    %v4208 = vpack.c.b16 %v4098, %v4096
    %v4209 = vpack.c.b16 %v4101, %v4099
    %v4210 = vpack.c.b16 %v4102, %v4100
    %v4211 = vpack.c.b16 %v4105, %v4103
    %v4212 = vpack.c.b16 %v4106, %v4104
    %v4213 = vpack.c.b16 %v4109, %v4107
    %v4214 = vpack.c.b16 %v4110, %v4108
    %v4215 = vpack.c.b16 %v4113, %v4111
    %v4216 = vpack.c.b16 %v4114, %v4112
    %v4217 = vpack.c.b16 %v4117, %v4115
    %v4218 = vpack.c.b16 %v4118, %v4116
    %v4219 = vpack.c.b16 %v4121, %v4119
    %v4220 = vpack.c.b16 %v4122, %v4120
    %v4221 = vpack.c.b16 %v4125, %v4123
    %v4222 = vpack.c.b16 %v4126, %v4124
    %v4223 = vpack.c.b16 %v4129, %v4127
    %v4224 = vpack.c.b16 %v4130, %v4128
    %v4225 = vpack.c.b16 %v4133, %v4131
    %v4226 = vpack.c.b16 %v4134, %v4132
    %v4227 = vpack.c.b16 %v4137, %v4135
    %v4228 = vpack.c.b16 %v4138, %v4136
    %v4229 = vpack.c.b16 %v4141, %v4139
    %v4230 = vpack.c.b16 %v4142, %v4140
    %v4231 = vpack.c.b16 %v4145, %v4143
    %v4232 = vpack.c.b16 %v4146, %v4144
    %v4233 = vpack.c.b16 %v4149, %v4147
    %v4234 = vpack.c.b16 %v4150, %v4148
    %v4235 = vpack.c.b16 %v4153, %v4151
    %v4236 = vpack.c.b16 %v4154, %v4152
    %v4237 = vpack.c.b16 %v4157, %v4155
    %v4238 = vpack.c.b16 %v4158, %v4156
    %v4239 = vpack.c.b16 %v4161, %v4159
    %v4240 = vpack.c.b16 %v4162, %v4160
    %v4241 = vpack.c.b16 %v4165, %v4163
    %v4242 = vpack.c.b16 %v4166, %v4164
    %v4243 = vpack.c.b16 %v4169, %v4167
    %v4244 = vpack.c.b16 %v4170, %v4168
    %v4245 = vpack.c.b16 %v4173, %v4171
    %v4246 = vpack.c.b16 %v4174, %v4172
    %v4247 = vpack.c.b16 %v4177, %v4175
    %v4248 = vpack.c.b16 %v4178, %v4176
    %v4249 = vpack.c.b16 %v4181, %v4179
    %v4250 = vpack.c.b16 %v4182, %v4180
    %v4251 = vpack.c.b16 %v4185, %v4183
    %v4252 = vpack.c.b16 %v4186, %v4184
    %v4253 = vpack.c.b16 %v4189, %v4187
    %v4254 = vpack.c.b16 %v4190, %v4188
    %4319 = vmatprep.subr.bf16.mxu0 %v4206
    %4320 = vmatpush1.bf16.msra.mxu0 %v4205
    %4321 = vmatprep.subr.bf16.mxu0 %v4204
    %4322 = vmatpush1.bf16.msra.mxu0 %v4203
    %4323 = vmatprep.subr.bf16.mxu0 %v4202
    %4324 = vmatpush1.bf16.msra.mxu0 %v4201
    %4325 = vmatprep.subr.bf16.mxu0 %v4200
    %4326 = vmatpush1.bf16.msra.mxu0 %v4199
    %4327 = vmatprep.subr.bf16.mxu0 %v4198
    %4328 = vmatpush1.bf16.msra.mxu0 %v4197
    %4329 = vmatprep.subr.bf16.mxu0 %v4196
    %4330 = vmatpush1.bf16.msra.mxu0 %v4195
    %4331 = vmatprep.subr.bf16.mxu0 %v4194
    %4332 = vmatpush1.bf16.msra.mxu0 %v4193
    %4333 = vmatprep.subr.bf16.mxu0 %v4192
    %4334 = vmatpush1.bf16.msra.mxu0 %v4191
    %4335 = vmatprep.subr.bf16.mxu0 %v4222
    %4336 = vmatpush2.bf16.msra.mxu0 %v4221
    %4337 = vmatprep.subr.bf16.mxu0 %v4220
    %4338 = vmatpush2.bf16.msra.mxu0 %v4219
    %4339 = vmatprep.subr.bf16.mxu0 %v4218
    %4340 = vmatpush2.bf16.msra.mxu0 %v4217
    %4341 = vmatprep.subr.bf16.mxu0 %v4216
    %4342 = vmatpush2.bf16.msra.mxu0 %v4215
    %4343 = vmatprep.subr.bf16.mxu0 %v4214
    %4344 = vmatpush2.bf16.msra.mxu0 %v4213
    %4345 = vmatprep.subr.bf16.mxu0 %v4212
    %4346 = vmatpush2.bf16.msra.mxu0 %v4211
    %4347 = vmatprep.subr.bf16.mxu0 %v4210
    %4348 = vmatpush2.bf16.msra.mxu0 %v4209
    %4349 = vmatprep.subr.bf16.mxu0 %v4208
    %4350 = vmatpush2.bf16.msra.mxu0 %v4207
    %4351 = vmatprep.mubr.bf16.mxu0 %v3921
    %4352 = vmatmul.mubr.bf16.gmra.mxu0 %v3920
    %v4353 = vpop.f32.mrf.mxu0
    %v4354 = vadd.f32 %v3992, %v4353
    %v4355 = vpop.f32.mrf.mxu0
    %v4356 = vadd.f32 %v3996, %v4355
    %v4357 = vpop.f32.mrf.mxu0
    %v4358 = vpop.f32.mrf.mxu0
    %4359 = vdwg.mxu0
    %4360 = vmatprep.subr.bf16.mxu0 %v4238
    %4361 = vmatpush1.bf16.msra.mxu0 %v4237
    %4362 = vmatprep.subr.bf16.mxu0 %v4236
    %4363 = vmatpush1.bf16.msra.mxu0 %v4235
    %4364 = vmatprep.subr.bf16.mxu0 %v4234
    %4365 = vmatpush1.bf16.msra.mxu0 %v4233
    %4366 = vmatprep.subr.bf16.mxu0 %v4232
    %4367 = vmatpush1.bf16.msra.mxu0 %v4231
    %4368 = vmatprep.subr.bf16.mxu0 %v4230
    %4369 = vmatpush1.bf16.msra.mxu0 %v4229
    %4370 = vmatprep.subr.bf16.mxu0 %v4228
    %4371 = vmatpush1.bf16.msra.mxu0 %v4227
    %4372 = vmatprep.subr.bf16.mxu0 %v4226
    %4373 = vmatpush1.bf16.msra.mxu0 %v4225
    %4374 = vmatprep.subr.bf16.mxu0 %v4224
    %4375 = vmatpush1.bf16.msra.mxu0 %v4223
    %4376 = vmatprep.subr.bf16.mxu0 %v4254
    %4377 = vmatpush2.bf16.msra.mxu0 %v4253
    %4378 = vmatprep.subr.bf16.mxu0 %v4252
    %4379 = vmatpush2.bf16.msra.mxu0 %v4251
    %4380 = vmatprep.subr.bf16.mxu0 %v4250
    %4381 = vmatpush2.bf16.msra.mxu0 %v4249
    %4382 = vmatprep.subr.bf16.mxu0 %v4248
    %4383 = vmatpush2.bf16.msra.mxu0 %v4247
    %4384 = vmatprep.subr.bf16.mxu0 %v4246
    %4385 = vmatpush2.bf16.msra.mxu0 %v4245
    %4386 = vmatprep.subr.bf16.mxu0 %v4244
    %4387 = vmatpush2.bf16.msra.mxu0 %v4243
    %4388 = vmatprep.subr.bf16.mxu0 %v4242
    %4389 = vmatpush2.bf16.msra.mxu0 %v4241
    %4390 = vmatprep.subr.bf16.mxu0 %v4240
    %4391 = vmatpush2.bf16.msra.mxu0 %v4239
    %4392 = vmatprep.mubr.bf16.mxu0 %v3923
    %4393 = vmatmul.mubr.bf16.gmra.mxu0 %v3922
    %v4394 = vpop.f32.mrf.mxu0
    %v4395 = vadd.f32 %v4354, %v4394
    %v4396 = vpop.f32.mrf.mxu0
    %v4397 = vadd.f32 %v4356, %v4396
    %v4398 = vpop.f32.mrf.mxu0
    %v4399 = vpop.f32.mrf.mxu0
    %4400 = vdwg.mxu0
    %v4401 = vadd.f32 %v4395, %v4397
    %4402 = vadd.xlane.f32.xlu0 %v4401
    %v4403 = vpop.xlane.xlu0 %4402
    %v4404 = vrcp.pop 256.0
    %v4405 = vmul.f32 %v4403, %v4404
    %v4406 = vsub.f32 %v4395, %v4405
    %v4407 = vsub.f32 %v4397, %v4405
    %v4408 = vmul.f32 %v4406, %v4406
    %v4409 = vmul.f32 %v4407, %v4407
    %v4410 = vadd.f32 %v4408, %v4409
    %4411 = vadd.xlane.f32.xlu0 %v4410
    %v4412 = vpop.xlane.xlu0 %4411
    %v4413 = vmul.f32 %v4412, %v4404
    %v4414 = vadd.f32 %v4413, 1e-05
    %v4415 = vrsqrt.pop %v4414
    %v4416 = vmul.f32 %v4406, %v4415
    %v4417 = vmul.f32 %v4407, %v4415
    %v4419 = vlaneseq
    %v4420 = vshrl.u32 %v4419, 7
    %v4421 = vsub.s32 0, %v4420
    %v4422 = vrot.slane %v1742, %v4421
    %v4423 = vlaneseq
    %v4424 = vshrl.u32 %v4423, 7
    %v4425 = vsub.s32 1, %v4424
    %v4426 = vrot.slane %v1742, %v4425
    %v4429 = vmul.f32 %v4416, %v4422
    %v4430 = vmul.f32 %v4417, %v4426
    %v4432 = vlaneseq
    %v4433 = vshrl.u32 %v4432, 7
    %v4434 = vsub.s32 0, %v4433
    %v4435 = vrot.slane %v1744, %v4434
    %v4436 = vlaneseq
    %v4437 = vshrl.u32 %v4436, 7
    %v4438 = vsub.s32 1, %v4437
    %v4439 = vrot.slane %v1744, %v4438
    %v4442 = vadd.f32 %v4429, %v4435
    %v4443 = vadd.f32 %v4430, %v4439
    %v4444 = vmax.f32 %v4442, 0.0
    %v4445 = vmax.f32 %v4443, 0.0
    %v4447 = vlaneseq
    %v4448 = vshrl.u32 %v4447, 7
    %v4449 = vsub.s32 0, %v4448
    %v4450 = vrot.slane %v1746, %v4449
    %v4451 = vlaneseq
    %v4452 = vshrl.u32 %v4451, 7
    %v4453 = vsub.s32 1, %v4452
    %v4454 = vrot.slane %v1746, %v4453
    %v4457 = vmul.f32 %v4444, %v4450
    %v4458 = vmul.f32 %v4445, %v4454
    %v4459 = vadd.f32 %v4457, %v4458
    %4460 = vadd.xlane.f32.xlu0 %v4459
    %v4461 = vpop.xlane.xlu0 %4460
    %v4462 = vadd.f32 %v4461, %v1747
    %4463 = vst [vmem:[%s9] sm:$0xff] %v4462
    // Predicated region
    $region46: #{model_forward.1} parent=1 // pred_check
      _
    $region47: #{model_forward.1} parent=1 // pred_check_branch
      %4465 = sbr.rel (0) target = $region49
    $region48: #{model_forward.1} parent=1 // pred_region
      _
    $region49: #{model_forward.1} parent=1 // pred_fallthru
      _
    // Predicated region
    $region50: #{model_forward.1} parent=1 // pred_check
      _
    $region51: #{model_forward.1} parent=1 // pred_check_branch
      %4467 = sbr.rel (0) target = $region53
    $region52: #{model_forward.1} parent=1 // pred_region
      _
    $region53: #{model_forward.1} parent=1 // pred_fallthru
      _
    %4468 = vsyncpa [#allocation8], 1
    %4469 = vsyncpa [#allocation10], 1
  %4470 = vsyncmov [#allocation6]
  %s4471 = vpop.sfrf %4470
  %p4472 = scmp.eq.s32.totalorder %s4471, 0
  %p4473 = pneg %p4472
  %4475 = shalt.err (%p4473)
  %s4476 = scalar_lea.sflag [#allocation6], 1
  %4477 = vsyncmov %s4476
  %s4478 = vpop.sfrf %4477
  %p4479 = scmp.eq.s32.totalorder %s4478, 0
  %p4480 = pneg %p4479
  %4482 = shalt.err (%p4480)
  %s4483 = scalar_lea.sflag [#allocation6], 2
  %4484 = vsyncmov %s4483
  %s4485 = vpop.sfrf %4484
  %p4486 = scmp.eq.s32.totalorder %s4485, 0
  %p4487 = pneg %p4486
  %4489 = shalt.err (%p4487)
  %s4490 = scalar_lea.sflag [#allocation6], 3
  %4491 = vsyncmov %s4490
  %s4492 = vpop.sfrf %4491
  %p4493 = scmp.eq.s32.totalorder %s4492, 0
  %p4494 = pneg %p4493
  %4496 = shalt.err (%p4494)

</llo_original>
